<compile_context>
chip_gen: v5e
topology: v5e:2x2
jax: 0.10.0
libtpu: 0.0.40
codegen_flags: <defaults>
</compile_context>

<pallas_src>
import functools

import jax
import jax.numpy as jnp
from jax import lax
from jax.experimental import pallas as pl
from jax.experimental.pallas import tpu as pltpu


# 32 MiB scoped VMEM: matches the v6e default, raises the v5e default, and
# leaves headroom on v7x (64 MiB physical per TensorCore).
_VMEM_LIMIT = 32 * 1024 * 1024


def _full_spec(a):
    """BlockSpec for a small array kept fully resident (weights / biases)."""
    return pl.BlockSpec(a.shape, lambda *_: (0,) * a.ndim)


# ------------------------- pairwise distances (kNN) -------------------------
#
# o[i, j] = -||xi - xj||^2 = 2<xi,xj> - ||xi||^2 - ||xj||^2.
# Both per-row/-column terms are folded into the MXU contraction by augmenting
# the operands (row: [2x, 1, -||x||^2], col: [x, -||x||^2, 1]) so the kernel is
# a single matmul: no transpose, no post-subtract.
# NOTE: bf16 distance output can perturb tie-breaking among near-equidistant
# points vs torch.topk in f32; the neighbour set is still valid.

def _pairwise_neg_dist_kernel(xr_ref, xc_ref, o_ref):
    o_ref[0] = lax.dot_general(
        xr_ref[0], xc_ref[0], (((1,), (1,)), ((), ())),
        preferred_element_type=jnp.float32).astype(o_ref.dtype)


def pairwise_neg_sq_dist(pts, *, tile_n=1024):
    """pts: (B, N, 3) f32 -> (B, N, N) bf16 negative squared pairwise distances."""
    B, N, _ = pts.shape
    sq = jnp.sum(pts * pts, axis=-1, keepdims=True)
    ones = jnp.ones_like(sq)
    row_aug = jnp.concatenate([2.0 * pts, ones, -sq], axis=-1)   # (B, N, 5)
    col_aug = jnp.concatenate([pts, -sq, ones], axis=-1)         # (B, N, 5)
    c = row_aug.shape[-1]
    tn = N if N <= tile_n else tile_n                            # 1024 is a mult of 128
    gi = pl.cdiv(N, tn)                                          # edge blocks are masked
    return pl.pallas_call(
        _pairwise_neg_dist_kernel,
        out_shape=jax.ShapeDtypeStruct((B, N, N), jnp.bfloat16),
        grid=(B, gi, gi),
        in_specs=[pl.BlockSpec((1, tn, c), lambda b, i, j: (b, i, 0)),
                  pl.BlockSpec((1, tn, c), lambda b, i, j: (b, j, 0))],
        out_specs=pl.BlockSpec((1, tn, tn), lambda b, i, j: (b, i, j)),
        compiler_params=pltpu.CompilerParams(
            dimension_semantics=("parallel", "parallel", "parallel"),
            vmem_limit_bytes=_VMEM_LIMIT),
    )(row_aug, col_aug)


def knn_indices(pts, k):
    """pts: (B, N, 3) -> (B, N, k) neighbour indices (self first, distance sorted)."""
    # TODO(synk): exact top-k (torch.topk semantics) stays in XLA; a blockwise
    # in-kernel top-k / lax.approx_max_k would avoid materializing (B,N,N).
    return lax.top_k(pairwise_neg_sq_dist(pts), k)[1]


def _gather_neighbors(x, idx):
    """x: (B, N, C), idx: (B, N, k) -> (B, N, k, C)  (XLA glue)."""
    return jax.vmap(lambda xb, ib: jnp.take(xb, ib, axis=0))(x, idx)


# ------------------------------- mlp1 kernel --------------------------------

def _mlp1_kernel(x_ref, w1_ref, b1_ref, w2_ref, b2_ref, w3_ref, b3_ref, o_ref):
    y = x_ref[...]                                               # (tm, 12) f32
    for w_ref, b_ref in ((w1_ref, b1_ref), (w2_ref, b2_ref), (w3_ref, b3_ref)):
        y = jnp.dot(y.astype(jnp.bfloat16), w_ref[...],
                    preferred_element_type=jnp.float32)
        y = jnp.maximum(y + b_ref[...], 0.0)                     # bias+ReLU in f32
    o_ref[...] = y.astype(o_ref.dtype)


def mlp1_forward(x, layers, *, tile_m=2048):
    """x: (M, 12) f32 -> (M, 64) bf16 compact slab (read once by stage 1)."""
    (w1, b1), (w2, b2), (w3, b3) = layers
    M, cin = x.shape
    cout = w3.shape[1]
    tm = M if M <= tile_m else tile_m
    return pl.pallas_call(
        _mlp1_kernel,
        out_shape=jax.ShapeDtypeStruct((M, cout), jnp.bfloat16),
        grid=(pl.cdiv(M, tm),),
        in_specs=[pl.BlockSpec((tm, cin), lambda i: (i, 0)),
                  _full_spec(w1), _full_spec(b1), _full_spec(w2), _full_spec(b2),
                  _full_spec(w3), _full_spec(b3)],
        out_specs=pl.BlockSpec((tm, cout), lambda i: (i, 0)),
        compiler_params=pltpu.CompilerParams(
            dimension_semantics=("parallel",), vmem_limit_bytes=_VMEM_LIMIT),
    )(x, w1, b1, w2, b2, w3, b3)


# ----------------------- graph layers (fused gather path) -------------------

def _gather_rows(table, rows):
    """table: (N, C) value, rows: (R,) int32 -> (R, C).
    Canonical take_along_axis row gather on a VMEM-resident value."""
    idx2d = jnp.broadcast_to(rows[:, None], (rows.shape[0], table.shape[1]))
    return jnp.take_along_axis(table, idx2d, axis=0, mode="promise_in_bounds")


def _pool_k_in_kernel(slab_ref, idx_ref):
    """Max over the k gathered neighbours as k-1 dense VPU maxes in f32."""
    x = slab_ref[0].astype(jnp.float32)                          # (N, C)
    idx = idx_ref[0]                                             # (N, k) int32
    pooled = _gather_rows(x, idx[:, 0])
    for kk in range(1, idx.shape[-1]):
        pooled = jnp.maximum(pooled, _gather_rows(x, idx[:, kk]))
    return pooled                                                # (N, C) f32


def _stage2_tail(pooled_bf16, w_ref, b_ref, wm1_ref, bm1_ref, wm2_ref, bm2_ref):
    """Fused (linear2@conv2) matmul + global max over points + mlp2 head."""
    z = jnp.dot(pooled_bf16, w_ref[...],
                preferred_element_type=jnp.float32) + b_ref[...]     # (N, 1024)
    g = jnp.max(z, axis=0, keepdims=True)                            # (1, 1024)
    y = jnp.dot(g, wm1_ref[...], preferred_element_type=jnp.float32) + bm1_ref[...]
    y = jnp.maximum(y, 0.0)
    return jnp.dot(y, wm2_ref[...], preferred_element_type=jnp.float32) + bm2_ref[...]


def _graph1_fused_kernel(x_ref, idx_ref, w_ref, b_ref, o_ref):
    pooled = _pool_k_in_kernel(x_ref, idx_ref)
    y = jnp.dot(pooled.astype(jnp.bfloat16), w_ref[...],
                preferred_element_type=jnp.float32)
    o_ref[0] = jnp.maximum(y + b_ref[...], 0.0).astype(o_ref.dtype)


def _graph2_fused_kernel(h_ref, idx_ref, w_ref, b_ref,
                         wm1_ref, bm1_ref, wm2_ref, bm2_ref, o_ref):
    pooled = _pool_k_in_kernel(h_ref, idx_ref)
    o_ref[0] = _stage2_tail(pooled.astype(jnp.bfloat16), w_ref, b_ref,
                            wm1_ref, bm1_ref, wm2_ref, bm2_ref).astype(o_ref.dtype)


def graph_stage1_fused(x, idx, w_fused, b_fused):
    """x: (B,N,64) bf16, idx: (B,N,k) -> (B,N,128) bf16; gather+pool+matmul fused."""
    B, N, C = x.shape
    k = idx.shape[-1]
    cout = w_fused.shape[1]
    return pl.pallas_call(
        _graph1_fused_kernel,
        out_shape=jax.ShapeDtypeStruct((B, N, cout), jnp.bfloat16),
        grid=(B,),
        in_specs=[pl.BlockSpec((1, N, C), lambda bi: (bi, 0, 0)),
                  pl.BlockSpec((1, N, k), lambda bi: (bi, 0, 0)),
                  _full_spec(w_fused), _full_spec(b_fused)],
        out_specs=pl.BlockSpec((1, N, cout), lambda bi: (bi, 0, 0)),
        compiler_params=pltpu.CompilerParams(
            dimension_semantics=("parallel",), vmem_limit_bytes=_VMEM_LIMIT),
    )(x, idx, w_fused, b_fused)


def graph_stage2_fused(h, idx, w_fused, b_fused, mlp2):
    """h: (B,N,128) bf16 -> (B,1,F): gather+pool+conv2 + global max + mlp2 head."""
    (wm1, bm1), (wm2, bm2) = mlp2
    B, N, C = h.shape
    k = idx.shape[-1]
    fdim = wm2.shape[1]
    return pl.pallas_call(
        _graph2_fused_kernel,
        out_shape=jax.ShapeDtypeStruct((B, 1, fdim), jnp.float32),
        grid=(B,),   # NOTE: on v7x (2 TensorCores) B >= 2 keeps both cores busy
        in_specs=[pl.BlockSpec((1, N, C), lambda bi: (bi, 0, 0)),
                  pl.BlockSpec((1, N, k), lambda bi: (bi, 0, 0)),
                  _full_spec(w_fused), _full_spec(b_fused),
                  _full_spec(wm1), _full_spec(bm1), _full_spec(wm2), _full_spec(bm2)],
        out_specs=pl.BlockSpec((1, 1, fdim), lambda bi: (bi, 0, 0)),
        compiler_params=pltpu.CompilerParams(
            dimension_semantics=("parallel",), vmem_limit_bytes=_VMEM_LIMIT),
    )(h, idx, w_fused, b_fused, wm1, bm1, wm2, bm2)


# --------------- graph layers (fallback: XLA pools, Pallas matmuls) ---------

def _graph1_pooled_kernel(p_ref, w_ref, b_ref, o_ref):
    y = jnp.dot(p_ref[0], w_ref[...], preferred_element_type=jnp.float32)
    o_ref[0] = jnp.maximum(y + b_ref[...], 0.0).astype(o_ref.dtype)


def _graph2_pooled_kernel(p_ref, w_ref, b_ref, wm1_ref, bm1_ref, wm2_ref, bm2_ref,
                          o_ref):
    o_ref[0] = _stage2_tail(p_ref[0], w_ref, b_ref,
                            wm1_ref, bm1_ref, wm2_ref, bm2_ref).astype(o_ref.dtype)


def graph_stage1_pooled(p, w_fused, b_fused):
    B, N, C = p.shape
    cout = w_fused.shape[1]
    return pl.pallas_call(
        _graph1_pooled_kernel,
        out_shape=jax.ShapeDtypeStruct((B, N, cout), jnp.bfloat16),
        grid=(B,),
        in_specs=[pl.BlockSpec((1, N, C), lambda bi: (bi, 0, 0)),
                  _full_spec(w_fused), _full_spec(b_fused)],
        out_specs=pl.BlockSpec((1, N, cout), lambda bi: (bi, 0, 0)),
        compiler_params=pltpu.CompilerParams(
            dimension_semantics=("parallel",), vmem_limit_bytes=_VMEM_LIMIT),
    )(p, w_fused, b_fused)


def graph_stage2_pooled(p, w_fused, b_fused, mlp2):
    (wm1, bm1), (wm2, bm2) = mlp2
    B, N, C = p.shape
    fdim = wm2.shape[1]
    return pl.pallas_call(
        _graph2_pooled_kernel,
        out_shape=jax.ShapeDtypeStruct((B, 1, fdim), jnp.float32),
        grid=(B,),
        in_specs=[pl.BlockSpec((1, N, C), lambda bi: (bi, 0, 0)),
                  _full_spec(w_fused), _full_spec(b_fused),
                  _full_spec(wm1), _full_spec(bm1), _full_spec(wm2), _full_spec(bm2)],
        out_specs=pl.BlockSpec((1, 1, fdim), lambda bi: (bi, 0, 0)),
        compiler_params=pltpu.CompilerParams(
            dimension_semantics=("parallel",), vmem_limit_bytes=_VMEM_LIMIT),
    )(p, w_fused, b_fused, wm1, bm1, wm2, bm2)


def _local_maxpool_xla(x, idx):
    # Fallback only: XLA gather feeding a reduce-max (fusible; compact output).
    return jnp.max(_gather_neighbors(x, idx), axis=2)


@functools.lru_cache(maxsize=None)
def _fused_gather_supported(n, k, c_in=64, c_out=128):
    """Probe whether the in-kernel dynamic row gather lowers (and is exact) here."""
    # TODO(synk): drop the probe once tpu.dynamic_gather row-gather support is
    # guaranteed on all deployed jax/libtpu versions.
    try:
        ks = jax.random.split(jax.random.PRNGKey(1), 4)
        x = jax.random.normal(ks[0], (1, n, c_in), jnp.float32).astype(jnp.bfloat16)
        idx = jax.random.randint(ks[1], (1, n, k), 0, n, dtype=jnp.int32)
        w = (0.1 * jax.random.normal(ks[2], (c_in, c_out), jnp.float32)
             ).astype(jnp.bfloat16)
        b = 0.1 * jax.random.normal(ks[3], (1, c_out), jnp.float32)
        got = graph_stage1_fused(x, idx, w, b).astype(jnp.float32)
        jax.block_until_ready(got)
        pooled = jnp.max(_gather_neighbors(x.astype(jnp.float32), idx), axis=2)
        want = jnp.maximum(pooled @ w.astype(jnp.float32) + b, 0.0)
        return bool(jnp.max(jnp.abs(got - want)) < 0.1)
    except Exception:  # lowering unavailable -> fall back to XLA pooling
        return False


# ------------------------------ weight fusion --------------------------------

def _fuse_linear_conv(linear, conv):
    """Fold linear (no activation) into the following 1x1 conv: W=Wl@Wc, b=bl@Wc+bc."""
    (wl, bl), (wc, bc) = linear, conv
    wl32, wc32 = wl.astype(jnp.float32), wc.astype(jnp.float32)
    w_fused = (wl32 @ wc32).astype(jnp.bfloat16)
    b_fused = bl.astype(jnp.float32) @ wc32 + bc.astype(jnp.float32)
    return w_fused, b_fused


# ------------------------------- full forward -------------------------------

def foldnet_encoder(pts, params, *, k=16, fused_gather=True):
    """pts: (B, N, 3) f32 -> (B, 1, feat_dims), matching FoldNet_Encoder.forward."""
    B, N, _ = pts.shape
    M = B * N

    idx = knn_indices(pts, k)                                    # (B, N, k)

    # local_cov: concat(pts, outer(nn_0, nn_1)) -> 12 channels (tiny, XLA glue)
    nbr2 = _gather_neighbors(pts, idx[:, :, :2])                 # (B, N, 2, 3)
    cov = (nbr2[:, :, 0, :, None] * nbr2[:, :, 1, None, :]).reshape(B, N, 9)
    feat12 = jnp.concatenate([pts, cov], axis=-1)                # (B, N, 12)

    # mlp1: three fused 1x1 convs + ReLU -> compact bf16 slab
    x = mlp1_forward(feat12.reshape(M, 12), params["mlp1"]).reshape(B, N, -1)

    # linear1+conv1 / linear2+conv2 have no activation in between -> fold each
    w1f, b1f = _fuse_linear_conv(params["linear1"], params["conv1"])   # (64,128)
    w2f, b2f = _fuse_linear_conv(params["linear2"], params["conv2"])   # (128,1024)

    if fused_gather:
        h = graph_stage1_fused(x, idx, w1f, b1f)                       # (B,N,128)
        feat = graph_stage2_fused(h, idx, w2f, b2f, params["mlp2"])    # (B,1,F)
    else:
        h = graph_stage1_pooled(_local_maxpool_xla(x, idx), w1f, b1f)
        feat = graph_stage2_pooled(_local_maxpool_xla(h, idx), w2f, b2f,
                                   params["mlp2"])
    return feat


# --------------------------- deterministic params ----------------------------

def init_params(key, feat_dims=32):
    keys = iter(jax.random.split(key, 20))

    def layer(cin, cout, w_dtype=jnp.bfloat16):
        # PyTorch Conv1d/Linear default init: U(-1/sqrt(cin), 1/sqrt(cin)).
        bound = 1.0 / (cin ** 0.5)
        w = jax.random.uniform(next(keys), (cin, cout), jnp.float32, -bound, bound)
        b = jax.random.uniform(next(keys), (1, cout), jnp.float32, -bound, bound)
        return w.astype(w_dtype), b

    return {
        "mlp1": (layer(12, 64), layer(64, 64), layer(64, 64)),
        "linear1": layer(64, 64),
        "conv1": layer(64, 128),
        "linear2": layer(128, 128),
        "conv2": layer(128, 1024),
        "mlp2": (layer(1024, feat_dims, jnp.float32),
                 layer(feat_dims, feat_dims, jnp.float32)),
    }


# ------------------------------ pure-JAX reference ---------------------------

def reference_forward(pts, params, idx):
    """f32 reference mirroring the PyTorch math; shares the neighbour graph."""
    B, N, _ = pts.shape

    def dense(x, wb, act):
        w, b = wb
        y = x @ w.astype(jnp.float32) + b
        return jnp.maximum(y, 0.0) if act else y

    nbr = _gather_neighbors(pts, idx)
    cov = (nbr[:, :, 0, :, None] * nbr[:, :, 1, None, :]).reshape(B, N, 9)
    x = jnp.concatenate([pts, cov], axis=-1)                     # local_cov
    for wb in params["mlp1"]:
        x = dense(x, wb, True)                                   # mlp1
    x = jnp.max(_gather_neighbors(x, idx), axis=2)               # local_maxpool
    x = dense(x, params["linear1"], False)
    x = dense(x, params["conv1"], True)
    x = jnp.max(_gather_neighbors(x, idx), axis=2)               # local_maxpool
    x = dense(x, params["linear2"], False)
    x = dense(x, params["conv2"], False)
    x = jnp.max(x, axis=1)                                       # max over points
    x = dense(x, params["mlp2"][0], True)
    x = dense(x, params["mlp2"][1], False)
    return x[:, None, :]


# ----------------------------------- main ------------------------------------

if __name__ == "__main__":
    B, N, K, FEAT = 2, 64, 16, 32
    key = jax.random.PRNGKey(0)
    kp, kx = jax.random.split(key)
    params = init_params(kp, feat_dims=FEAT)
    pts = jax.random.normal(kx, (B, N, 3), jnp.float32)

    fused = _fused_gather_supported(N, K)

    fwd = jax.jit(functools.partial(foldnet_encoder, k=K, fused_gather=fused))
    feat = fwd(pts, params)
    jax.block_until_ready(feat)

    assert feat.shape == (B, 1, FEAT), feat.shape
    assert bool(jnp.all(jnp.isfinite(feat)))

    # Pairwise-distance kernel sanity check (bf16 output -> loose tolerance).
    negd = pairwise_neg_sq_dist(pts).astype(jnp.float32)
    inner = jnp.einsum("bnc,bmc->bnm", pts, pts, precision=lax.Precision.HIGHEST)
    sq = jnp.sum(pts * pts, axis=-1)
    negd_ref = 2.0 * inner - sq[:, :, None] - sq[:, None, :]
    assert float(jnp.max(jnp.abs(negd - negd_ref))) < 0.5

    # End-to-end check against the pure-JAX f32 reference (shared neighbour graph).
    idx = knn_indices(pts, K)
    feat_ref = reference_forward(pts, params, idx)
    err = float(jnp.max(jnp.abs(feat - feat_ref)))
    tol = 5e-2 * max(1.0, float(jnp.max(jnp.abs(feat_ref))))
    assert err < tol, f"mismatch vs pure-JAX reference: {err} (tol {tol})"

    print("KERNEL_OK")
</pallas_src>

<mosaic_0001>
module attributes {stable_mosaic.version = 11 : i64} {
  func.func @_graph1_fused_kernel(%arg0: i32, %arg1: memref<1x64x64xbf16, #tpu.memory_space<vmem>>, %arg2: memref<1x64x16xi32, #tpu.memory_space<vmem>>, %arg3: memref<64x128xbf16, #tpu.memory_space<vmem>>, %arg4: memref<1x128xf32, #tpu.memory_space<vmem>>, %arg5: memref<1x64x128xbf16, #tpu.memory_space<vmem>>) attributes {dimension_semantics = [#tpu.dimension_semantics<parallel>], iteration_bounds = array<i64: 1>, scalar_prefetch = 0 : i64, scratch_operands = 0 : i64, tpu.core_type = #tpu.core_type<tc>, window_params = [{transform_indices = @transform_0, window_bounds = array<i64: 1, 64, 64>}, {transform_indices = @transform_1, window_bounds = array<i64: 1, 64, 16>}, {pipeline_mode = #tpu.pipeline_mode<synchronous>, transform_indices = @transform_2, window_bounds = array<i64: 64, 128>}, {pipeline_mode = #tpu.pipeline_mode<synchronous>, transform_indices = @transform_3, window_bounds = array<i64: 1, 128>}, {transform_indices = @transform_4, window_bounds = array<i64: 1, 64, 128>}]} {
    %c0 = arith.constant 0 : index
    %c0_0 = arith.constant 0 : index
    %c0_1 = arith.constant 0 : index
    %0 = vector.load %arg1[%c0, %c0_0, %c0_1] : memref<1x64x64xbf16, #tpu.memory_space<vmem>>, vector<1x64x64xbf16>
    %1 = vector.shape_cast %0 : vector<1x64x64xbf16> to vector<64x64xbf16>
    %2 = arith.extf %1 : vector<64x64xbf16> to vector<64x64xf32>
    %c0_2 = arith.constant 0 : index
    %c0_3 = arith.constant 0 : index
    %c0_4 = arith.constant 0 : index
    %3 = vector.load %arg2[%c0_2, %c0_3, %c0_4] : memref<1x64x16xi32, #tpu.memory_space<vmem>>, vector<1x64x16xi32>
    %4 = vector.shape_cast %3 : vector<1x64x16xi32> to vector<64x16xi32>
    %5 = vector.extract_strided_slice %4 {offsets = [0, 0], sizes = [64, 1], strides = [1, 1]} : vector<64x16xi32> to vector<64x1xi32>
    %6 = vector.shape_cast %5 : vector<64x1xi32> to vector<64xi32>
    %7 = vector.shape_cast %6 : vector<64xi32> to vector<64x1xi32>
    %8 = vector.shape_cast %7 : vector<64x1xi32> to vector<64x1xi32>
    %9 = vector.broadcast %8 : vector<64x1xi32> to vector<64x64xi32>
    %10 = vector.shape_cast %9 : vector<64x64xi32> to vector<64x64x1xi32>
    %11 = vector.shape_cast %10 : vector<64x64x1xi32> to vector<64x64xi32>
    %12 = tpu.dynamic_gather %2[%11] in [0] : vector<64x64xf32>, vector<64x64xi32> -> vector<64x64xf32>
    %13 = vector.extract_strided_slice %4 {offsets = [0, 1], sizes = [64, 1], strides = [1, 1]} : vector<64x16xi32> to vector<64x1xi32>
    %14 = vector.shape_cast %13 : vector<64x1xi32> to vector<64xi32>
    %15 = vector.shape_cast %14 : vector<64xi32> to vector<64x1xi32>
    %16 = vector.shape_cast %15 : vector<64x1xi32> to vector<64x1xi32>
    %17 = vector.broadcast %16 : vector<64x1xi32> to vector<64x64xi32>
    %18 = vector.shape_cast %17 : vector<64x64xi32> to vector<64x64x1xi32>
    %19 = vector.shape_cast %18 : vector<64x64x1xi32> to vector<64x64xi32>
    %20 = tpu.dynamic_gather %2[%19] in [0] : vector<64x64xf32>, vector<64x64xi32> -> vector<64x64xf32>
    %21 = arith.maximumf %12, %20 : vector<64x64xf32>
    %22 = vector.extract_strided_slice %4 {offsets = [0, 2], sizes = [64, 1], strides = [1, 1]} : vector<64x16xi32> to vector<64x1xi32>
    %23 = vector.shape_cast %22 : vector<64x1xi32> to vector<64xi32>
    %24 = vector.shape_cast %23 : vector<64xi32> to vector<64x1xi32>
    %25 = vector.shape_cast %24 : vector<64x1xi32> to vector<64x1xi32>
    %26 = vector.broadcast %25 : vector<64x1xi32> to vector<64x64xi32>
    %27 = vector.shape_cast %26 : vector<64x64xi32> to vector<64x64x1xi32>
    %28 = vector.shape_cast %27 : vector<64x64x1xi32> to vector<64x64xi32>
    %29 = tpu.dynamic_gather %2[%28] in [0] : vector<64x64xf32>, vector<64x64xi32> -> vector<64x64xf32>
    %30 = arith.maximumf %21, %29 : vector<64x64xf32>
    %31 = vector.extract_strided_slice %4 {offsets = [0, 3], sizes = [64, 1], strides = [1, 1]} : vector<64x16xi32> to vector<64x1xi32>
    %32 = vector.shape_cast %31 : vector<64x1xi32> to vector<64xi32>
    %33 = vector.shape_cast %32 : vector<64xi32> to vector<64x1xi32>
    %34 = vector.shape_cast %33 : vector<64x1xi32> to vector<64x1xi32>
    %35 = vector.broadcast %34 : vector<64x1xi32> to vector<64x64xi32>
    %36 = vector.shape_cast %35 : vector<64x64xi32> to vector<64x64x1xi32>
    %37 = vector.shape_cast %36 : vector<64x64x1xi32> to vector<64x64xi32>
    %38 = tpu.dynamic_gather %2[%37] in [0] : vector<64x64xf32>, vector<64x64xi32> -> vector<64x64xf32>
    %39 = arith.maximumf %30, %38 : vector<64x64xf32>
    %40 = vector.extract_strided_slice %4 {offsets = [0, 4], sizes = [64, 1], strides = [1, 1]} : vector<64x16xi32> to vector<64x1xi32>
    %41 = vector.shape_cast %40 : vector<64x1xi32> to vector<64xi32>
    %42 = vector.shape_cast %41 : vector<64xi32> to vector<64x1xi32>
    %43 = vector.shape_cast %42 : vector<64x1xi32> to vector<64x1xi32>
    %44 = vector.broadcast %43 : vector<64x1xi32> to vector<64x64xi32>
    %45 = vector.shape_cast %44 : vector<64x64xi32> to vector<64x64x1xi32>
    %46 = vector.shape_cast %45 : vector<64x64x1xi32> to vector<64x64xi32>
    %47 = tpu.dynamic_gather %2[%46] in [0] : vector<64x64xf32>, vector<64x64xi32> -> vector<64x64xf32>
    %48 = arith.maximumf %39, %47 : vector<64x64xf32>
    %49 = vector.extract_strided_slice %4 {offsets = [0, 5], sizes = [64, 1], strides = [1, 1]} : vector<64x16xi32> to vector<64x1xi32>
    %50 = vector.shape_cast %49 : vector<64x1xi32> to vector<64xi32>
    %51 = vector.shape_cast %50 : vector<64xi32> to vector<64x1xi32>
    %52 = vector.shape_cast %51 : vector<64x1xi32> to vector<64x1xi32>
    %53 = vector.broadcast %52 : vector<64x1xi32> to vector<64x64xi32>
    %54 = vector.shape_cast %53 : vector<64x64xi32> to vector<64x64x1xi32>
    %55 = vector.shape_cast %54 : vector<64x64x1xi32> to vector<64x64xi32>
    %56 = tpu.dynamic_gather %2[%55] in [0] : vector<64x64xf32>, vector<64x64xi32> -> vector<64x64xf32>
    %57 = arith.maximumf %48, %56 : vector<64x64xf32>
    %58 = vector.extract_strided_slice %4 {offsets = [0, 6], sizes = [64, 1], strides = [1, 1]} : vector<64x16xi32> to vector<64x1xi32>
    %59 = vector.shape_cast %58 : vector<64x1xi32> to vector<64xi32>
    %60 = vector.shape_cast %59 : vector<64xi32> to vector<64x1xi32>
    %61 = vector.shape_cast %60 : vector<64x1xi32> to vector<64x1xi32>
    %62 = vector.broadcast %61 : vector<64x1xi32> to vector<64x64xi32>
    %63 = vector.shape_cast %62 : vector<64x64xi32> to vector<64x64x1xi32>
    %64 = vector.shape_cast %63 : vector<64x64x1xi32> to vector<64x64xi32>
    %65 = tpu.dynamic_gather %2[%64] in [0] : vector<64x64xf32>, vector<64x64xi32> -> vector<64x64xf32>
    %66 = arith.maximumf %57, %65 : vector<64x64xf32>
    %67 = vector.extract_strided_slice %4 {offsets = [0, 7], sizes = [64, 1], strides = [1, 1]} : vector<64x16xi32> to vector<64x1xi32>
    %68 = vector.shape_cast %67 : vector<64x1xi32> to vector<64xi32>
    %69 = vector.shape_cast %68 : vector<64xi32> to vector<64x1xi32>
    %70 = vector.shape_cast %69 : vector<64x1xi32> to vector<64x1xi32>
    %71 = vector.broadcast %70 : vector<64x1xi32> to vector<64x64xi32>
    %72 = vector.shape_cast %71 : vector<64x64xi32> to vector<64x64x1xi32>
    %73 = vector.shape_cast %72 : vector<64x64x1xi32> to vector<64x64xi32>
    %74 = tpu.dynamic_gather %2[%73] in [0] : vector<64x64xf32>, vector<64x64xi32> -> vector<64x64xf32>
    %75 = arith.maximumf %66, %74 : vector<64x64xf32>
    %76 = vector.extract_strided_slice %4 {offsets = [0, 8], sizes = [64, 1], strides = [1, 1]} : vector<64x16xi32> to vector<64x1xi32>
    %77 = vector.shape_cast %76 : vector<64x1xi32> to vector<64xi32>
    %78 = vector.shape_cast %77 : vector<64xi32> to vector<64x1xi32>
    %79 = vector.shape_cast %78 : vector<64x1xi32> to vector<64x1xi32>
    %80 = vector.broadcast %79 : vector<64x1xi32> to vector<64x64xi32>
    %81 = vector.shape_cast %80 : vector<64x64xi32> to vector<64x64x1xi32>
    %82 = vector.shape_cast %81 : vector<64x64x1xi32> to vector<64x64xi32>
    %83 = tpu.dynamic_gather %2[%82] in [0] : vector<64x64xf32>, vector<64x64xi32> -> vector<64x64xf32>
    %84 = arith.maximumf %75, %83 : vector<64x64xf32>
    %85 = vector.extract_strided_slice %4 {offsets = [0, 9], sizes = [64, 1], strides = [1, 1]} : vector<64x16xi32> to vector<64x1xi32>
    %86 = vector.shape_cast %85 : vector<64x1xi32> to vector<64xi32>
    %87 = vector.shape_cast %86 : vector<64xi32> to vector<64x1xi32>
    %88 = vector.shape_cast %87 : vector<64x1xi32> to vector<64x1xi32>
    %89 = vector.broadcast %88 : vector<64x1xi32> to vector<64x64xi32>
    %90 = vector.shape_cast %89 : vector<64x64xi32> to vector<64x64x1xi32>
    %91 = vector.shape_cast %90 : vector<64x64x1xi32> to vector<64x64xi32>
    %92 = tpu.dynamic_gather %2[%91] in [0] : vector<64x64xf32>, vector<64x64xi32> -> vector<64x64xf32>
    %93 = arith.maximumf %84, %92 : vector<64x64xf32>
    %94 = vector.extract_strided_slice %4 {offsets = [0, 10], sizes = [64, 1], strides = [1, 1]} : vector<64x16xi32> to vector<64x1xi32>
    %95 = vector.shape_cast %94 : vector<64x1xi32> to vector<64xi32>
    %96 = vector.shape_cast %95 : vector<64xi32> to vector<64x1xi32>
    %97 = vector.shape_cast %96 : vector<64x1xi32> to vector<64x1xi32>
    %98 = vector.broadcast %97 : vector<64x1xi32> to vector<64x64xi32>
    %99 = vector.shape_cast %98 : vector<64x64xi32> to vector<64x64x1xi32>
    %100 = vector.shape_cast %99 : vector<64x64x1xi32> to vector<64x64xi32>
    %101 = tpu.dynamic_gather %2[%100] in [0] : vector<64x64xf32>, vector<64x64xi32> -> vector<64x64xf32>
    %102 = arith.maximumf %93, %101 : vector<64x64xf32>
    %103 = vector.extract_strided_slice %4 {offsets = [0, 11], sizes = [64, 1], strides = [1, 1]} : vector<64x16xi32> to vector<64x1xi32>
    %104 = vector.shape_cast %103 : vector<64x1xi32> to vector<64xi32>
    %105 = vector.shape_cast %104 : vector<64xi32> to vector<64x1xi32>
    %106 = vector.shape_cast %105 : vector<64x1xi32> to vector<64x1xi32>
    %107 = vector.broadcast %106 : vector<64x1xi32> to vector<64x64xi32>
    %108 = vector.shape_cast %107 : vector<64x64xi32> to vector<64x64x1xi32>
    %109 = vector.shape_cast %108 : vector<64x64x1xi32> to vector<64x64xi32>
    %110 = tpu.dynamic_gather %2[%109] in [0] : vector<64x64xf32>, vector<64x64xi32> -> vector<64x64xf32>
    %111 = arith.maximumf %102, %110 : vector<64x64xf32>
    %112 = vector.extract_strided_slice %4 {offsets = [0, 12], sizes = [64, 1], strides = [1, 1]} : vector<64x16xi32> to vector<64x1xi32>
    %113 = vector.shape_cast %112 : vector<64x1xi32> to vector<64xi32>
    %114 = vector.shape_cast %113 : vector<64xi32> to vector<64x1xi32>
    %115 = vector.shape_cast %114 : vector<64x1xi32> to vector<64x1xi32>
    %116 = vector.broadcast %115 : vector<64x1xi32> to vector<64x64xi32>
    %117 = vector.shape_cast %116 : vector<64x64xi32> to vector<64x64x1xi32>
    %118 = vector.shape_cast %117 : vector<64x64x1xi32> to vector<64x64xi32>
    %119 = tpu.dynamic_gather %2[%118] in [0] : vector<64x64xf32>, vector<64x64xi32> -> vector<64x64xf32>
    %120 = arith.maximumf %111, %119 : vector<64x64xf32>
    %121 = vector.extract_strided_slice %4 {offsets = [0, 13], sizes = [64, 1], strides = [1, 1]} : vector<64x16xi32> to vector<64x1xi32>
    %122 = vector.shape_cast %121 : vector<64x1xi32> to vector<64xi32>
    %123 = vector.shape_cast %122 : vector<64xi32> to vector<64x1xi32>
    %124 = vector.shape_cast %123 : vector<64x1xi32> to vector<64x1xi32>
    %125 = vector.broadcast %124 : vector<64x1xi32> to vector<64x64xi32>
    %126 = vector.shape_cast %125 : vector<64x64xi32> to vector<64x64x1xi32>
    %127 = vector.shape_cast %126 : vector<64x64x1xi32> to vector<64x64xi32>
    %128 = tpu.dynamic_gather %2[%127] in [0] : vector<64x64xf32>, vector<64x64xi32> -> vector<64x64xf32>
    %129 = arith.maximumf %120, %128 : vector<64x64xf32>
    %130 = vector.extract_strided_slice %4 {offsets = [0, 14], sizes = [64, 1], strides = [1, 1]} : vector<64x16xi32> to vector<64x1xi32>
    %131 = vector.shape_cast %130 : vector<64x1xi32> to vector<64xi32>
    %132 = vector.shape_cast %131 : vector<64xi32> to vector<64x1xi32>
    %133 = vector.shape_cast %132 : vector<64x1xi32> to vector<64x1xi32>
    %134 = vector.broadcast %133 : vector<64x1xi32> to vector<64x64xi32>
    %135 = vector.shape_cast %134 : vector<64x64xi32> to vector<64x64x1xi32>
    %136 = vector.shape_cast %135 : vector<64x64x1xi32> to vector<64x64xi32>
    %137 = tpu.dynamic_gather %2[%136] in [0] : vector<64x64xf32>, vector<64x64xi32> -> vector<64x64xf32>
    %138 = arith.maximumf %129, %137 : vector<64x64xf32>
    %139 = vector.extract_strided_slice %4 {offsets = [0, 15], sizes = [64, 1], strides = [1, 1]} : vector<64x16xi32> to vector<64x1xi32>
    %140 = vector.shape_cast %139 : vector<64x1xi32> to vector<64xi32>
    %141 = vector.shape_cast %140 : vector<64xi32> to vector<64x1xi32>
    %142 = vector.shape_cast %141 : vector<64x1xi32> to vector<64x1xi32>
    %143 = vector.broadcast %142 : vector<64x1xi32> to vector<64x64xi32>
    %144 = vector.shape_cast %143 : vector<64x64xi32> to vector<64x64x1xi32>
    %145 = vector.shape_cast %144 : vector<64x64x1xi32> to vector<64x64xi32>
    %146 = tpu.dynamic_gather %2[%145] in [0] : vector<64x64xf32>, vector<64x64xi32> -> vector<64x64xf32>
    %147 = arith.maximumf %138, %146 : vector<64x64xf32>
    %148 = arith.truncf %147 : vector<64x64xf32> to vector<64x64xbf16>
    %c0_5 = arith.constant 0 : index
    %c0_6 = arith.constant 0 : index
    %149 = vector.load %arg3[%c0_5, %c0_6] : memref<64x128xbf16, #tpu.memory_space<vmem>>, vector<64x128xbf16>
    %cst = arith.constant dense<0.000000e+00> : vector<64x128xf32>
    %150 = tpu.matmul %148, %149, %cst {dimension_numbers = #tpu.dot_dimension_numbers<[1], [0], [0], [1], [0, 0, 1, 1], [], []>} : vector<64x64xbf16>, vector<64x128xbf16>, vector<64x128xf32> -> vector<64x128xf32>
    %c0_7 = arith.constant 0 : index
    %c0_8 = arith.constant 0 : index
    %151 = vector.load %arg4[%c0_7, %c0_8] : memref<1x128xf32, #tpu.memory_space<vmem>>, vector<1x128xf32>
    %152 = vector.broadcast %151 : vector<1x128xf32> to vector<64x128xf32>
    %153 = arith.addf %150, %152 : vector<64x128xf32>
    %cst_9 = arith.constant 0.000000e+00 : f32
    %154 = vector.broadcast %cst_9 : f32 to vector<64x128xf32>
    %155 = arith.maximumf %153, %154 : vector<64x128xf32>
    %156 = arith.truncf %155 : vector<64x128xf32> to vector<64x128xbf16>
    %c0_10 = arith.constant 0 : index
    %c0_11 = arith.constant 0 : index
    %c0_12 = arith.constant 0 : index
    %157 = vector.load %arg5[%c0_10, %c0_11, %c0_12] : memref<1x64x128xbf16, #tpu.memory_space<vmem>>, vector<1x64x128xbf16>
    %158 = vector.shape_cast %157 : vector<1x64x128xbf16> to vector<64x128xbf16>
    %159 = vector.shape_cast %156 : vector<64x128xbf16> to vector<1x64x128xbf16>
    tpu.vector_store %arg5[%c0_10, %c0_11, %c0_12], %159 {strides = array<i32>} : memref<1x64x128xbf16, #tpu.memory_space<vmem>>, vector<1x64x128xbf16>,
    return
  }
  func.func @transform_0(%arg0: i32) -> (i32, i32, i32) {
    %c0_i32 = arith.constant 0 : i32
    %c0_i32_0 = arith.constant 0 : i32
    %c0_i32_1 = arith.constant 0 : i32
    return %arg0, %c0_i32, %c0_i32_0 : i32, i32, i32
  }
  func.func @transform_1(%arg0: i32) -> (i32, i32, i32) {
    %c0_i32 = arith.constant 0 : i32
    %c0_i32_0 = arith.constant 0 : i32
    %c0_i32_1 = arith.constant 0 : i32
    return %arg0, %c0_i32, %c0_i32_0 : i32, i32, i32
  }
  func.func @transform_2(%arg0: i32) -> (i32, i32) {
    %c0_i32 = arith.constant 0 : i32
    %c0_i32_0 = arith.constant 0 : i32
    %c0_i32_1 = arith.constant 0 : i32
    return %c0_i32, %c0_i32_0 : i32, i32
  }
  func.func @transform_3(%arg0: i32) -> (i32, i32) {
    %c0_i32 = arith.constant 0 : i32
    %c0_i32_0 = arith.constant 0 : i32
    %c0_i32_1 = arith.constant 0 : i32
    return %c0_i32, %c0_i32_0 : i32, i32
  }
  func.func @transform_4(%arg0: i32) -> (i32, i32, i32) {
    %c0_i32 = arith.constant 0 : i32
    %c0_i32_0 = arith.constant 0 : i32
    %c0_i32_1 = arith.constant 0 : i32
    return %arg0, %c0_i32, %c0_i32_0 : i32, i32, i32
  }
}

module attributes {stable_mosaic.version = 11 : i64} {
  func.func @_pairwise_neg_dist_kernel(%arg0: i32, %arg1: i32, %arg2: i32, %arg3: memref<1x64x5xf32, #tpu.memory_space<vmem>>, %arg4: memref<1x64x5xf32, #tpu.memory_space<vmem>>, %arg5: memref<1x64x64xbf16, #tpu.memory_space<vmem>>) attributes {dimension_semantics = [#tpu.dimension_semantics<parallel>, #tpu.dimension_semantics<parallel>, #tpu.dimension_semantics<parallel>], iteration_bounds = array<i64: 2, 1, 1>, scalar_prefetch = 0 : i64, scratch_operands = 0 : i64, tpu.core_type = #tpu.core_type<tc>, window_params = [{transform_indices = @transform_0, window_bounds = array<i64: 1, 64, 5>}, {transform_indices = @transform_1, window_bounds = array<i64: 1, 64, 5>}, {transform_indices = @transform_2, window_bounds = array<i64: 1, 64, 64>}]} {
    %c0 = arith.constant 0 : index
    %c0_0 = arith.constant 0 : index
    %c0_1 = arith.constant 0 : index
    %0 = vector.load %arg3[%c0, %c0_0, %c0_1] : memref<1x64x5xf32, #tpu.memory_space<vmem>>, vector<1x64x5xf32>
    %1 = vector.shape_cast %0 : vector<1x64x5xf32> to vector<64x5xf32>
    %c0_2 = arith.constant 0 : index
    %c0_3 = arith.constant 0 : index
    %c0_4 = arith.constant 0 : index
    %2 = vector.load %arg4[%c0_2, %c0_3, %c0_4] : memref<1x64x5xf32, #tpu.memory_space<vmem>>, vector<1x64x5xf32>
    %3 = vector.shape_cast %2 : vector<1x64x5xf32> to vector<64x5xf32>
    %cst = arith.constant dense<0.000000e+00> : vector<64x64xf32>
    %4 = tpu.matmul %1, %3, %cst {dimension_numbers = #tpu.dot_dimension_numbers<[1], [1], [0], [0], [0, 0, 1, 0], [], []>} : vector<64x5xf32>, vector<64x5xf32>, vector<64x64xf32> -> vector<64x64xf32>
    %5 = arith.truncf %4 : vector<64x64xf32> to vector<64x64xbf16>
    %c0_5 = arith.constant 0 : index
    %c0_6 = arith.constant 0 : index
    %c0_7 = arith.constant 0 : index
    %6 = vector.load %arg5[%c0_5, %c0_6, %c0_7] : memref<1x64x64xbf16, #tpu.memory_space<vmem>>, vector<1x64x64xbf16>
    %7 = vector.shape_cast %6 : vector<1x64x64xbf16> to vector<64x64xbf16>
    %8 = vector.shape_cast %5 : vector<64x64xbf16> to vector<1x64x64xbf16>
    tpu.vector_store %arg5[%c0_5, %c0_6, %c0_7], %8 {strides = array<i32>} : memref<1x64x64xbf16, #tpu.memory_space<vmem>>, vector<1x64x64xbf16>,
    return
  }
  func.func @transform_0(%arg0: i32, %arg1: i32, %arg2: i32) -> (i32, i32, i32) {
    %c0_i32 = arith.constant 0 : i32
    %c0_i32_0 = arith.constant 0 : i32
    return %arg0, %arg1, %c0_i32 : i32, i32, i32
  }
  func.func @transform_1(%arg0: i32, %arg1: i32, %arg2: i32) -> (i32, i32, i32) {
    %c0_i32 = arith.constant 0 : i32
    %c0_i32_0 = arith.constant 0 : i32
    return %arg0, %arg2, %c0_i32 : i32, i32, i32
  }
  func.func @transform_2(%arg0: i32, %arg1: i32, %arg2: i32) -> (i32, i32, i32) {
    %c0_i32 = arith.constant 0 : i32
    return %arg0, %arg1, %arg2 : i32, i32, i32
  }
}

module attributes {stable_mosaic.version = 11 : i64} {
  func.func @_mlp1_kernel(%arg0: i32, %arg1: memref<128x12xf32, #tpu.memory_space<vmem>>, %arg2: memref<12x64xbf16, #tpu.memory_space<vmem>>, %arg3: memref<1x64xf32, #tpu.memory_space<vmem>>, %arg4: memref<64x64xbf16, #tpu.memory_space<vmem>>, %arg5: memref<1x64xf32, #tpu.memory_space<vmem>>, %arg6: memref<64x64xbf16, #tpu.memory_space<vmem>>, %arg7: memref<1x64xf32, #tpu.memory_space<vmem>>, %arg8: memref<128x64xbf16, #tpu.memory_space<vmem>>) attributes {dimension_semantics = [#tpu.dimension_semantics<parallel>], iteration_bounds = array<i64: 1>, scalar_prefetch = 0 : i64, scratch_operands = 0 : i64, tpu.core_type = #tpu.core_type<tc>, window_params = [{transform_indices = @transform_0, window_bounds = array<i64: 128, 12>}, {pipeline_mode = #tpu.pipeline_mode<synchronous>, transform_indices = @transform_1, window_bounds = array<i64: 12, 64>}, {pipeline_mode = #tpu.pipeline_mode<synchronous>, transform_indices = @transform_2, window_bounds = array<i64: 1, 64>}, {pipeline_mode = #tpu.pipeline_mode<synchronous>, transform_indices = @transform_3, window_bounds = array<i64: 64, 64>}, {pipeline_mode = #tpu.pipeline_mode<synchronous>, transform_indices = @transform_4, window_bounds = array<i64: 1, 64>}, {pipeline_mode = #tpu.pipeline_mode<synchronous>, transform_indices = @transform_5, window_bounds = array<i64: 64, 64>}, {pipeline_mode = #tpu.pipeline_mode<synchronous>, transform_indices = @transform_6, window_bounds = array<i64: 1, 64>}, {transform_indices = @transform_7, window_bounds = array<i64: 128, 64>}]} {
    %c0 = arith.constant 0 : index
    %c0_0 = arith.constant 0 : index
    %0 = vector.load %arg1[%c0, %c0_0] : memref<128x12xf32, #tpu.memory_space<vmem>>, vector<128x12xf32>
    %1 = arith.truncf %0 : vector<128x12xf32> to vector<128x12xbf16>
    %c0_1 = arith.constant 0 : index
    %c0_2 = arith.constant 0 : index
    %2 = vector.load %arg2[%c0_1, %c0_2] : memref<12x64xbf16, #tpu.memory_space<vmem>>, vector<12x64xbf16>
    %cst = arith.constant dense<0.000000e+00> : vector<128x64xf32>
    %3 = tpu.matmul %1, %2, %cst {dimension_numbers = #tpu.dot_dimension_numbers<[1], [0], [0], [1], [0, 0, 1, 1], [], []>} : vector<128x12xbf16>, vector<12x64xbf16>, vector<128x64xf32> -> vector<128x64xf32>
    %c0_3 = arith.constant 0 : index
    %c0_4 = arith.constant 0 : index
    %4 = vector.load %arg3[%c0_3, %c0_4] : memref<1x64xf32, #tpu.memory_space<vmem>>, vector<1x64xf32>
    %5 = vector.broadcast %4 : vector<1x64xf32> to vector<128x64xf32>
    %6 = arith.addf %3, %5 : vector<128x64xf32>
    %cst_5 = arith.constant 0.000000e+00 : f32
    %7 = vector.broadcast %cst_5 : f32 to vector<128x64xf32>
    %8 = arith.maximumf %6, %7 : vector<128x64xf32>
    %9 = arith.truncf %8 : vector<128x64xf32> to vector<128x64xbf16>
    %c0_6 = arith.constant 0 : index
    %c0_7 = arith.constant 0 : index
    %10 = vector.load %arg4[%c0_6, %c0_7] : memref<64x64xbf16, #tpu.memory_space<vmem>>, vector<64x64xbf16>
    %cst_8 = arith.constant dense<0.000000e+00> : vector<128x64xf32>
    %11 = tpu.matmul %9, %10, %cst_8 {dimension_numbers = #tpu.dot_dimension_numbers<[1], [0], [0], [1], [0, 0, 1, 1], [], []>} : vector<128x64xbf16>, vector<64x64xbf16>, vector<128x64xf32> -> vector<128x64xf32>
    %c0_9 = arith.constant 0 : index
    %c0_10 = arith.constant 0 : index
    %12 = vector.load %arg5[%c0_9, %c0_10] : memref<1x64xf32, #tpu.memory_space<vmem>>, vector<1x64xf32>
    %13 = vector.broadcast %12 : vector<1x64xf32> to vector<128x64xf32>
    %14 = arith.addf %11, %13 : vector<128x64xf32>
    %cst_11 = arith.constant 0.000000e+00 : f32
    %15 = vector.broadcast %cst_11 : f32 to vector<128x64xf32>
    %16 = arith.maximumf %14, %15 : vector<128x64xf32>
    %17 = arith.truncf %16 : vector<128x64xf32> to vector<128x64xbf16>
    %c0_12 = arith.constant 0 : index
    %c0_13 = arith.constant 0 : index
    %18 = vector.load %arg6[%c0_12, %c0_13] : memref<64x64xbf16, #tpu.memory_space<vmem>>, vector<64x64xbf16>
    %cst_14 = arith.constant dense<0.000000e+00> : vector<128x64xf32>
    %19 = tpu.matmul %17, %18, %cst_14 {dimension_numbers = #tpu.dot_dimension_numbers<[1], [0], [0], [1], [0, 0, 1, 1], [], []>} : vector<128x64xbf16>, vector<64x64xbf16>, vector<128x64xf32> -> vector<128x64xf32>
    %c0_15 = arith.constant 0 : index
    %c0_16 = arith.constant 0 : index
    %20 = vector.load %arg7[%c0_15, %c0_16] : memref<1x64xf32, #tpu.memory_space<vmem>>, vector<1x64xf32>
    %21 = vector.broadcast %20 : vector<1x64xf32> to vector<128x64xf32>
    %22 = arith.addf %19, %21 : vector<128x64xf32>
    %cst_17 = arith.constant 0.000000e+00 : f32
    %23 = vector.broadcast %cst_17 : f32 to vector<128x64xf32>
    %24 = arith.maximumf %22, %23 : vector<128x64xf32>
    %25 = arith.truncf %24 : vector<128x64xf32> to vector<128x64xbf16>
    %c0_18 = arith.constant 0 : index
    %c0_19 = arith.constant 0 : index
    %26 = vector.load %arg8[%c0_18, %c0_19] : memref<128x64xbf16, #tpu.memory_space<vmem>>, vector<128x64xbf16>
    tpu.vector_store %arg8[%c0_18, %c0_19], %25 {strides = array<i32>} : memref<128x64xbf16, #tpu.memory_space<vmem>>, vector<128x64xbf16>,
    return
  }
  func.func @transform_0(%arg0: i32) -> (i32, i32) {
    %c0_i32 = arith.constant 0 : i32
    %c0_i32_0 = arith.constant 0 : i32
    return %arg0, %c0_i32 : i32, i32
  }
  func.func @transform_1(%arg0: i32) -> (i32, i32) {
    %c0_i32 = arith.constant 0 : i32
    %c0_i32_0 = arith.constant 0 : i32
    %c0_i32_1 = arith.constant 0 : i32
    return %c0_i32, %c0_i32_0 : i32, i32
  }
  func.func @transform_2(%arg0: i32) -> (i32, i32) {
    %c0_i32 = arith.constant 0 : i32
    %c0_i32_0 = arith.constant 0 : i32
    %c0_i32_1 = arith.constant 0 : i32
    return %c0_i32, %c0_i32_0 : i32, i32
  }
  func.func @transform_3(%arg0: i32) -> (i32, i32) {
    %c0_i32 = arith.constant 0 : i32
    %c0_i32_0 = arith.constant 0 : i32
    %c0_i32_1 = arith.constant 0 : i32
    return %c0_i32, %c0_i32_0 : i32, i32
  }
  func.func @transform_4(%arg0: i32) -> (i32, i32) {
    %c0_i32 = arith.constant 0 : i32
    %c0_i32_0 = arith.constant 0 : i32
    %c0_i32_1 = arith.constant 0 : i32
    return %c0_i32, %c0_i32_0 : i32, i32
  }
  func.func @transform_5(%arg0: i32) -> (i32, i32) {
    %c0_i32 = arith.constant 0 : i32
    %c0_i32_0 = arith.constant 0 : i32
    %c0_i32_1 = arith.constant 0 : i32
    return %c0_i32, %c0_i32_0 : i32, i32
  }
  func.func @transform_6(%arg0: i32) -> (i32, i32) {
    %c0_i32 = arith.constant 0 : i32
    %c0_i32_0 = arith.constant 0 : i32
    %c0_i32_1 = arith.constant 0 : i32
    return %c0_i32, %c0_i32_0 : i32, i32
  }
  func.func @transform_7(%arg0: i32) -> (i32, i32) {
    %c0_i32 = arith.constant 0 : i32
    %c0_i32_0 = arith.constant 0 : i32
    return %arg0, %c0_i32 : i32, i32
  }
}

module attributes {stable_mosaic.version = 11 : i64} {
  func.func @_graph1_pooled_kernel(%arg0: i32, %arg1: memref<1x64x64xbf16, #tpu.memory_space<vmem>>, %arg2: memref<64x128xbf16, #tpu.memory_space<vmem>>, %arg3: memref<1x128xf32, #tpu.memory_space<vmem>>, %arg4: memref<1x64x128xbf16, #tpu.memory_space<vmem>>) attributes {dimension_semantics = [#tpu.dimension_semantics<parallel>], iteration_bounds = array<i64: 2>, scalar_prefetch = 0 : i64, scratch_operands = 0 : i64, tpu.core_type = #tpu.core_type<tc>, window_params = [{transform_indices = @transform_0, window_bounds = array<i64: 1, 64, 64>}, {pipeline_mode = #tpu.pipeline_mode<synchronous>, transform_indices = @transform_1, window_bounds = array<i64: 64, 128>}, {pipeline_mode = #tpu.pipeline_mode<synchronous>, transform_indices = @transform_2, window_bounds = array<i64: 1, 128>}, {transform_indices = @transform_3, window_bounds = array<i64: 1, 64, 128>}]} {
    %c0 = arith.constant 0 : index
    %c0_0 = arith.constant 0 : index
    %c0_1 = arith.constant 0 : index
    %0 = vector.load %arg1[%c0, %c0_0, %c0_1] : memref<1x64x64xbf16, #tpu.memory_space<vmem>>, vector<1x64x64xbf16>
    %1 = vector.shape_cast %0 : vector<1x64x64xbf16> to vector<64x64xbf16>
    %c0_2 = arith.constant 0 : index
    %c0_3 = arith.constant 0 : index
    %2 = vector.load %arg2[%c0_2, %c0_3] : memref<64x128xbf16, #tpu.memory_space<vmem>>, vector<64x128xbf16>
    %cst = arith.constant dense<0.000000e+00> : vector<64x128xf32>
    %3 = tpu.matmul %1, %2, %cst {dimension_numbers = #tpu.dot_dimension_numbers<[1], [0], [0], [1], [0, 0, 1, 1], [], []>} : vector<64x64xbf16>, vector<64x128xbf16>, vector<64x128xf32> -> vector<64x128xf32>
    %c0_4 = arith.constant 0 : index
    %c0_5 = arith.constant 0 : index
    %4 = vector.load %arg3[%c0_4, %c0_5] : memref<1x128xf32, #tpu.memory_space<vmem>>, vector<1x128xf32>
    %5 = vector.broadcast %4 : vector<1x128xf32> to vector<64x128xf32>
    %6 = arith.addf %3, %5 : vector<64x128xf32>
    %cst_6 = arith.constant 0.000000e+00 : f32
    %7 = vector.broadcast %cst_6 : f32 to vector<64x128xf32>
    %8 = arith.maximumf %6, %7 : vector<64x128xf32>
    %9 = arith.truncf %8 : vector<64x128xf32> to vector<64x128xbf16>
    %c0_7 = arith.constant 0 : index
    %c0_8 = arith.constant 0 : index
    %c0_9 = arith.constant 0 : index
    %10 = vector.load %arg4[%c0_7, %c0_8, %c0_9] : memref<1x64x128xbf16, #tpu.memory_space<vmem>>, vector<1x64x128xbf16>
    %11 = vector.shape_cast %10 : vector<1x64x128xbf16> to vector<64x128xbf16>
    %12 = vector.shape_cast %9 : vector<64x128xbf16> to vector<1x64x128xbf16>
    tpu.vector_store %arg4[%c0_7, %c0_8, %c0_9], %12 {strides = array<i32>} : memref<1x64x128xbf16, #tpu.memory_space<vmem>>, vector<1x64x128xbf16>,
    return
  }
  func.func @transform_0(%arg0: i32) -> (i32, i32, i32) {
    %c0_i32 = arith.constant 0 : i32
    %c0_i32_0 = arith.constant 0 : i32
    %c0_i32_1 = arith.constant 0 : i32
    return %arg0, %c0_i32, %c0_i32_0 : i32, i32, i32
  }
  func.func @transform_1(%arg0: i32) -> (i32, i32) {
    %c0_i32 = arith.constant 0 : i32
    %c0_i32_0 = arith.constant 0 : i32
    %c0_i32_1 = arith.constant 0 : i32
    return %c0_i32, %c0_i32_0 : i32, i32
  }
  func.func @transform_2(%arg0: i32) -> (i32, i32) {
    %c0_i32 = arith.constant 0 : i32
    %c0_i32_0 = arith.constant 0 : i32
    %c0_i32_1 = arith.constant 0 : i32
    return %c0_i32, %c0_i32_0 : i32, i32
  }
  func.func @transform_3(%arg0: i32) -> (i32, i32, i32) {
    %c0_i32 = arith.constant 0 : i32
    %c0_i32_0 = arith.constant 0 : i32
    %c0_i32_1 = arith.constant 0 : i32
    return %arg0, %c0_i32, %c0_i32_0 : i32, i32, i32
  }
}

module attributes {stable_mosaic.version = 11 : i64} {
  func.func @_graph2_pooled_kernel(%arg0: i32, %arg1: memref<1x64x128xbf16, #tpu.memory_space<vmem>>, %arg2: memref<128x1024xbf16, #tpu.memory_space<vmem>>, %arg3: memref<1x1024xf32, #tpu.memory_space<vmem>>, %arg4: memref<1024x32xf32, #tpu.memory_space<vmem>>, %arg5: memref<1x32xf32, #tpu.memory_space<vmem>>, %arg6: memref<32x32xf32, #tpu.memory_space<vmem>>, %arg7: memref<1x32xf32, #tpu.memory_space<vmem>>, %arg8: memref<1x1x32xf32, #tpu.memory_space<vmem>>) attributes {dimension_semantics = [#tpu.dimension_semantics<parallel>], iteration_bounds = array<i64: 2>, scalar_prefetch = 0 : i64, scratch_operands = 0 : i64, tpu.core_type = #tpu.core_type<tc>, window_params = [{transform_indices = @transform_0, window_bounds = array<i64: 1, 64, 128>}, {pipeline_mode = #tpu.pipeline_mode<synchronous>, transform_indices = @transform_1, window_bounds = array<i64: 128, 1024>}, {pipeline_mode = #tpu.pipeline_mode<synchronous>, transform_indices = @transform_2, window_bounds = array<i64: 1, 1024>}, {pipeline_mode = #tpu.pipeline_mode<synchronous>, transform_indices = @transform_3, window_bounds = array<i64: 1024, 32>}, {pipeline_mode = #tpu.pipeline_mode<synchronous>, transform_indices = @transform_4, window_bounds = array<i64: 1, 32>}, {pipeline_mode = #tpu.pipeline_mode<synchronous>, transform_indices = @transform_5, window_bounds = array<i64: 32, 32>}, {pipeline_mode = #tpu.pipeline_mode<synchronous>, transform_indices = @transform_6, window_bounds = array<i64: 1, 32>}, {transform_indices = @transform_7, window_bounds = array<i64: 1, 1, 32>}]} {
    %c0 = arith.constant 0 : index
    %c0_0 = arith.constant 0 : index
    %c0_1 = arith.constant 0 : index
    %0 = vector.load %arg1[%c0, %c0_0, %c0_1] : memref<1x64x128xbf16, #tpu.memory_space<vmem>>, vector<1x64x128xbf16>
    %1 = vector.shape_cast %0 : vector<1x64x128xbf16> to vector<64x128xbf16>
    %c0_2 = arith.constant 0 : index
    %c0_3 = arith.constant 0 : index
    %2 = vector.load %arg2[%c0_2, %c0_3] : memref<128x1024xbf16, #tpu.memory_space<vmem>>, vector<128x1024xbf16>
    %cst = arith.constant dense<0.000000e+00> : vector<64x1024xf32>
    %3 = tpu.matmul %1, %2, %cst {dimension_numbers = #tpu.dot_dimension_numbers<[1], [0], [0], [1], [0, 0, 1, 1], [], []>} : vector<64x128xbf16>, vector<128x1024xbf16>, vector<64x1024xf32> -> vector<64x1024xf32>
    %c0_4 = arith.constant 0 : index
    %c0_5 = arith.constant 0 : index
    %4 = vector.load %arg3[%c0_4, %c0_5] : memref<1x1024xf32, #tpu.memory_space<vmem>>, vector<1x1024xf32>
    %5 = vector.broadcast %4 : vector<1x1024xf32> to vector<64x1024xf32>
    %6 = arith.addf %3, %5 : vector<64x1024xf32>
    %cst_6 = arith.constant dense<0xFF800000> : vector<1024xf32>
    %7 = vector.multi_reduction <maximumf>, %6, %cst_6 [0] : vector<64x1024xf32> to vector<1024xf32>
    %8 = vector.shape_cast %7 : vector<1024xf32> to vector<1x1024xf32>
    %c0_7 = arith.constant 0 : index
    %c0_8 = arith.constant 0 : index
    %9 = vector.load %arg4[%c0_7, %c0_8] : memref<1024x32xf32, #tpu.memory_space<vmem>>, vector<1024x32xf32>
    %cst_9 = arith.constant dense<0.000000e+00> : vector<1x32xf32>
    %10 = tpu.matmul %8, %9, %cst_9 {dimension_numbers = #tpu.dot_dimension_numbers<[1], [0], [0], [1], [0, 0, 1, 1], [], []>} : vector<1x1024xf32>, vector<1024x32xf32>, vector<1x32xf32> -> vector<1x32xf32>
    %c0_10 = arith.constant 0 : index
    %c0_11 = arith.constant 0 : index
    %11 = vector.load %arg5[%c0_10, %c0_11] : memref<1x32xf32, #tpu.memory_space<vmem>>, vector<1x32xf32>
    %12 = arith.addf %10, %11 : vector<1x32xf32>
    %cst_12 = arith.constant 0.000000e+00 : f32
    %13 = vector.broadcast %cst_12 : f32 to vector<1x32xf32>
    %14 = arith.maximumf %12, %13 : vector<1x32xf32>
    %c0_13 = arith.constant 0 : index
    %c0_14 = arith.constant 0 : index
    %15 = vector.load %arg6[%c0_13, %c0_14] : memref<32x32xf32, #tpu.memory_space<vmem>>, vector<32x32xf32>
    %cst_15 = arith.constant dense<0.000000e+00> : vector<1x32xf32>
    %16 = tpu.matmul %14, %15, %cst_15 {dimension_numbers = #tpu.dot_dimension_numbers<[1], [0], [0], [1], [0, 0, 1, 1], [], []>} : vector<1x32xf32>, vector<32x32xf32>, vector<1x32xf32> -> vector<1x32xf32>
    %c0_16 = arith.constant 0 : index
    %c0_17 = arith.constant 0 : index
    %17 = vector.load %arg7[%c0_16, %c0_17] : memref<1x32xf32, #tpu.memory_space<vmem>>, vector<1x32xf32>
    %18 = arith.addf %16, %17 : vector<1x32xf32>
    %c0_18 = arith.constant 0 : index
    %c0_19 = arith.constant 0 : index
    %c0_20 = arith.constant 0 : index
    %19 = vector.load %arg8[%c0_18, %c0_19, %c0_20] : memref<1x1x32xf32, #tpu.memory_space<vmem>>, vector<1x1x32xf32>
    %20 = vector.shape_cast %19 : vector<1x1x32xf32> to vector<1x32xf32>
    %21 = vector.shape_cast %18 : vector<1x32xf32> to vector<1x1x32xf32>
    tpu.vector_store %arg8[%c0_18, %c0_19, %c0_20], %21 {strides = array<i32>} : memref<1x1x32xf32, #tpu.memory_space<vmem>>, vector<1x1x32xf32>,
    return
  }
  func.func @transform_0(%arg0: i32) -> (i32, i32, i32) {
    %c0_i32 = arith.constant 0 : i32
    %c0_i32_0 = arith.constant 0 : i32
    %c0_i32_1 = arith.constant 0 : i32
    return %arg0, %c0_i32, %c0_i32_0 : i32, i32, i32
  }
  func.func @transform_1(%arg0: i32) -> (i32, i32) {
    %c0_i32 = arith.constant 0 : i32
    %c0_i32_0 = arith.constant 0 : i32
    %c0_i32_1 = arith.constant 0 : i32
    return %c0_i32, %c0_i32_0 : i32, i32
  }
  func.func @transform_2(%arg0: i32) -> (i32, i32) {
    %c0_i32 = arith.constant 0 : i32
    %c0_i32_0 = arith.constant 0 : i32
    %c0_i32_1 = arith.constant 0 : i32
    return %c0_i32, %c0_i32_0 : i32, i32
  }
  func.func @transform_3(%arg0: i32) -> (i32, i32) {
    %c0_i32 = arith.constant 0 : i32
    %c0_i32_0 = arith.constant 0 : i32
    %c0_i32_1 = arith.constant 0 : i32
    return %c0_i32, %c0_i32_0 : i32, i32
  }
  func.func @transform_4(%arg0: i32) -> (i32, i32) {
    %c0_i32 = arith.constant 0 : i32
    %c0_i32_0 = arith.constant 0 : i32
    %c0_i32_1 = arith.constant 0 : i32
    return %c0_i32, %c0_i32_0 : i32, i32
  }
  func.func @transform_5(%arg0: i32) -> (i32, i32) {
    %c0_i32 = arith.constant 0 : i32
    %c0_i32_0 = arith.constant 0 : i32
    %c0_i32_1 = arith.constant 0 : i32
    return %c0_i32, %c0_i32_0 : i32, i32
  }
  func.func @transform_6(%arg0: i32) -> (i32, i32) {
    %c0_i32 = arith.constant 0 : i32
    %c0_i32_0 = arith.constant 0 : i32
    %c0_i32_1 = arith.constant 0 : i32
    return %c0_i32, %c0_i32_0 : i32, i32
  }
  func.func @transform_7(%arg0: i32) -> (i32, i32, i32) {
    %c0_i32 = arith.constant 0 : i32
    %c0_i32_0 = arith.constant 0 : i32
    %c0_i32_1 = arith.constant 0 : i32
    return %arg0, %c0_i32, %c0_i32_0 : i32, i32, i32
  }
}

</mosaic_0001>

<llo_original>
// kernel: foldnet_encoder.4
$region0: #{foldnet_encoder.4}
  #allocation0 [shape = 'u32[]', space=smem, size = 0x4, offset = 0x4, fixed_abs, tag = 'smem constant byte address 0x4 - core index']
  #allocation1 [shape = 'u32[72,128]{1,0:T(1,128)}', space=vmem, size = 0x9000, scoped, tag = 'internal scratch']
  %s0 = inlined_call_operand.vmem [shape: f32[2,64,5], index: 0, kind: input, shape index: {}]
  %s1 = inlined_call_operand.vmem [shape: f32[2,64,5], index: 1, kind: input, shape index: {}]
  %s2 = inlined_call_operand.vmem [shape: bf16[2,64,64], index: 2, kind: output, shape index: {}]
  %s3 = sld [smem:[#allocation0]]
  $region41: #{foldnet_encoder.4} parent=0
    _
  %s5 = ssub.s32 1, %s3
  %s6 = scalar_select 0, %s5, %s3
  loop: start=0, step=1, limit=4
  $region2: #{foldnet_encoder.4} parent=0 // loop_pre_header
    _
  $region3: #{foldnet_encoder.4} parent=0 // loop_header
    %s8 = sphi 0, %s12
    %p9 = scmp.ge.s32.totalorder %s8, 4
    %s15 = sphi 0, %s34
    %s16 = sphi 0, %s30
    %s17 = sphi 0, %s26
    %s18 = sphi 0, %s15
    %s19 = sphi 0, %s16
    %s20 = sphi 0, %s17
    %s21 = sphi 0, %s18
    %s22 = sphi 0, %s19
    %s23 = sphi 0, %s20
    %s39 = sphi 0, %s41
    %s42 = sphi 0, %s39
    %s43 = sphi 0, %s42
    %s59 = sphi 0, %s43
    %s67 = sphi 0, %s69
    %s70 = sphi 0, %s67
    %s71 = sphi 0, %s70
    %s87 = sphi 0, %s71
    %s97 = sphi 0, %s99
    %s100 = sphi 0, %s97
    %s101 = sphi 0, %s100
    %s117 = sphi 0, %s101
  $region4: #{foldnet_encoder.4} parent=0 // loop_header_branch
    %11 = sbr.rel (%p9) target = $region8
  $region5: #{foldnet_encoder.4} parent=0 // loop_body
    %s13 = ssub.s32 %s8, 1
    %s14 = ssub.s32 %s8, 2
    %s24 = sadd.s32 1, %s17
    %p25 = scmp.ge.s32.totalorder %s24, 1
    %s26 = scalar_select %p25, 0, %s24
    %s27 = sadd.s32 1, %s16
    %s28 = scalar_select %p25, %s27, %s16
    %p29 = scmp.ge.s32.totalorder %s28, 1
    %s30 = scalar_select %p29, 0, %s28
    %s31 = sadd.s32 1, %s15
    %s32 = scalar_select %p29, %s31, %s15
    %p33 = scmp.ge.s32.totalorder %s32, 2
    %s34 = scalar_select %p33, 0, %s32
    %s35 = ssub.s32 %s15, %s34
    %s36 = ssub.s32 %s16, %s30
    %s37 = sor.u32 %s35, %s36
    %p38 = scmp.eq.s32.totalorder %s37, 0
    %s40 = sadd.s32 %s39, 1
    %s41 = scalar_select %p38, %s39, %s40
    %p44 = pneg %p38
    %p45 = scmp.eq.s32.totalorder %s8, 1
    %p46 = por %p44, %p45
    %p47 = scmp.ne.s32.totalorder %s39, %s42
    %p48 = scmp.eq.s32.totalorder %s8, 0
    %p49 = por %p47, %p48
    %p50 = scmp.ne.s32.totalorder %s39, %s42
    %p51 = scmp.eq.s32.totalorder %s13, 1
    %p52 = por %p50, %p51
    %p53 = scmp.ne.s32.totalorder %s42, %s43
    %p54 = scmp.eq.s32.totalorder %s13, 0
    %p55 = por %p53, %p54
    %p56 = scmp.ne.s32.totalorder %s42, %s43
    %p57 = scmp.eq.s32.totalorder %s14, 1
    %p58 = por %p56, %p57
    %p60 = scmp.ne.s32.totalorder %s43, %s59
    %p61 = scmp.eq.s32.totalorder %s14, 0
    %p62 = por %p60, %p61
    %s63 = ssub.s32 %s15, %s34
    %s64 = ssub.s32 %s17, %s26
    %s65 = sor.u32 %s63, %s64
    %p66 = scmp.eq.s32.totalorder %s65, 0
    %s68 = sadd.s32 %s67, 1
    %s69 = scalar_select %p66, %s67, %s68
    %p72 = pneg %p66
    %p73 = scmp.eq.s32.totalorder %s8, 1
    %p74 = por %p72, %p73
    %p75 = scmp.ne.s32.totalorder %s67, %s70
    %p76 = scmp.eq.s32.totalorder %s8, 0
    %p77 = por %p75, %p76
    %p78 = scmp.ne.s32.totalorder %s67, %s70
    %p79 = scmp.eq.s32.totalorder %s13, 1
    %p80 = por %p78, %p79
    %p81 = scmp.ne.s32.totalorder %s70, %s71
    %p82 = scmp.eq.s32.totalorder %s13, 0
    %p83 = por %p81, %p82
    %p84 = scmp.ne.s32.totalorder %s70, %s71
    %p85 = scmp.eq.s32.totalorder %s14, 1
    %p86 = por %p84, %p85
    %p88 = scmp.ne.s32.totalorder %s71, %s87
    %p89 = scmp.eq.s32.totalorder %s14, 0
    %p90 = por %p88, %p89
    %s91 = ssub.s32 %s15, %s34
    %s92 = ssub.s32 %s16, %s30
    %s93 = sor.u32 %s91, %s92
    %s94 = ssub.s32 %s17, %s26
    %s95 = sor.u32 %s93, %s94
    %p96 = scmp.eq.s32.totalorder %s95, 0
    %s98 = sadd.s32 %s97, 1
    %s99 = scalar_select %p96, %s97, %s98
    %p102 = pneg %p96
    %p103 = scmp.eq.s32.totalorder %s8, 1
    %p104 = por %p102, %p103
    %p105 = scmp.ne.s32.totalorder %s97, %s100
    %p106 = scmp.eq.s32.totalorder %s8, 0
    %p107 = por %p105, %p106
    %p108 = scmp.ne.s32.totalorder %s97, %s100
    %p109 = scmp.eq.s32.totalorder %s13, 1
    %p110 = por %p108, %p109
    %p111 = scmp.ne.s32.totalorder %s100, %s101
    %p112 = scmp.eq.s32.totalorder %s13, 0
    %p113 = por %p111, %p112
    %p114 = scmp.ne.s32.totalorder %s100, %s101
    %p115 = scmp.eq.s32.totalorder %s14, 1
    %p116 = por %p114, %p115
    %p118 = scmp.ne.s32.totalorder %s101, %s117
    %p119 = scmp.eq.s32.totalorder %s14, 0
    %p120 = por %p118, %p119
    %p121 = scmp.le.s32.totalorder 1, %s8
    %p122 = scmp.lt.s32.totalorder %s8, 3
    %p123 = pnand %p121, %p122
    %p124 = pneg %p123
    // Predicated region
    $region9: #{foldnet_encoder.4} parent=5 // pred_check
      _
    $region10: #{foldnet_encoder.4} parent=5 // pred_check_branch
      %126 = sbr.rel (%p123) target = $region12
    $region11: #{foldnet_encoder.4} parent=5 // pred_region
      %s127 = ssub.s32 %s8, 1
    $region12: #{foldnet_encoder.4} parent=5 // pred_fallthru
      _
    %p128 = scmp.lt.s32.totalorder %s8, 2
    // Predicated region
    $region13: #{foldnet_encoder.4} parent=5 // pred_check
      %p129 = pneg %p128
    $region14: #{foldnet_encoder.4} parent=5 // pred_check_branch
      %131 = sbr.rel (%p129) target = $region16
    $region15: #{foldnet_encoder.4} parent=5 // pred_region
      // Predicated region
      $region17: #{foldnet_encoder.4} parent=15 // pred_check
        %p132 = pneg %p49
      $region18: #{foldnet_encoder.4} parent=15 // pred_check_branch
        %134 = sbr.rel (%p132) target = $region20
      $region19: #{foldnet_encoder.4} parent=15 // pred_region
        %s135 = smul.u32 8, %s16
        %p136 = scmp.lt.s32.totalorder %s15, 1
        %s137 = scalar_select %p136, %s15, 1
        %p138 = scmp.lt.s32.totalorder %s135, 7
        %s139 = scalar_select %p138, %s135, 7
        %s140 = smul.addr %s137, 8
        %s141 = sadd.s32 %s139, %s140
        %s142 = smul.addr %s141, 8
        %s143 = scalar_lea.vmem %s0, %s142
        %s144 = smul.u32 8, %s16
      $region20: #{foldnet_encoder.4} parent=15 // pred_fallthru
        _
      // Predicated region
      $region21: #{foldnet_encoder.4} parent=15 // pred_check
        %p145 = pneg %p77
      $region22: #{foldnet_encoder.4} parent=15 // pred_check_branch
        %147 = sbr.rel (%p145) target = $region24
      $region23: #{foldnet_encoder.4} parent=15 // pred_region
        %s148 = smul.u32 8, %s17
        %p149 = scmp.lt.s32.totalorder %s15, 1
        %s150 = scalar_select %p149, %s15, 1
        %p151 = scmp.lt.s32.totalorder %s148, 7
        %s152 = scalar_select %p151, %s148, 7
        %s153 = smul.addr %s150, 8
        %s154 = sadd.s32 %s152, %s153
        %s155 = smul.addr %s154, 8
        %s156 = scalar_lea.vmem %s1, %s155
        %s157 = smul.u32 8, %s17
      $region24: #{foldnet_encoder.4} parent=15 // pred_fallthru
        _
    $region16: #{foldnet_encoder.4} parent=5 // pred_fallthru
      _
    %p158 = scmp.le.s32.totalorder 1, %s8
    %p159 = scmp.lt.s32.totalorder %s8, 3
    %p160 = pnand %p158, %p159
    %p161 = pneg %p160
    // Predicated region
    $region25: #{foldnet_encoder.4} parent=5 // pred_check
      _
    $region26: #{foldnet_encoder.4} parent=5 // pred_check_branch
      %163 = sbr.rel (%p160) target = $region28
    $region27: #{foldnet_encoder.4} parent=5 // pred_region
      %s164 = ssub.s32 %s8, 1
      %s165 = smul.u32 8, %s19
      %p166 = scmp.lt.s32.totalorder %s18, 1
      %s167 = scalar_select %p166, %s18, 1
      %p168 = scmp.lt.s32.totalorder %s165, 7
      %s169 = scalar_select %p168, %s165, 7
      %s170 = smul.addr %s167, 8
      %s171 = sadd.s32 %s169, %s170
      %s172 = smul.addr %s171, 8
      %s173 = scalar_lea.vmem %s0, %s172
      %p174 = pneg %p55
      %p175 = pneg %p52
      %s176 = smul.u32 8, %s20
      %p177 = scmp.lt.s32.totalorder %s18, 1
      %s178 = scalar_select %p177, %s18, 1
      %p179 = scmp.lt.s32.totalorder %s176, 7
      %s180 = scalar_select %p179, %s176, 7
      %s181 = smul.addr %s178, 8
      %s182 = sadd.s32 %s180, %s181
      %s183 = smul.addr %s182, 8
      %s184 = scalar_lea.vmem %s1, %s183
      %p185 = pneg %p83
      %p186 = pneg %p80
      %p187 = pneg %p113
      %p188 = pneg %p110
      %s189 = smul.u32 8, %s19
      %p190 = scmp.lt.s32.totalorder %s18, 1
      %s191 = scalar_select %p190, %s18, 1
      %p192 = scmp.lt.s32.totalorder %s189, 7
      %s193 = scalar_select %p192, %s189, 7
      %p194 = scmp.lt.s32.totalorder %s20, 0
      %s195 = scalar_select %p194, %s20, 0
      %s196 = sadd.s32 %s195, %s193
      %s197 = smul.addr %s191, 8
      %s198 = sadd.s32 %s196, %s197
      %s199 = smul.addr %s198, 4
      %s200 = scalar_lea.vmem %s2, %s199
      %s201 = smul.u32 8, %s19
      %p202 = scmp.lt.s32.totalorder %s18, 1
      %s203 = scalar_select %p202, %s18, 1
      %p204 = scmp.lt.s32.totalorder %s201, 7
      %s205 = scalar_select %p204, %s201, 7
      %s206 = smul.addr %s203, 8
      %s207 = sadd.s32 %s205, %s206
      %s208 = smul.addr %s207, 8
      %s209 = scalar_lea.vmem %s0, %s208
      %s210 = smul.u32 8, %s19
      %s211 = smul.u32 8, %s20
      %p212 = scmp.lt.s32.totalorder %s18, 1
      %s213 = scalar_select %p212, %s18, 1
      %p214 = scmp.lt.s32.totalorder %s211, 7
      %s215 = scalar_select %p214, %s211, 7
      %s216 = smul.addr %s213, 8
      %s217 = sadd.s32 %s215, %s216
      %s218 = smul.addr %s217, 8
      %s219 = scalar_lea.vmem %s1, %s218
      %s220 = smul.u32 8, %s20
      %s221 = smul.u32 8, %s19
      %p222 = scmp.lt.s32.totalorder %s18, 1
      %s223 = scalar_select %p222, %s18, 1
      %p224 = scmp.lt.s32.totalorder %s221, 7
      %s225 = scalar_select %p224, %s221, 7
      %p226 = scmp.lt.s32.totalorder %s20, 0
      %s227 = scalar_select %p226, %s20, 0
      %s228 = sadd.s32 %s227, %s225
      %s229 = smul.addr %s223, 8
      %s230 = sadd.s32 %s228, %s229
      %s231 = smul.addr %s230, 4
      %s232 = scalar_lea.vmem %s2, %s231
      %s233 = smul.u32 8, %s19
      %v234 = vld [vmem:[%s209] sm:$0xff]
      %v235 = vld [vmem:[%s209 + $0x8] sm:$0xff]
      %v236 = vld [vmem:[%s209 + $0x10] sm:$0xff]
      %v237 = vld [vmem:[%s209 + $0x18] sm:$0xff]
      %v238 = vld [vmem:[%s209 + $0x20] sm:$0xff]
      %v239 = vld [vmem:[%s209 + $0x28] sm:$0xff]
      %v240 = vld [vmem:[%s209 + $0x30] sm:$0xff]
      %v241 = vld [vmem:[%s209 + $0x38] sm:$0xff]
      %v242 = vld [vmem:[%s219] sm:$0xff]
      %v243 = vld [vmem:[%s219 + $0x8] sm:$0xff]
      %v244 = vld [vmem:[%s219 + $0x10] sm:$0xff]
      %v245 = vld [vmem:[%s219 + $0x18] sm:$0xff]
      %v246 = vld [vmem:[%s219 + $0x20] sm:$0xff]
      %v247 = vld [vmem:[%s219 + $0x28] sm:$0xff]
      %v248 = vld [vmem:[%s219 + $0x30] sm:$0xff]
      %v249 = vld [vmem:[%s219 + $0x38] sm:$0xff]
      %vm250 = vcmask 39936
      %v252 = vsel %vm250, %v234, 0
      %v255 = vsel %vm250, %v235, 0
      %v258 = vsel %vm250, %v236, 0
      %v261 = vsel %vm250, %v237, 0
      %v264 = vsel %vm250, %v238, 0
      %v267 = vsel %vm250, %v239, 0
      %v270 = vsel %vm250, %v240, 0
      %v273 = vsel %vm250, %v241, 0
      %v276 = vsel %vm250, %v242, 0
      %v279 = vsel %vm250, %v243, 0
      %v282 = vsel %vm250, %v244, 0
      %v285 = vsel %vm250, %v245, 0
      %v288 = vsel %vm250, %v246, 0
      %v291 = vsel %vm250, %v247, 0
      %v294 = vsel %vm250, %v248, 0
      %v297 = vsel %vm250, %v249, 0
      %299 = vmatpush.xpose.msra.mxu0 0.0
      %300 = vmatpush.xpose.msra.mxu0 0.0
      %301 = vmatpush.xpose.msra.mxu0 0.0
      %302 = vmatpush.xpose.msra.mxu0 0.0
      %303 = vmatpush.xpose.msra.mxu0 0.0
      %304 = vmatpush.xpose.msra.mxu0 0.0
      %305 = vmatpush.xpose.msra.mxu0 0.0
      %306 = vmatpush.xpose.msra.mxu0 0.0
      %307 = vmatpush.xpose.msra.mxu0 %v297
      %308 = vmatpush.xpose.msra.mxu0 %v294
      %309 = vmatpush.xpose.msra.mxu0 %v291
      %310 = vmatpush.xpose.msra.mxu0 %v288
      %311 = vmatpush.xpose.msra.mxu0 %v285
      %312 = vmatpush.xpose.msra.mxu0 %v282
      %313 = vmatpush.xpose.msra.mxu0 %v279
      %314 = vmatpush.xpose.msra.mxu0 %v276
      %315 = vmatmul.f32.gmra.mxu0 %v252
      %v316 = vpop.f32.mrf.mxu0
      %v317 = vadd.f32 0.0, %v316
      %318 = vmatmul.f32.gmra.mxu0 %v255
      %v319 = vpop.f32.mrf.mxu0
      %v320 = vadd.f32 0.0, %v319
      %321 = vmatmul.f32.gmra.mxu0 %v258
      %v322 = vpop.f32.mrf.mxu0
      %v323 = vadd.f32 0.0, %v322
      %324 = vmatmul.f32.gmra.mxu0 %v261
      %v325 = vpop.f32.mrf.mxu0
      %v326 = vadd.f32 0.0, %v325
      %327 = vmatmul.f32.gmra.mxu0 %v264
      %v328 = vpop.f32.mrf.mxu0
      %v329 = vadd.f32 0.0, %v328
      %330 = vmatmul.f32.gmra.mxu0 %v267
      %v331 = vpop.f32.mrf.mxu0
      %v332 = vadd.f32 0.0, %v331
      %333 = vmatmul.f32.gmra.mxu0 %v270
      %v334 = vpop.f32.mrf.mxu0
      %v335 = vadd.f32 0.0, %v334
      %336 = vmatmul.f32.gmra.mxu0 %v273
      %v337 = vpop.f32.mrf.mxu0
      %v338 = vadd.f32 0.0, %v337
      %339 = vdwg.mxu0
      %v340 = vpack.c.bf16 %v317, %v317
      %v341 = vpack.c.bf16 %v320, %v320
      %v342 = vpack.c.bf16 %v323, %v323
      %v343 = vpack.c.bf16 %v326, %v326
      %v344 = vpack.c.bf16 %v329, %v329
      %v345 = vpack.c.bf16 %v332, %v332
      %v346 = vpack.c.bf16 %v335, %v335
      %v347 = vpack.c.bf16 %v338, %v338
      %vm348 = vcmask 519168
      %349 = vst.msk [vmem:[%s232] sm:$0xf] %vm348, %v340
      %350 = vst.msk [vmem:[%s232 + $0x4] sm:$0xf] %vm348, %v341
      %351 = vst.msk [vmem:[%s232 + $0x8] sm:$0xf] %vm348, %v342
      %352 = vst.msk [vmem:[%s232 + $0xc] sm:$0xf] %vm348, %v343
      %353 = vst.msk [vmem:[%s232 + $0x10] sm:$0xf] %vm348, %v344
      %354 = vst.msk [vmem:[%s232 + $0x14] sm:$0xf] %vm348, %v345
      %355 = vst.msk [vmem:[%s232 + $0x18] sm:$0xf] %vm348, %v346
      %356 = vst.msk [vmem:[%s232 + $0x1c] sm:$0xf] %vm348, %v347
      %s357 = smul.u32 8, %s19
      %p358 = scmp.lt.s32.totalorder %s18, 1
      %s359 = scalar_select %p358, %s18, 1
      %p360 = scmp.lt.s32.totalorder %s357, 7
      %s361 = scalar_select %p360, %s357, 7
      %p362 = scmp.lt.s32.totalorder %s20, 0
      %s363 = scalar_select %p362, %s20, 0
      %s364 = sadd.s32 %s363, %s361
      %s365 = smul.addr %s359, 8
      %s366 = sadd.s32 %s364, %s365
      %s367 = smul.addr %s366, 4
      %s368 = scalar_lea.vmem %s2, %s367
      // Predicated region
      $region29: #{foldnet_encoder.4} parent=27 // pred_check
        %p369 = pneg %p110
      $region30: #{foldnet_encoder.4} parent=27 // pred_check_branch
        %371 = sbr.rel (%p369) target = $region32
      $region31: #{foldnet_encoder.4} parent=27 // pred_region
        %s372 = smul.u32 8, %s19
      $region32: #{foldnet_encoder.4} parent=27 // pred_fallthru
        _
    $region28: #{foldnet_encoder.4} parent=5 // pred_fallthru
      _
    %p373 = scmp.le.s32.totalorder 2, %s8
    // Predicated region
    $region33: #{foldnet_encoder.4} parent=5 // pred_check
      %p374 = pneg %p373
    $region34: #{foldnet_encoder.4} parent=5 // pred_check_branch
      %376 = sbr.rel (%p374) target = $region36
    $region35: #{foldnet_encoder.4} parent=5 // pred_region
      %s377 = ssub.s32 %s8, 2
      // Predicated region
      $region37: #{foldnet_encoder.4} parent=35 // pred_check
        %p378 = pneg %p116
      $region38: #{foldnet_encoder.4} parent=35 // pred_check_branch
        %380 = sbr.rel (%p378) target = $region40
      $region39: #{foldnet_encoder.4} parent=35 // pred_region
        %s381 = smul.u32 8, %s22
        %p382 = scmp.lt.s32.totalorder %s21, 1
        %s383 = scalar_select %p382, %s21, 1
        %p384 = scmp.lt.s32.totalorder %s381, 7
        %s385 = scalar_select %p384, %s381, 7
        %p386 = scmp.lt.s32.totalorder %s23, 0
        %s387 = scalar_select %p386, %s23, 0
        %s388 = sadd.s32 %s387, %s385
        %s389 = smul.addr %s383, 8
        %s390 = sadd.s32 %s388, %s389
        %s391 = smul.addr %s390, 4
        %s392 = scalar_lea.vmem %s2, %s391
      $region40: #{foldnet_encoder.4} parent=35 // pred_fallthru
        _
    $region36: #{foldnet_encoder.4} parent=5 // pred_fallthru
      _
  $region6: #{foldnet_encoder.4} parent=0 // loop_footer
    %s12 = sadd.s32 1, %s8
  $region7: #{foldnet_encoder.4} parent=0 // loop_footer_branch
    %7 = sbr.rel target = $region3
  $region8: #{foldnet_encoder.4} parent=0 // loop_exit
    _

// kernel: foldnet_encoder.5
$region0: #{foldnet_encoder.5}
  #allocation0 [shape = 'u32[]', space=smem, size = 0x4, offset = 0x4, fixed_abs, tag = 'smem constant byte address 0x4 - core index']
  #allocation1 [shape = 'u32[72,128]{1,0:T(1,128)}', space=vmem, size = 0x9000, scoped, tag = 'internal scratch']
  %s0 = inlined_call_operand.vmem [shape: f32[128,12], index: 0, kind: input, shape index: {}]
  %s1 = inlined_call_operand.vmem [shape: bf16[12,64], index: 1, kind: input, shape index: {}]
  %s2 = inlined_call_operand.vmem [shape: f32[1,64], index: 2, kind: input, shape index: {}]
  %s3 = inlined_call_operand.vmem [shape: bf16[64,64], index: 3, kind: input, shape index: {}]
  %s4 = inlined_call_operand.vmem [shape: f32[1,64], index: 4, kind: input, shape index: {}]
  %s5 = inlined_call_operand.vmem [shape: bf16[64,64], index: 5, kind: input, shape index: {}]
  %s6 = inlined_call_operand.vmem [shape: f32[1,64], index: 6, kind: input, shape index: {}]
  %s7 = inlined_call_operand.vmem [shape: bf16[128,64], index: 7, kind: output, shape index: {}]
  %s8 = sld [smem:[#allocation0]]
  $region38: #{foldnet_encoder.5} parent=0
    _
  %s10 = ssub.s32 1, %s8
  %s11 = scalar_select 0, %s10, %s8
  // Predicated region
  $region2: #{foldnet_encoder.5} parent=0 // pred_check
    _
  $region3: #{foldnet_encoder.5} parent=0 // pred_check_branch
    %13 = sbr.rel (0) target = $region5
  $region4: #{foldnet_encoder.5} parent=0 // pred_region
    _
  $region5: #{foldnet_encoder.5} parent=0 // pred_fallthru
    _
  // Predicated region
  $region6: #{foldnet_encoder.5} parent=0 // pred_check
    _
  $region7: #{foldnet_encoder.5} parent=0 // pred_check_branch
    %15 = sbr.rel (0) target = $region9
  $region8: #{foldnet_encoder.5} parent=0 // pred_region
    _
  $region9: #{foldnet_encoder.5} parent=0 // pred_fallthru
    _
  // Predicated region
  $region10: #{foldnet_encoder.5} parent=0 // pred_check
    _
  $region11: #{foldnet_encoder.5} parent=0 // pred_check_branch
    %17 = sbr.rel (0) target = $region13
  $region12: #{foldnet_encoder.5} parent=0 // pred_region
    _
  $region13: #{foldnet_encoder.5} parent=0 // pred_fallthru
    _
  // Predicated region
  $region14: #{foldnet_encoder.5} parent=0 // pred_check
    _
  $region15: #{foldnet_encoder.5} parent=0 // pred_check_branch
    %19 = sbr.rel (0) target = $region17
  $region16: #{foldnet_encoder.5} parent=0 // pred_region
    _
  $region17: #{foldnet_encoder.5} parent=0 // pred_fallthru
    _
  // Predicated region
  $region18: #{foldnet_encoder.5} parent=0 // pred_check
    _
  $region19: #{foldnet_encoder.5} parent=0 // pred_check_branch
    %21 = sbr.rel (0) target = $region21
  $region20: #{foldnet_encoder.5} parent=0 // pred_region
    _
  $region21: #{foldnet_encoder.5} parent=0 // pred_fallthru
    _
  // Predicated region
  $region22: #{foldnet_encoder.5} parent=0 // pred_check
    _
  $region23: #{foldnet_encoder.5} parent=0 // pred_check_branch
    %23 = sbr.rel (0) target = $region25
  $region24: #{foldnet_encoder.5} parent=0 // pred_region
    _
  $region25: #{foldnet_encoder.5} parent=0 // pred_fallthru
    _
  // Predicated region
  $region26: #{foldnet_encoder.5} parent=0 // pred_check
    _
  $region27: #{foldnet_encoder.5} parent=0 // pred_check_branch
    %25 = sbr.rel (0) target = $region29
  $region28: #{foldnet_encoder.5} parent=0 // pred_region
    _
  $region29: #{foldnet_encoder.5} parent=0 // pred_fallthru
    _
  %v27 = vld [vmem:[%s0] sm:$0xff]
  %v28 = vld [vmem:[%s0 + $0x8] sm:$0xff]
  %v29 = vld [vmem:[%s0 + $0x10] sm:$0xff]
  %v30 = vld [vmem:[%s0 + $0x18] sm:$0xff]
  %v31 = vld [vmem:[%s0 + $0x20] sm:$0xff]
  %v32 = vld [vmem:[%s0 + $0x28] sm:$0xff]
  %v33 = vld [vmem:[%s0 + $0x30] sm:$0xff]
  %v34 = vld [vmem:[%s0 + $0x38] sm:$0xff]
  %v35 = vld [vmem:[%s0 + $0x40] sm:$0xff]
  %v36 = vld [vmem:[%s0 + $0x48] sm:$0xff]
  %v37 = vld [vmem:[%s0 + $0x50] sm:$0xff]
  %v38 = vld [vmem:[%s0 + $0x58] sm:$0xff]
  %v39 = vld [vmem:[%s0 + $0x60] sm:$0xff]
  %v40 = vld [vmem:[%s0 + $0x68] sm:$0xff]
  %v41 = vld [vmem:[%s0 + $0x70] sm:$0xff]
  %v42 = vld [vmem:[%s0 + $0x78] sm:$0xff]
  %v43 = vpack.c.bf16 %v28, %v27
  %v44 = vpack.c.bf16 %v30, %v29
  %v45 = vpack.c.bf16 %v32, %v31
  %v46 = vpack.c.bf16 %v34, %v33
  %v47 = vpack.c.bf16 %v36, %v35
  %v48 = vpack.c.bf16 %v38, %v37
  %v49 = vpack.c.bf16 %v40, %v39
  %v50 = vpack.c.bf16 %v42, %v41
  %v51 = vld [vmem:[%s1] sm:$0xf]
  %v52 = vld [vmem:[%s1 + $0x4] sm:$0x3]
  %v53 = vld [vmem:[%s2] sm:$0x1]
  %v55 = vperm.slane %v53, 0
  %v59 = vunpack.c.l.b16 %v51
  %v60 = vunpack.c.l.b16 %v52
  %v61 = vpack.c.b16 %v60, %v59
  %vm62 = vcmask 97280
  %v64 = vsel %vm62, %v43, 0
  %v67 = vsel %vm62, %v44, 0
  %v70 = vsel %vm62, %v45, 0
  %v73 = vsel %vm62, %v46, 0
  %v76 = vsel %vm62, %v47, 0
  %v79 = vsel %vm62, %v48, 0
  %v82 = vsel %vm62, %v49, 0
  %v85 = vsel %vm62, %v50, 0
  %vm87 = vcmask 1045504
  %v89 = vsel %vm87, %v61, 0
  %91 = vmatpush.bf16.msra.mxu0 0
  %92 = vmatpush.bf16.msra.mxu0 0
  %93 = vmatpush.bf16.msra.mxu0 0
  %94 = vmatpush.bf16.msra.mxu0 0
  %95 = vmatpush.bf16.msra.mxu0 0
  %96 = vmatpush.bf16.msra.mxu0 0
  %97 = vmatpush.bf16.msra.mxu0 0
  %98 = vmatpush.bf16.msra.mxu0 %v89
  %99 = vmatmul.bf16.gmra.mxu0 %v64
  %v100 = vpop.f32.mrf.mxu0
  %v101 = vadd.f32 %v55, %v100
  %v102 = vpop.f32.mrf.mxu0
  %v103 = vadd.f32 %v55, %v102
  %104 = vmatmul.bf16.gmra.mxu0 %v67
  %v105 = vpop.f32.mrf.mxu0
  %v106 = vadd.f32 %v55, %v105
  %v107 = vpop.f32.mrf.mxu0
  %v108 = vadd.f32 %v55, %v107
  %109 = vmatmul.bf16.gmra.mxu0 %v70
  %v110 = vpop.f32.mrf.mxu0
  %v111 = vadd.f32 %v55, %v110
  %v112 = vpop.f32.mrf.mxu0
  %v113 = vadd.f32 %v55, %v112
  %114 = vmatmul.bf16.gmra.mxu0 %v73
  %v115 = vpop.f32.mrf.mxu0
  %v116 = vadd.f32 %v55, %v115
  %v117 = vpop.f32.mrf.mxu0
  %v118 = vadd.f32 %v55, %v117
  %119 = vmatmul.bf16.gmra.mxu0 %v76
  %v120 = vpop.f32.mrf.mxu0
  %v121 = vadd.f32 %v55, %v120
  %v122 = vpop.f32.mrf.mxu0
  %v123 = vadd.f32 %v55, %v122
  %124 = vmatmul.bf16.gmra.mxu0 %v79
  %v125 = vpop.f32.mrf.mxu0
  %v126 = vadd.f32 %v55, %v125
  %v127 = vpop.f32.mrf.mxu0
  %v128 = vadd.f32 %v55, %v127
  %129 = vmatmul.bf16.gmra.mxu0 %v82
  %v130 = vpop.f32.mrf.mxu0
  %v131 = vadd.f32 %v55, %v130
  %v132 = vpop.f32.mrf.mxu0
  %v133 = vadd.f32 %v55, %v132
  %134 = vmatmul.bf16.gmra.mxu0 %v85
  %v135 = vpop.f32.mrf.mxu0
  %v136 = vadd.f32 %v55, %v135
  %v137 = vpop.f32.mrf.mxu0
  %v138 = vadd.f32 %v55, %v137
  %139 = vdwg.mxu0
  %v140 = vmax.f32 %v101, 0.0
  %v141 = vmax.f32 %v103, 0.0
  %v142 = vmax.f32 %v106, 0.0
  %v143 = vmax.f32 %v108, 0.0
  %v144 = vmax.f32 %v111, 0.0
  %v145 = vmax.f32 %v113, 0.0
  %v146 = vmax.f32 %v116, 0.0
  %v147 = vmax.f32 %v118, 0.0
  %v148 = vmax.f32 %v121, 0.0
  %v149 = vmax.f32 %v123, 0.0
  %v150 = vmax.f32 %v126, 0.0
  %v151 = vmax.f32 %v128, 0.0
  %v152 = vmax.f32 %v131, 0.0
  %v153 = vmax.f32 %v133, 0.0
  %v154 = vmax.f32 %v136, 0.0
  %v155 = vmax.f32 %v138, 0.0
  %v156 = vpack.c.bf16 %v141, %v140
  %v157 = vpack.c.bf16 %v143, %v142
  %v158 = vpack.c.bf16 %v145, %v144
  %v159 = vpack.c.bf16 %v147, %v146
  %v160 = vpack.c.bf16 %v149, %v148
  %v161 = vpack.c.bf16 %v151, %v150
  %v162 = vpack.c.bf16 %v153, %v152
  %v163 = vpack.c.bf16 %v155, %v154
  %v164 = vld [vmem:[%s3] sm:$0xf]
  %v165 = vld [vmem:[%s3 + $0x4] sm:$0xf]
  %v166 = vld [vmem:[%s3 + $0x8] sm:$0xf]
  %v167 = vld [vmem:[%s3 + $0xc] sm:$0xf]
  %v168 = vld [vmem:[%s3 + $0x10] sm:$0xf]
  %v169 = vld [vmem:[%s3 + $0x14] sm:$0xf]
  %v170 = vld [vmem:[%s3 + $0x18] sm:$0xf]
  %v171 = vld [vmem:[%s3 + $0x1c] sm:$0xf]
  %v172 = vld [vmem:[%s4] sm:$0x1]
  %v174 = vperm.slane %v172, 0
  %v184 = vunpack.c.l.b16 %v164
  %v185 = vunpack.c.l.b16 %v165
  %v186 = vunpack.c.l.b16 %v166
  %v187 = vunpack.c.l.b16 %v167
  %v188 = vunpack.c.l.b16 %v168
  %v189 = vunpack.c.l.b16 %v169
  %v190 = vunpack.c.l.b16 %v170
  %v191 = vunpack.c.l.b16 %v171
  %v192 = vpack.c.b16 %v185, %v184
  %v193 = vpack.c.b16 %v187, %v186
  %v194 = vpack.c.b16 %v189, %v188
  %v195 = vpack.c.b16 %v191, %v190
  %vm200 = vcmask 523264
  %v202 = vsel %vm200, %v156, 0
  %v205 = vsel %vm200, %v157, 0
  %v208 = vsel %vm200, %v158, 0
  %v211 = vsel %vm200, %v159, 0
  %v214 = vsel %vm200, %v160, 0
  %v217 = vsel %vm200, %v161, 0
  %v220 = vsel %vm200, %v162, 0
  %v223 = vsel %vm200, %v163, 0
  %225 = vmatpush.bf16.msra.mxu0 0
  %226 = vmatpush.bf16.msra.mxu0 0
  %227 = vmatpush.bf16.msra.mxu0 0
  %228 = vmatpush.bf16.msra.mxu0 0
  %229 = vmatpush.bf16.msra.mxu0 %v195
  %230 = vmatpush.bf16.msra.mxu0 %v194
  %231 = vmatpush.bf16.msra.mxu0 %v193
  %232 = vmatpush.bf16.msra.mxu0 %v192
  %233 = vmatmul.bf16.gmra.mxu0 %v202
  %v234 = vpop.f32.mrf.mxu0
  %v235 = vadd.f32 %v174, %v234
  %v236 = vpop.f32.mrf.mxu0
  %v237 = vadd.f32 %v174, %v236
  %238 = vmatmul.bf16.gmra.mxu0 %v205
  %v239 = vpop.f32.mrf.mxu0
  %v240 = vadd.f32 %v174, %v239
  %v241 = vpop.f32.mrf.mxu0
  %v242 = vadd.f32 %v174, %v241
  %243 = vmatmul.bf16.gmra.mxu0 %v208
  %v244 = vpop.f32.mrf.mxu0
  %v245 = vadd.f32 %v174, %v244
  %v246 = vpop.f32.mrf.mxu0
  %v247 = vadd.f32 %v174, %v246
  %248 = vmatmul.bf16.gmra.mxu0 %v211
  %v249 = vpop.f32.mrf.mxu0
  %v250 = vadd.f32 %v174, %v249
  %v251 = vpop.f32.mrf.mxu0
  %v252 = vadd.f32 %v174, %v251
  %253 = vmatmul.bf16.gmra.mxu0 %v214
  %v254 = vpop.f32.mrf.mxu0
  %v255 = vadd.f32 %v174, %v254
  %v256 = vpop.f32.mrf.mxu0
  %v257 = vadd.f32 %v174, %v256
  %258 = vmatmul.bf16.gmra.mxu0 %v217
  %v259 = vpop.f32.mrf.mxu0
  %v260 = vadd.f32 %v174, %v259
  %v261 = vpop.f32.mrf.mxu0
  %v262 = vadd.f32 %v174, %v261
  %263 = vmatmul.bf16.gmra.mxu0 %v220
  %v264 = vpop.f32.mrf.mxu0
  %v265 = vadd.f32 %v174, %v264
  %v266 = vpop.f32.mrf.mxu0
  %v267 = vadd.f32 %v174, %v266
  %268 = vmatmul.bf16.gmra.mxu0 %v223
  %v269 = vpop.f32.mrf.mxu0
  %v270 = vadd.f32 %v174, %v269
  %v271 = vpop.f32.mrf.mxu0
  %v272 = vadd.f32 %v174, %v271
  %273 = vdwg.mxu0
  %v274 = vmax.f32 %v235, 0.0
  %v275 = vmax.f32 %v237, 0.0
  %v276 = vmax.f32 %v240, 0.0
  %v277 = vmax.f32 %v242, 0.0
  %v278 = vmax.f32 %v245, 0.0
  %v279 = vmax.f32 %v247, 0.0
  %v280 = vmax.f32 %v250, 0.0
  %v281 = vmax.f32 %v252, 0.0
  %v282 = vmax.f32 %v255, 0.0
  %v283 = vmax.f32 %v257, 0.0
  %v284 = vmax.f32 %v260, 0.0
  %v285 = vmax.f32 %v262, 0.0
  %v286 = vmax.f32 %v265, 0.0
  %v287 = vmax.f32 %v267, 0.0
  %v288 = vmax.f32 %v270, 0.0
  %v289 = vmax.f32 %v272, 0.0
  %v290 = vpack.c.bf16 %v275, %v274
  %v291 = vpack.c.bf16 %v277, %v276
  %v292 = vpack.c.bf16 %v279, %v278
  %v293 = vpack.c.bf16 %v281, %v280
  %v294 = vpack.c.bf16 %v283, %v282
  %v295 = vpack.c.bf16 %v285, %v284
  %v296 = vpack.c.bf16 %v287, %v286
  %v297 = vpack.c.bf16 %v289, %v288
  %v298 = vld [vmem:[%s5] sm:$0xf]
  %v299 = vld [vmem:[%s5 + $0x4] sm:$0xf]
  %v300 = vld [vmem:[%s5 + $0x8] sm:$0xf]
  %v301 = vld [vmem:[%s5 + $0xc] sm:$0xf]
  %v302 = vld [vmem:[%s5 + $0x10] sm:$0xf]
  %v303 = vld [vmem:[%s5 + $0x14] sm:$0xf]
  %v304 = vld [vmem:[%s5 + $0x18] sm:$0xf]
  %v305 = vld [vmem:[%s5 + $0x1c] sm:$0xf]
  %v306 = vld [vmem:[%s6] sm:$0x1]
  %v308 = vperm.slane %v306, 0
  %v318 = vunpack.c.l.b16 %v298
  %v319 = vunpack.c.l.b16 %v299
  %v320 = vunpack.c.l.b16 %v300
  %v321 = vunpack.c.l.b16 %v301
  %v322 = vunpack.c.l.b16 %v302
  %v323 = vunpack.c.l.b16 %v303
  %v324 = vunpack.c.l.b16 %v304
  %v325 = vunpack.c.l.b16 %v305
  %v326 = vpack.c.b16 %v319, %v318
  %v327 = vpack.c.b16 %v321, %v320
  %v328 = vpack.c.b16 %v323, %v322
  %v329 = vpack.c.b16 %v325, %v324
  %v335 = vsel %vm200, %v290, 0
  %v338 = vsel %vm200, %v291, 0
  %v341 = vsel %vm200, %v292, 0
  %v344 = vsel %vm200, %v293, 0
  %v347 = vsel %vm200, %v294, 0
  %v350 = vsel %vm200, %v295, 0
  %v353 = vsel %vm200, %v296, 0
  %v356 = vsel %vm200, %v297, 0
  %358 = vmatpush.bf16.msra.mxu0 0
  %359 = vmatpush.bf16.msra.mxu0 0
  %360 = vmatpush.bf16.msra.mxu0 0
  %361 = vmatpush.bf16.msra.mxu0 0
  %362 = vmatpush.bf16.msra.mxu0 %v329
  %363 = vmatpush.bf16.msra.mxu0 %v328
  %364 = vmatpush.bf16.msra.mxu0 %v327
  %365 = vmatpush.bf16.msra.mxu0 %v326
  %366 = vmatmul.bf16.gmra.mxu0 %v335
  %v367 = vpop.f32.mrf.mxu0
  %v368 = vadd.f32 %v308, %v367
  %v369 = vpop.f32.mrf.mxu0
  %v370 = vadd.f32 %v308, %v369
  %371 = vmatmul.bf16.gmra.mxu0 %v338
  %v372 = vpop.f32.mrf.mxu0
  %v373 = vadd.f32 %v308, %v372
  %v374 = vpop.f32.mrf.mxu0
  %v375 = vadd.f32 %v308, %v374
  %376 = vmatmul.bf16.gmra.mxu0 %v341
  %v377 = vpop.f32.mrf.mxu0
  %v378 = vadd.f32 %v308, %v377
  %v379 = vpop.f32.mrf.mxu0
  %v380 = vadd.f32 %v308, %v379
  %381 = vmatmul.bf16.gmra.mxu0 %v344
  %v382 = vpop.f32.mrf.mxu0
  %v383 = vadd.f32 %v308, %v382
  %v384 = vpop.f32.mrf.mxu0
  %v385 = vadd.f32 %v308, %v384
  %386 = vmatmul.bf16.gmra.mxu0 %v347
  %v387 = vpop.f32.mrf.mxu0
  %v388 = vadd.f32 %v308, %v387
  %v389 = vpop.f32.mrf.mxu0
  %v390 = vadd.f32 %v308, %v389
  %391 = vmatmul.bf16.gmra.mxu0 %v350
  %v392 = vpop.f32.mrf.mxu0
  %v393 = vadd.f32 %v308, %v392
  %v394 = vpop.f32.mrf.mxu0
  %v395 = vadd.f32 %v308, %v394
  %396 = vmatmul.bf16.gmra.mxu0 %v353
  %v397 = vpop.f32.mrf.mxu0
  %v398 = vadd.f32 %v308, %v397
  %v399 = vpop.f32.mrf.mxu0
  %v400 = vadd.f32 %v308, %v399
  %401 = vmatmul.bf16.gmra.mxu0 %v356
  %v402 = vpop.f32.mrf.mxu0
  %v403 = vadd.f32 %v308, %v402
  %v404 = vpop.f32.mrf.mxu0
  %v405 = vadd.f32 %v308, %v404
  %406 = vdwg.mxu0
  %v407 = vmax.f32 %v368, 0.0
  %v408 = vmax.f32 %v370, 0.0
  %v409 = vmax.f32 %v373, 0.0
  %v410 = vmax.f32 %v375, 0.0
  %v411 = vmax.f32 %v378, 0.0
  %v412 = vmax.f32 %v380, 0.0
  %v413 = vmax.f32 %v383, 0.0
  %v414 = vmax.f32 %v385, 0.0
  %v415 = vmax.f32 %v388, 0.0
  %v416 = vmax.f32 %v390, 0.0
  %v417 = vmax.f32 %v393, 0.0
  %v418 = vmax.f32 %v395, 0.0
  %v419 = vmax.f32 %v398, 0.0
  %v420 = vmax.f32 %v400, 0.0
  %v421 = vmax.f32 %v403, 0.0
  %v422 = vmax.f32 %v405, 0.0
  %v423 = vpack.c.bf16 %v407, %v407
  %v424 = vpack.c.bf16 %v408, %v408
  %v425 = vpack.c.bf16 %v409, %v409
  %v426 = vpack.c.bf16 %v410, %v410
  %v427 = vpack.c.bf16 %v411, %v411
  %v428 = vpack.c.bf16 %v412, %v412
  %v429 = vpack.c.bf16 %v413, %v413
  %v430 = vpack.c.bf16 %v414, %v414
  %v431 = vpack.c.bf16 %v415, %v415
  %v432 = vpack.c.bf16 %v416, %v416
  %v433 = vpack.c.bf16 %v417, %v417
  %v434 = vpack.c.bf16 %v418, %v418
  %v435 = vpack.c.bf16 %v419, %v419
  %v436 = vpack.c.bf16 %v420, %v420
  %v437 = vpack.c.bf16 %v421, %v421
  %v438 = vpack.c.bf16 %v422, %v422
  %vm439 = vcmask 519168
  %440 = vst.msk [vmem:[%s7] sm:$0xf] %vm439, %v423
  %441 = vst.msk [vmem:[%s7 + $0x4] sm:$0xf] %vm439, %v424
  %442 = vst.msk [vmem:[%s7 + $0x8] sm:$0xf] %vm439, %v425
  %443 = vst.msk [vmem:[%s7 + $0xc] sm:$0xf] %vm439, %v426
  %444 = vst.msk [vmem:[%s7 + $0x10] sm:$0xf] %vm439, %v427
  %445 = vst.msk [vmem:[%s7 + $0x14] sm:$0xf] %vm439, %v428
  %446 = vst.msk [vmem:[%s7 + $0x18] sm:$0xf] %vm439, %v429
  %447 = vst.msk [vmem:[%s7 + $0x1c] sm:$0xf] %vm439, %v430
  %448 = vst.msk [vmem:[%s7 + $0x20] sm:$0xf] %vm439, %v431
  %449 = vst.msk [vmem:[%s7 + $0x24] sm:$0xf] %vm439, %v432
  %450 = vst.msk [vmem:[%s7 + $0x28] sm:$0xf] %vm439, %v433
  %451 = vst.msk [vmem:[%s7 + $0x2c] sm:$0xf] %vm439, %v434
  %452 = vst.msk [vmem:[%s7 + $0x30] sm:$0xf] %vm439, %v435
  %453 = vst.msk [vmem:[%s7 + $0x34] sm:$0xf] %vm439, %v436
  %454 = vst.msk [vmem:[%s7 + $0x38] sm:$0xf] %vm439, %v437
  %455 = vst.msk [vmem:[%s7 + $0x3c] sm:$0xf] %vm439, %v438
  // Predicated region
  $region30: #{foldnet_encoder.5} parent=0 // pred_check
    _
  $region31: #{foldnet_encoder.5} parent=0 // pred_check_branch
    %457 = sbr.rel (0) target = $region33
  $region32: #{foldnet_encoder.5} parent=0 // pred_region
    _
  $region33: #{foldnet_encoder.5} parent=0 // pred_fallthru
    _
  // Predicated region
  $region34: #{foldnet_encoder.5} parent=0 // pred_check
    _
  $region35: #{foldnet_encoder.5} parent=0 // pred_check_branch
    %459 = sbr.rel (0) target = $region37
  $region36: #{foldnet_encoder.5} parent=0 // pred_region
    _
  $region37: #{foldnet_encoder.5} parent=0 // pred_fallthru
    _

// kernel: foldnet_encoder.6
$region0: #{foldnet_encoder.6}
  #allocation0 [shape = 'u32[]', space=smem, size = 0x4, offset = 0x4, fixed_abs, tag = 'smem constant byte address 0x4 - core index']
  #allocation1 [shape = 'u32[72,128]{1,0:T(1,128)}', space=vmem, size = 0x9000, scoped, tag = 'internal scratch']
  %s0 = inlined_call_operand.vmem [shape: bf16[2,64,64], index: 0, kind: input, shape index: {}]
  %s1 = inlined_call_operand.vmem [shape: bf16[64,128], index: 1, kind: input, shape index: {}]
  %s2 = inlined_call_operand.vmem [shape: f32[1,128], index: 2, kind: input, shape index: {}]
  %s3 = inlined_call_operand.vmem [shape: bf16[2,64,128], index: 3, kind: output, shape index: {}]
  %s4 = sld [smem:[#allocation0]]
  $region45: #{foldnet_encoder.6} parent=0
    _
  %s6 = ssub.s32 1, %s4
  %s7 = scalar_select 0, %s6, %s4
  loop: start=0, step=1, limit=4
  $region2: #{foldnet_encoder.6} parent=0 // loop_pre_header
    _
  $region3: #{foldnet_encoder.6} parent=0 // loop_header
    %s9 = sphi 0, %s13
    %p10 = scmp.ge.s32.totalorder %s9, 4
    %s19 = sphi 0, %s21
    %s22 = sphi 0, %s19
    %s23 = sphi 0, %s22
    %s39 = sphi 0, %s23
    %s43 = sphi 0, %s43
    %s45 = sphi 0, %s43
    %s46 = sphi 0, %s45
    %s60 = sphi 0, %s46
    %s64 = sphi 0, %s64
    %s66 = sphi 0, %s64
    %s67 = sphi 0, %s66
    %s81 = sphi 0, %s67
    %s87 = sphi 0, %s89
    %s90 = sphi 0, %s87
    %s91 = sphi 0, %s90
    %s107 = sphi 0, %s91
  $region4: #{foldnet_encoder.6} parent=0 // loop_header_branch
    %12 = sbr.rel (%p10) target = $region8
  $region5: #{foldnet_encoder.6} parent=0 // loop_body
    %s14 = ssub.s32 %s9, 1
    %s15 = ssub.s32 %s9, 2
    %s16 = sadd.s32 %s9, 1
    %s17 = ssub.s32 %s9, %s16
    %p18 = scmp.eq.s32.totalorder %s17, 0
    %s20 = sadd.s32 %s19, 1
    %s21 = scalar_select %p18, %s19, %s20
    %p24 = pneg %p18
    %p25 = scmp.eq.s32.totalorder %s9, 1
    %p26 = por %p24, %p25
    %p27 = scmp.ne.s32.totalorder %s19, %s22
    %p28 = scmp.eq.s32.totalorder %s9, 0
    %p29 = por %p27, %p28
    %p30 = scmp.ne.s32.totalorder %s19, %s22
    %p31 = scmp.eq.s32.totalorder %s14, 1
    %p32 = por %p30, %p31
    %p33 = scmp.ne.s32.totalorder %s22, %s23
    %p34 = scmp.eq.s32.totalorder %s14, 0
    %p35 = por %p33, %p34
    %p36 = scmp.ne.s32.totalorder %s22, %s23
    %p37 = scmp.eq.s32.totalorder %s15, 1
    %p38 = por %p36, %p37
    %p40 = scmp.ne.s32.totalorder %s23, %s39
    %p41 = scmp.eq.s32.totalorder %s15, 0
    %p42 = por %p40, %p41
    %s44 = sadd.s32 %s43, 1
    %p47 = scmp.eq.s32.totalorder %s9, 1
    %p48 = scmp.ne.s32.totalorder %s43, %s45
    %p49 = scmp.eq.s32.totalorder %s9, 0
    %p50 = por %p48, %p49
    %p51 = scmp.ne.s32.totalorder %s43, %s45
    %p52 = scmp.eq.s32.totalorder %s14, 1
    %p53 = por %p51, %p52
    %p54 = scmp.ne.s32.totalorder %s45, %s46
    %p55 = scmp.eq.s32.totalorder %s14, 0
    %p56 = por %p54, %p55
    %p57 = scmp.ne.s32.totalorder %s45, %s46
    %p58 = scmp.eq.s32.totalorder %s15, 1
    %p59 = por %p57, %p58
    %p61 = scmp.ne.s32.totalorder %s46, %s60
    %p62 = scmp.eq.s32.totalorder %s15, 0
    %p63 = por %p61, %p62
    %s65 = sadd.s32 %s64, 1
    %p68 = scmp.eq.s32.totalorder %s9, 1
    %p69 = scmp.ne.s32.totalorder %s64, %s66
    %p70 = scmp.eq.s32.totalorder %s9, 0
    %p71 = por %p69, %p70
    %p72 = scmp.ne.s32.totalorder %s64, %s66
    %p73 = scmp.eq.s32.totalorder %s14, 1
    %p74 = por %p72, %p73
    %p75 = scmp.ne.s32.totalorder %s66, %s67
    %p76 = scmp.eq.s32.totalorder %s14, 0
    %p77 = por %p75, %p76
    %p78 = scmp.ne.s32.totalorder %s66, %s67
    %p79 = scmp.eq.s32.totalorder %s15, 1
    %p80 = por %p78, %p79
    %p82 = scmp.ne.s32.totalorder %s67, %s81
    %p83 = scmp.eq.s32.totalorder %s15, 0
    %p84 = por %p82, %p83
    %s85 = ssub.s32 %s9, %s16
    %p86 = scmp.eq.s32.totalorder %s85, 0
    %s88 = sadd.s32 %s87, 1
    %s89 = scalar_select %p86, %s87, %s88
    %p92 = pneg %p86
    %p93 = scmp.eq.s32.totalorder %s9, 1
    %p94 = por %p92, %p93
    %p95 = scmp.ne.s32.totalorder %s87, %s90
    %p96 = scmp.eq.s32.totalorder %s9, 0
    %p97 = por %p95, %p96
    %p98 = scmp.ne.s32.totalorder %s87, %s90
    %p99 = scmp.eq.s32.totalorder %s14, 1
    %p100 = por %p98, %p99
    %p101 = scmp.ne.s32.totalorder %s90, %s91
    %p102 = scmp.eq.s32.totalorder %s14, 0
    %p103 = por %p101, %p102
    %p104 = scmp.ne.s32.totalorder %s90, %s91
    %p105 = scmp.eq.s32.totalorder %s15, 1
    %p106 = por %p104, %p105
    %p108 = scmp.ne.s32.totalorder %s91, %s107
    %p109 = scmp.eq.s32.totalorder %s15, 0
    %p110 = por %p108, %p109
    %p111 = scmp.le.s32.totalorder 1, %s9
    %p112 = scmp.lt.s32.totalorder %s9, 3
    %p113 = pnand %p111, %p112
    %p114 = pneg %p113
    // Predicated region
    $region9: #{foldnet_encoder.6} parent=5 // pred_check
      _
    $region10: #{foldnet_encoder.6} parent=5 // pred_check_branch
      %116 = sbr.rel (%p113) target = $region12
    $region11: #{foldnet_encoder.6} parent=5 // pred_region
      %s117 = ssub.s32 %s9, 1
      // Predicated region
      $region13: #{foldnet_encoder.6} parent=11 // pred_check
        %p118 = pneg %p56
      $region14: #{foldnet_encoder.6} parent=11 // pred_check_branch
        %120 = sbr.rel (%p118) target = $region16
      $region15: #{foldnet_encoder.6} parent=11 // pred_region
        _
      $region16: #{foldnet_encoder.6} parent=11 // pred_fallthru
        _
      // Predicated region
      $region17: #{foldnet_encoder.6} parent=11 // pred_check
        %p121 = pneg %p77
      $region18: #{foldnet_encoder.6} parent=11 // pred_check_branch
        %123 = sbr.rel (%p121) target = $region20
      $region19: #{foldnet_encoder.6} parent=11 // pred_region
        _
      $region20: #{foldnet_encoder.6} parent=11 // pred_fallthru
        _
    $region12: #{foldnet_encoder.6} parent=5 // pred_fallthru
      _
    %p124 = scmp.lt.s32.totalorder %s9, 2
    // Predicated region
    $region21: #{foldnet_encoder.6} parent=5 // pred_check
      %p125 = pneg %p124
    $region22: #{foldnet_encoder.6} parent=5 // pred_check_branch
      %127 = sbr.rel (%p125) target = $region24
    $region23: #{foldnet_encoder.6} parent=5 // pred_region
      // Predicated region
      $region25: #{foldnet_encoder.6} parent=23 // pred_check
        %p128 = pneg %p29
      $region26: #{foldnet_encoder.6} parent=23 // pred_check_branch
        %130 = sbr.rel (%p128) target = $region28
      $region27: #{foldnet_encoder.6} parent=23 // pred_region
        %p131 = scmp.lt.s32.totalorder %s9, 1
        %s132 = scalar_select %p131, %s9, 1
        %s133 = smul.addr %s132, 8
        %s134 = smul.addr %s133, 4
        %s135 = scalar_lea.vmem %s0, %s134
      $region28: #{foldnet_encoder.6} parent=23 // pred_fallthru
        _
    $region24: #{foldnet_encoder.6} parent=5 // pred_fallthru
      _
    %p136 = scmp.le.s32.totalorder 1, %s9
    %p137 = scmp.lt.s32.totalorder %s9, 3
    %p138 = pnand %p136, %p137
    %p139 = pneg %p138
    // Predicated region
    $region29: #{foldnet_encoder.6} parent=5 // pred_check
      _
    $region30: #{foldnet_encoder.6} parent=5 // pred_check_branch
      %141 = sbr.rel (%p138) target = $region32
    $region31: #{foldnet_encoder.6} parent=5 // pred_region
      %s142 = ssub.s32 %s9, 1
      %p143 = scmp.lt.s32.totalorder %s14, 1
      %s144 = scalar_select %p143, %s14, 1
      %s145 = smul.addr %s144, 8
      %s146 = smul.addr %s145, 4
      %s147 = scalar_lea.vmem %s0, %s146
      %p148 = pneg %p35
      %p149 = pneg %p32
      %p150 = pneg %p56
      %p151 = pneg %p53
      %p152 = pneg %p77
      %p153 = pneg %p74
      %p154 = pneg %p103
      %p155 = pneg %p100
      %p156 = scmp.lt.s32.totalorder %s14, 1
      %s157 = scalar_select %p156, %s14, 1
      %s158 = smul.addr %s157, 8
      %s159 = smul.addr %s158, 4
      %s160 = scalar_lea.vmem %s3, %s159
      %p161 = scmp.lt.s32.totalorder %s14, 1
      %s162 = scalar_select %p161, %s14, 1
      %s163 = smul.addr %s162, 8
      %s164 = smul.addr %s163, 4
      %s165 = scalar_lea.vmem %s0, %s164
      %p166 = scmp.lt.s32.totalorder %s14, 1
      %s167 = scalar_select %p166, %s14, 1
      %s168 = smul.addr %s167, 8
      %s169 = smul.addr %s168, 4
      %s170 = scalar_lea.vmem %s3, %s169
      %v172 = vld [vmem:[%s165] sm:$0xf]
      %v173 = vld [vmem:[%s165 + $0x4] sm:$0xf]
      %v174 = vld [vmem:[%s165 + $0x8] sm:$0xf]
      %v175 = vld [vmem:[%s165 + $0xc] sm:$0xf]
      %v176 = vld [vmem:[%s165 + $0x10] sm:$0xf]
      %v177 = vld [vmem:[%s165 + $0x14] sm:$0xf]
      %v178 = vld [vmem:[%s165 + $0x18] sm:$0xf]
      %v179 = vld [vmem:[%s165 + $0x1c] sm:$0xf]
      %v180 = vld [vmem:[%s1] sm:$0xf]
      %v181 = vld [vmem:[%s1 + $0x4] sm:$0xf]
      %v182 = vld [vmem:[%s1 + $0x8] sm:$0xf]
      %v183 = vld [vmem:[%s1 + $0xc] sm:$0xf]
      %v184 = vld [vmem:[%s1 + $0x10] sm:$0xf]
      %v185 = vld [vmem:[%s1 + $0x14] sm:$0xf]
      %v186 = vld [vmem:[%s1 + $0x18] sm:$0xf]
      %v187 = vld [vmem:[%s1 + $0x1c] sm:$0xf]
      %v188 = vld [vmem:[%s2] sm:$0x1]
      %v190 = vperm.slane %v188, 0
      %v200 = vunpack.c.l.b16 %v172
      %v201 = vunpack.c.l.b16 %v173
      %v202 = vunpack.c.l.b16 %v174
      %v203 = vunpack.c.l.b16 %v175
      %v204 = vunpack.c.l.b16 %v176
      %v205 = vunpack.c.l.b16 %v177
      %v206 = vunpack.c.l.b16 %v178
      %v207 = vunpack.c.l.b16 %v179
      %v208 = vpack.c.b16 %v201, %v200
      %v209 = vpack.c.b16 %v203, %v202
      %v210 = vpack.c.b16 %v205, %v204
      %v211 = vpack.c.b16 %v207, %v206
      %v220 = vunpack.c.l.b16 %v180
      %v221 = vunpack.c.l.b16 %v181
      %v222 = vunpack.c.l.b16 %v182
      %v223 = vunpack.c.l.b16 %v183
      %v224 = vunpack.c.l.b16 %v184
      %v225 = vunpack.c.l.b16 %v185
      %v226 = vunpack.c.l.b16 %v186
      %v227 = vunpack.c.l.b16 %v187
      %v228 = vpack.c.b16 %v221, %v220
      %v229 = vpack.c.b16 %v223, %v222
      %v230 = vpack.c.b16 %v225, %v224
      %v231 = vpack.c.b16 %v227, %v226
      %vm236 = vcmask 523264
      %v238 = vsel %vm236, %v208, 0
      %v241 = vsel %vm236, %v209, 0
      %v244 = vsel %vm236, %v210, 0
      %v247 = vsel %vm236, %v211, 0
      %249 = vmatpush.bf16.msra.mxu0 0
      %250 = vmatpush.bf16.msra.mxu0 0
      %251 = vmatpush.bf16.msra.mxu0 0
      %252 = vmatpush.bf16.msra.mxu0 0
      %253 = vmatpush.bf16.msra.mxu0 %v231
      %254 = vmatpush.bf16.msra.mxu0 %v230
      %255 = vmatpush.bf16.msra.mxu0 %v229
      %256 = vmatpush.bf16.msra.mxu0 %v228
      %257 = vmatmul.bf16.gmra.mxu0 %v238
      %v258 = vpop.f32.mrf.mxu0
      %v259 = vadd.f32 %v190, %v258
      %v260 = vpop.f32.mrf.mxu0
      %v261 = vadd.f32 %v190, %v260
      %262 = vmatmul.bf16.gmra.mxu0 %v241
      %v263 = vpop.f32.mrf.mxu0
      %v264 = vadd.f32 %v190, %v263
      %v265 = vpop.f32.mrf.mxu0
      %v266 = vadd.f32 %v190, %v265
      %267 = vmatmul.bf16.gmra.mxu0 %v244
      %v268 = vpop.f32.mrf.mxu0
      %v269 = vadd.f32 %v190, %v268
      %v270 = vpop.f32.mrf.mxu0
      %v271 = vadd.f32 %v190, %v270
      %272 = vmatmul.bf16.gmra.mxu0 %v247
      %v273 = vpop.f32.mrf.mxu0
      %v274 = vadd.f32 %v190, %v273
      %v275 = vpop.f32.mrf.mxu0
      %v276 = vadd.f32 %v190, %v275
      %277 = vdwg.mxu0
      %v278 = vmax.f32 %v259, 0.0
      %v279 = vmax.f32 %v261, 0.0
      %v280 = vmax.f32 %v264, 0.0
      %v281 = vmax.f32 %v266, 0.0
      %v282 = vmax.f32 %v269, 0.0
      %v283 = vmax.f32 %v271, 0.0
      %v284 = vmax.f32 %v274, 0.0
      %v285 = vmax.f32 %v276, 0.0
      %v286 = vpack.c.bf16 %v278, %v278
      %v287 = vpack.c.bf16 %v279, %v279
      %v288 = vpack.c.bf16 %v280, %v280
      %v289 = vpack.c.bf16 %v281, %v281
      %v290 = vpack.c.bf16 %v282, %v282
      %v291 = vpack.c.bf16 %v283, %v283
      %v292 = vpack.c.bf16 %v284, %v284
      %v293 = vpack.c.bf16 %v285, %v285
      %294 = vst [vmem:[%s170] sm:$0xf] %v286
      %295 = vst [vmem:[%s170 + $0x4] sm:$0xf] %v287
      %296 = vst [vmem:[%s170 + $0x8] sm:$0xf] %v288
      %297 = vst [vmem:[%s170 + $0xc] sm:$0xf] %v289
      %298 = vst [vmem:[%s170 + $0x10] sm:$0xf] %v290
      %299 = vst [vmem:[%s170 + $0x14] sm:$0xf] %v291
      %300 = vst [vmem:[%s170 + $0x18] sm:$0xf] %v292
      %301 = vst [vmem:[%s170 + $0x1c] sm:$0xf] %v293
      %p302 = scmp.lt.s32.totalorder %s14, 1
      %s303 = scalar_select %p302, %s14, 1
      %s304 = smul.addr %s303, 8
      %s305 = smul.addr %s304, 4
      %s306 = scalar_lea.vmem %s3, %s305
      // Predicated region
      $region33: #{foldnet_encoder.6} parent=31 // pred_check
        %p307 = pneg %p100
      $region34: #{foldnet_encoder.6} parent=31 // pred_check_branch
        %309 = sbr.rel (%p307) target = $region36
      $region35: #{foldnet_encoder.6} parent=31 // pred_region
        _
      $region36: #{foldnet_encoder.6} parent=31 // pred_fallthru
        _
    $region32: #{foldnet_encoder.6} parent=5 // pred_fallthru
      _
    %p310 = scmp.le.s32.totalorder 2, %s9
    // Predicated region
    $region37: #{foldnet_encoder.6} parent=5 // pred_check
      %p311 = pneg %p310
    $region38: #{foldnet_encoder.6} parent=5 // pred_check_branch
      %313 = sbr.rel (%p311) target = $region40
    $region39: #{foldnet_encoder.6} parent=5 // pred_region
      %s314 = ssub.s32 %s9, 2
      // Predicated region
      $region41: #{foldnet_encoder.6} parent=39 // pred_check
        %p315 = pneg %p106
      $region42: #{foldnet_encoder.6} parent=39 // pred_check_branch
        %317 = sbr.rel (%p315) target = $region44
      $region43: #{foldnet_encoder.6} parent=39 // pred_region
        %p318 = scmp.lt.s32.totalorder %s15, 1
        %s319 = scalar_select %p318, %s15, 1
        %s320 = smul.addr %s319, 8
        %s321 = smul.addr %s320, 4
        %s322 = scalar_lea.vmem %s3, %s321
      $region44: #{foldnet_encoder.6} parent=39 // pred_fallthru
        _
    $region40: #{foldnet_encoder.6} parent=5 // pred_fallthru
      _
  $region6: #{foldnet_encoder.6} parent=0 // loop_footer
    %s13 = sadd.s32 1, %s9
  $region7: #{foldnet_encoder.6} parent=0 // loop_footer_branch
    %8 = sbr.rel target = $region3
  $region8: #{foldnet_encoder.6} parent=0 // loop_exit
    _

// kernel: foldnet_encoder.7
$region0: #{foldnet_encoder.7}
  #allocation0 [shape = 'u32[]', space=smem, size = 0x4, offset = 0x4, fixed_abs, tag = 'smem constant byte address 0x4 - core index']
  #allocation1 [shape = 'u32[72,128]{1,0:T(1,128)}', space=vmem, size = 0x9000, scoped, tag = 'internal scratch']
  %s0 = inlined_call_operand.vmem [shape: bf16[2,64,128], index: 0, kind: input, shape index: {}]
  %s1 = inlined_call_operand.vmem [shape: bf16[128,1024], index: 1, kind: input, shape index: {}]
  %s2 = inlined_call_operand.vmem [shape: f32[1,1024], index: 2, kind: input, shape index: {}]
  %s3 = inlined_call_operand.vmem [shape: f32[1024,32], index: 3, kind: input, shape index: {}]
  %s4 = inlined_call_operand.vmem [shape: f32[1,32], index: 4, kind: input, shape index: {}]
  %s5 = inlined_call_operand.vmem [shape: f32[32,32], index: 5, kind: input, shape index: {}]
  %s6 = inlined_call_operand.vmem [shape: f32[1,32], index: 6, kind: input, shape index: {}]
  %s7 = inlined_call_operand.hbm [shape: f32[2,1,32], index: 7, kind: output, shape index: {}]
  %s8 = sld [smem:[#allocation0]]
  $region61: #{foldnet_encoder.7} parent=0
    _
  %s10 = ssub.s32 1, %s8
  %s11 = scalar_select 0, %s10, %s8
  $region1: #{foldnet_encoder.7} parent=0
    #allocation2 [shape = 'u8[1024]{0}', space=vmem, size = 0x400, scoped, tag = 'output window, operand 0']
    #allocation3 [shape = 's32[2]{0}', space=sflag, size = 0x8, scoped, tag = 'scoped memory for foldnet_encoder.7']
    %12 = vsyncpa [#allocation3], 0
    %s13 = scalar_lea.sflag [#allocation3], 1
    %14 = vsyncpa %s13, 0
    loop: start=0, step=1, limit=4
    $region2: #{foldnet_encoder.7} parent=1 // loop_pre_header
      _
    $region3: #{foldnet_encoder.7} parent=1 // loop_header
      %s16 = sphi 0, %s20
      %p17 = scmp.ge.s32.totalorder %s16, 4
      %s26 = sphi 0, %s28
      %s29 = sphi 0, %s26
      %s30 = sphi 0, %s29
      %s46 = sphi 0, %s30
      %s50 = sphi 0, %s50
      %s52 = sphi 0, %s50
      %s53 = sphi 0, %s52
      %s67 = sphi 0, %s53
      %s71 = sphi 0, %s71
      %s73 = sphi 0, %s71
      %s74 = sphi 0, %s73
      %s88 = sphi 0, %s74
      %s92 = sphi 0, %s92
      %s94 = sphi 0, %s92
      %s95 = sphi 0, %s94
      %s109 = sphi 0, %s95
      %s113 = sphi 0, %s113
      %s115 = sphi 0, %s113
      %s116 = sphi 0, %s115
      %s130 = sphi 0, %s116
      %s134 = sphi 0, %s134
      %s136 = sphi 0, %s134
      %s137 = sphi 0, %s136
      %s151 = sphi 0, %s137
      %s155 = sphi 0, %s155
      %s157 = sphi 0, %s155
      %s158 = sphi 0, %s157
      %s172 = sphi 0, %s158
      %s178 = sphi 0, %s180
      %s181 = sphi 0, %s178
      %s182 = sphi 0, %s181
      %s198 = sphi 0, %s182
    $region4: #{foldnet_encoder.7} parent=1 // loop_header_branch
      %19 = sbr.rel (%p17) target = $region8
    $region5: #{foldnet_encoder.7} parent=1 // loop_body
      %s21 = ssub.s32 %s16, 1
      %s22 = ssub.s32 %s16, 2
      %s23 = sadd.s32 %s16, 1
      %s24 = ssub.s32 %s16, %s23
      %p25 = scmp.eq.s32.totalorder %s24, 0
      %s27 = sadd.s32 %s26, 1
      %s28 = scalar_select %p25, %s26, %s27
      %p31 = pneg %p25
      %p32 = scmp.eq.s32.totalorder %s16, 1
      %p33 = por %p31, %p32
      %p34 = scmp.ne.s32.totalorder %s26, %s29
      %p35 = scmp.eq.s32.totalorder %s16, 0
      %p36 = por %p34, %p35
      %p37 = scmp.ne.s32.totalorder %s26, %s29
      %p38 = scmp.eq.s32.totalorder %s21, 1
      %p39 = por %p37, %p38
      %p40 = scmp.ne.s32.totalorder %s29, %s30
      %p41 = scmp.eq.s32.totalorder %s21, 0
      %p42 = por %p40, %p41
      %p43 = scmp.ne.s32.totalorder %s29, %s30
      %p44 = scmp.eq.s32.totalorder %s22, 1
      %p45 = por %p43, %p44
      %p47 = scmp.ne.s32.totalorder %s30, %s46
      %p48 = scmp.eq.s32.totalorder %s22, 0
      %p49 = por %p47, %p48
      %s51 = sadd.s32 %s50, 1
      %p54 = scmp.eq.s32.totalorder %s16, 1
      %p55 = scmp.ne.s32.totalorder %s50, %s52
      %p56 = scmp.eq.s32.totalorder %s16, 0
      %p57 = por %p55, %p56
      %p58 = scmp.ne.s32.totalorder %s50, %s52
      %p59 = scmp.eq.s32.totalorder %s21, 1
      %p60 = por %p58, %p59
      %p61 = scmp.ne.s32.totalorder %s52, %s53
      %p62 = scmp.eq.s32.totalorder %s21, 0
      %p63 = por %p61, %p62
      %p64 = scmp.ne.s32.totalorder %s52, %s53
      %p65 = scmp.eq.s32.totalorder %s22, 1
      %p66 = por %p64, %p65
      %p68 = scmp.ne.s32.totalorder %s53, %s67
      %p69 = scmp.eq.s32.totalorder %s22, 0
      %p70 = por %p68, %p69
      %s72 = sadd.s32 %s71, 1
      %p75 = scmp.eq.s32.totalorder %s16, 1
      %p76 = scmp.ne.s32.totalorder %s71, %s73
      %p77 = scmp.eq.s32.totalorder %s16, 0
      %p78 = por %p76, %p77
      %p79 = scmp.ne.s32.totalorder %s71, %s73
      %p80 = scmp.eq.s32.totalorder %s21, 1
      %p81 = por %p79, %p80
      %p82 = scmp.ne.s32.totalorder %s73, %s74
      %p83 = scmp.eq.s32.totalorder %s21, 0
      %p84 = por %p82, %p83
      %p85 = scmp.ne.s32.totalorder %s73, %s74
      %p86 = scmp.eq.s32.totalorder %s22, 1
      %p87 = por %p85, %p86
      %p89 = scmp.ne.s32.totalorder %s74, %s88
      %p90 = scmp.eq.s32.totalorder %s22, 0
      %p91 = por %p89, %p90
      %s93 = sadd.s32 %s92, 1
      %p96 = scmp.eq.s32.totalorder %s16, 1
      %p97 = scmp.ne.s32.totalorder %s92, %s94
      %p98 = scmp.eq.s32.totalorder %s16, 0
      %p99 = por %p97, %p98
      %p100 = scmp.ne.s32.totalorder %s92, %s94
      %p101 = scmp.eq.s32.totalorder %s21, 1
      %p102 = por %p100, %p101
      %p103 = scmp.ne.s32.totalorder %s94, %s95
      %p104 = scmp.eq.s32.totalorder %s21, 0
      %p105 = por %p103, %p104
      %p106 = scmp.ne.s32.totalorder %s94, %s95
      %p107 = scmp.eq.s32.totalorder %s22, 1
      %p108 = por %p106, %p107
      %p110 = scmp.ne.s32.totalorder %s95, %s109
      %p111 = scmp.eq.s32.totalorder %s22, 0
      %p112 = por %p110, %p111
      %s114 = sadd.s32 %s113, 1
      %p117 = scmp.eq.s32.totalorder %s16, 1
      %p118 = scmp.ne.s32.totalorder %s113, %s115
      %p119 = scmp.eq.s32.totalorder %s16, 0
      %p120 = por %p118, %p119
      %p121 = scmp.ne.s32.totalorder %s113, %s115
      %p122 = scmp.eq.s32.totalorder %s21, 1
      %p123 = por %p121, %p122
      %p124 = scmp.ne.s32.totalorder %s115, %s116
      %p125 = scmp.eq.s32.totalorder %s21, 0
      %p126 = por %p124, %p125
      %p127 = scmp.ne.s32.totalorder %s115, %s116
      %p128 = scmp.eq.s32.totalorder %s22, 1
      %p129 = por %p127, %p128
      %p131 = scmp.ne.s32.totalorder %s116, %s130
      %p132 = scmp.eq.s32.totalorder %s22, 0
      %p133 = por %p131, %p132
      %s135 = sadd.s32 %s134, 1
      %p138 = scmp.eq.s32.totalorder %s16, 1
      %p139 = scmp.ne.s32.totalorder %s134, %s136
      %p140 = scmp.eq.s32.totalorder %s16, 0
      %p141 = por %p139, %p140
      %p142 = scmp.ne.s32.totalorder %s134, %s136
      %p143 = scmp.eq.s32.totalorder %s21, 1
      %p144 = por %p142, %p143
      %p145 = scmp.ne.s32.totalorder %s136, %s137
      %p146 = scmp.eq.s32.totalorder %s21, 0
      %p147 = por %p145, %p146
      %p148 = scmp.ne.s32.totalorder %s136, %s137
      %p149 = scmp.eq.s32.totalorder %s22, 1
      %p150 = por %p148, %p149
      %p152 = scmp.ne.s32.totalorder %s137, %s151
      %p153 = scmp.eq.s32.totalorder %s22, 0
      %p154 = por %p152, %p153
      %s156 = sadd.s32 %s155, 1
      %p159 = scmp.eq.s32.totalorder %s16, 1
      %p160 = scmp.ne.s32.totalorder %s155, %s157
      %p161 = scmp.eq.s32.totalorder %s16, 0
      %p162 = por %p160, %p161
      %p163 = scmp.ne.s32.totalorder %s155, %s157
      %p164 = scmp.eq.s32.totalorder %s21, 1
      %p165 = por %p163, %p164
      %p166 = scmp.ne.s32.totalorder %s157, %s158
      %p167 = scmp.eq.s32.totalorder %s21, 0
      %p168 = por %p166, %p167
      %p169 = scmp.ne.s32.totalorder %s157, %s158
      %p170 = scmp.eq.s32.totalorder %s22, 1
      %p171 = por %p169, %p170
      %p173 = scmp.ne.s32.totalorder %s158, %s172
      %p174 = scmp.eq.s32.totalorder %s22, 0
      %p175 = por %p173, %p174
      %s176 = ssub.s32 %s16, %s23
      %p177 = scmp.eq.s32.totalorder %s176, 0
      %s179 = sadd.s32 %s178, 1
      %s180 = scalar_select %p177, %s178, %s179
      %p183 = pneg %p177
      %p184 = scmp.eq.s32.totalorder %s16, 1
      %p185 = por %p183, %p184
      %p186 = scmp.ne.s32.totalorder %s178, %s181
      %p187 = scmp.eq.s32.totalorder %s16, 0
      %p188 = por %p186, %p187
      %p189 = scmp.ne.s32.totalorder %s178, %s181
      %p190 = scmp.eq.s32.totalorder %s21, 1
      %p191 = por %p189, %p190
      %p192 = scmp.ne.s32.totalorder %s181, %s182
      %p193 = scmp.eq.s32.totalorder %s21, 0
      %p194 = por %p192, %p193
      %p195 = scmp.ne.s32.totalorder %s181, %s182
      %p196 = scmp.eq.s32.totalorder %s22, 1
      %p197 = por %p195, %p196
      %p199 = scmp.ne.s32.totalorder %s182, %s198
      %p200 = scmp.eq.s32.totalorder %s22, 0
      %p201 = por %p199, %p200
      %p202 = scmp.le.s32.totalorder 1, %s16
      %p203 = scmp.lt.s32.totalorder %s16, 3
      %p204 = pnand %p202, %p203
      %p205 = pneg %p204
      // Predicated region
      $region9: #{foldnet_encoder.7} parent=5 // pred_check
        _
      $region10: #{foldnet_encoder.7} parent=5 // pred_check_branch
        %207 = sbr.rel (%p204) target = $region12
      $region11: #{foldnet_encoder.7} parent=5 // pred_region
        %s208 = ssub.s32 %s16, 1
        // Predicated region
        $region13: #{foldnet_encoder.7} parent=11 // pred_check
          %p209 = pneg %p63
        $region14: #{foldnet_encoder.7} parent=11 // pred_check_branch
          %211 = sbr.rel (%p209) target = $region16
        $region15: #{foldnet_encoder.7} parent=11 // pred_region
          _
        $region16: #{foldnet_encoder.7} parent=11 // pred_fallthru
          _
        // Predicated region
        $region17: #{foldnet_encoder.7} parent=11 // pred_check
          %p212 = pneg %p84
        $region18: #{foldnet_encoder.7} parent=11 // pred_check_branch
          %214 = sbr.rel (%p212) target = $region20
        $region19: #{foldnet_encoder.7} parent=11 // pred_region
          _
        $region20: #{foldnet_encoder.7} parent=11 // pred_fallthru
          _
        // Predicated region
        $region21: #{foldnet_encoder.7} parent=11 // pred_check
          %p215 = pneg %p105
        $region22: #{foldnet_encoder.7} parent=11 // pred_check_branch
          %217 = sbr.rel (%p215) target = $region24
        $region23: #{foldnet_encoder.7} parent=11 // pred_region
          _
        $region24: #{foldnet_encoder.7} parent=11 // pred_fallthru
          _
        // Predicated region
        $region25: #{foldnet_encoder.7} parent=11 // pred_check
          %p218 = pneg %p126
        $region26: #{foldnet_encoder.7} parent=11 // pred_check_branch
          %220 = sbr.rel (%p218) target = $region28
        $region27: #{foldnet_encoder.7} parent=11 // pred_region
          _
        $region28: #{foldnet_encoder.7} parent=11 // pred_fallthru
          _
        // Predicated region
        $region29: #{foldnet_encoder.7} parent=11 // pred_check
          %p221 = pneg %p147
        $region30: #{foldnet_encoder.7} parent=11 // pred_check_branch
          %223 = sbr.rel (%p221) target = $region32
        $region31: #{foldnet_encoder.7} parent=11 // pred_region
          _
        $region32: #{foldnet_encoder.7} parent=11 // pred_fallthru
          _
        // Predicated region
        $region33: #{foldnet_encoder.7} parent=11 // pred_check
          %p224 = pneg %p168
        $region34: #{foldnet_encoder.7} parent=11 // pred_check_branch
          %226 = sbr.rel (%p224) target = $region36
        $region35: #{foldnet_encoder.7} parent=11 // pred_region
          _
        $region36: #{foldnet_encoder.7} parent=11 // pred_fallthru
          _
      $region12: #{foldnet_encoder.7} parent=5 // pred_fallthru
        _
      %p227 = scmp.lt.s32.totalorder %s16, 2
      // Predicated region
      $region37: #{foldnet_encoder.7} parent=5 // pred_check
        %p228 = pneg %p227
      $region38: #{foldnet_encoder.7} parent=5 // pred_check_branch
        %230 = sbr.rel (%p228) target = $region40
      $region39: #{foldnet_encoder.7} parent=5 // pred_region
        // Predicated region
        $region41: #{foldnet_encoder.7} parent=39 // pred_check
          %p231 = pneg %p36
        $region42: #{foldnet_encoder.7} parent=39 // pred_check_branch
          %233 = sbr.rel (%p231) target = $region44
        $region43: #{foldnet_encoder.7} parent=39 // pred_region
          %p234 = scmp.lt.s32.totalorder %s16, 1
          %s235 = scalar_select %p234, %s16, 1
          %s236 = smul.addr %s235, 8
          %s237 = smul.addr %s236, 4
          %s238 = scalar_lea.vmem %s0, %s237
        $region44: #{foldnet_encoder.7} parent=39 // pred_fallthru
          _
      $region40: #{foldnet_encoder.7} parent=5 // pred_fallthru
        _
      %p239 = scmp.le.s32.totalorder 1, %s16
      %p240 = scmp.lt.s32.totalorder %s16, 3
      %p241 = pnand %p239, %p240
      %p242 = pneg %p241
      // Predicated region
      $region45: #{foldnet_encoder.7} parent=5 // pred_check
        _
      $region46: #{foldnet_encoder.7} parent=5 // pred_check_branch
        %244 = sbr.rel (%p241) target = $region48
      $region47: #{foldnet_encoder.7} parent=5 // pred_region
        %s245 = ssub.s32 %s16, 1
        %p246 = scmp.lt.s32.totalorder %s21, 1
        %s247 = scalar_select %p246, %s21, 1
        %s248 = smul.addr %s247, 8
        %s249 = smul.addr %s248, 4
        %s250 = scalar_lea.vmem %s0, %s249
        %p251 = pneg %p42
        %p252 = pneg %p39
        %p253 = pneg %p63
        %p254 = pneg %p60
        %p255 = pneg %p84
        %p256 = pneg %p81
        %p257 = pneg %p105
        %p258 = pneg %p102
        %p259 = pneg %p126
        %p260 = pneg %p123
        %p261 = pneg %p147
        %p262 = pneg %p144
        %p263 = pneg %p168
        %p264 = pneg %p165
        %p265 = pneg %p194
        %p266 = pneg %p191
        %s267 = sand.u32 %s181, 1
        %s268 = scalar_lea.sflag [#allocation3], %s267
        %s269 = sand.u32 %s181, 1
        %s270 = scalar_lea.vmem [#allocation2], %s269
        %p271 = scmp.lt.s32.totalorder %s21, 1
        %s272 = scalar_select %p271, %s21, 1
        %s273 = smul.addr %s272, 8
        %s274 = smul.addr %s273, 4
        %s275 = scalar_lea.vmem %s0, %s274
        %v276 = vld [vmem:[%s275] sm:$0xf]
        %v277 = vld [vmem:[%s275 + $0x4] sm:$0xf]
        %v278 = vld [vmem:[%s275 + $0x8] sm:$0xf]
        %v279 = vld [vmem:[%s275 + $0xc] sm:$0xf]
        %v280 = vld [vmem:[%s275 + $0x10] sm:$0xf]
        %v281 = vld [vmem:[%s275 + $0x14] sm:$0xf]
        %v282 = vld [vmem:[%s275 + $0x18] sm:$0xf]
        %v283 = vld [vmem:[%s275 + $0x1c] sm:$0xf]
        %v284 = vld [vmem:[%s1] sm:$0xff]
        %v285 = vld [vmem:[%s1 + $0x8] sm:$0xff]
        %v286 = vld [vmem:[%s1 + $0x10] sm:$0xff]
        %v287 = vld [vmem:[%s1 + $0x18] sm:$0xff]
        %v288 = vld [vmem:[%s1 + $0x20] sm:$0xff]
        %v289 = vld [vmem:[%s1 + $0x28] sm:$0xff]
        %v290 = vld [vmem:[%s1 + $0x30] sm:$0xff]
        %v291 = vld [vmem:[%s1 + $0x38] sm:$0xff]
        %v292 = vld [vmem:[%s1 + $0x40] sm:$0xff]
        %v293 = vld [vmem:[%s1 + $0x48] sm:$0xff]
        %v294 = vld [vmem:[%s1 + $0x50] sm:$0xff]
        %v295 = vld [vmem:[%s1 + $0x58] sm:$0xff]
        %v296 = vld [vmem:[%s1 + $0x60] sm:$0xff]
        %v297 = vld [vmem:[%s1 + $0x68] sm:$0xff]
        %v298 = vld [vmem:[%s1 + $0x70] sm:$0xff]
        %v299 = vld [vmem:[%s1 + $0x78] sm:$0xff]
        %v300 = vld [vmem:[%s1 + $0x80] sm:$0xff]
        %v301 = vld [vmem:[%s1 + $0x88] sm:$0xff]
        %v302 = vld [vmem:[%s1 + $0x90] sm:$0xff]
        %v303 = vld [vmem:[%s1 + $0x98] sm:$0xff]
        %v304 = vld [vmem:[%s1 + $0xa0] sm:$0xff]
        %v305 = vld [vmem:[%s1 + $0xa8] sm:$0xff]
        %v306 = vld [vmem:[%s1 + $0xb0] sm:$0xff]
        %v307 = vld [vmem:[%s1 + $0xb8] sm:$0xff]
        %v308 = vld [vmem:[%s1 + $0xc0] sm:$0xff]
        %v309 = vld [vmem:[%s1 + $0xc8] sm:$0xff]
        %v310 = vld [vmem:[%s1 + $0xd0] sm:$0xff]
        %v311 = vld [vmem:[%s1 + $0xd8] sm:$0xff]
        %v312 = vld [vmem:[%s1 + $0xe0] sm:$0xff]
        %v313 = vld [vmem:[%s1 + $0xe8] sm:$0xff]
        %v314 = vld [vmem:[%s1 + $0xf0] sm:$0xff]
        %v315 = vld [vmem:[%s1 + $0xf8] sm:$0xff]
        %v316 = vld [vmem:[%s1 + $0x100] sm:$0xff]
        %v317 = vld [vmem:[%s1 + $0x108] sm:$0xff]
        %v318 = vld [vmem:[%s1 + $0x110] sm:$0xff]
        %v319 = vld [vmem:[%s1 + $0x118] sm:$0xff]
        %v320 = vld [vmem:[%s1 + $0x120] sm:$0xff]
        %v321 = vld [vmem:[%s1 + $0x128] sm:$0xff]
        %v322 = vld [vmem:[%s1 + $0x130] sm:$0xff]
        %v323 = vld [vmem:[%s1 + $0x138] sm:$0xff]
        %v324 = vld [vmem:[%s1 + $0x140] sm:$0xff]
        %v325 = vld [vmem:[%s1 + $0x148] sm:$0xff]
        %v326 = vld [vmem:[%s1 + $0x150] sm:$0xff]
        %v327 = vld [vmem:[%s1 + $0x158] sm:$0xff]
        %v328 = vld [vmem:[%s1 + $0x160] sm:$0xff]
        %v329 = vld [vmem:[%s1 + $0x168] sm:$0xff]
        %v330 = vld [vmem:[%s1 + $0x170] sm:$0xff]
        %v331 = vld [vmem:[%s1 + $0x178] sm:$0xff]
        %v332 = vld [vmem:[%s1 + $0x180] sm:$0xff]
        %v333 = vld [vmem:[%s1 + $0x188] sm:$0xff]
        %v334 = vld [vmem:[%s1 + $0x190] sm:$0xff]
        %v335 = vld [vmem:[%s1 + $0x198] sm:$0xff]
        %v336 = vld [vmem:[%s1 + $0x1a0] sm:$0xff]
        %v337 = vld [vmem:[%s1 + $0x1a8] sm:$0xff]
        %v338 = vld [vmem:[%s1 + $0x1b0] sm:$0xff]
        %v339 = vld [vmem:[%s1 + $0x1b8] sm:$0xff]
        %v340 = vld [vmem:[%s1 + $0x1c0] sm:$0xff]
        %v341 = vld [vmem:[%s1 + $0x1c8] sm:$0xff]
        %v342 = vld [vmem:[%s1 + $0x1d0] sm:$0xff]
        %v343 = vld [vmem:[%s1 + $0x1d8] sm:$0xff]
        %v344 = vld [vmem:[%s1 + $0x1e0] sm:$0xff]
        %v345 = vld [vmem:[%s1 + $0x1e8] sm:$0xff]
        %v346 = vld [vmem:[%s1 + $0x1f0] sm:$0xff]
        %v347 = vld [vmem:[%s1 + $0x1f8] sm:$0xff]
        %v348 = vld [vmem:[%s2] sm:$0xff]
        %v350 = vperm.slane %v348, 0
        %v351 = vperm.slane %v348, 1
        %v352 = vperm.slane %v348, 2
        %v353 = vperm.slane %v348, 3
        %v354 = vperm.slane %v348, 4
        %v355 = vperm.slane %v348, 5
        %v356 = vperm.slane %v348, 6
        %v357 = vperm.slane %v348, 7
        %v374 = vunpack.c.l.b16 %v276
        %v375 = vunpack.c.l.b16 %v277
        %v376 = vunpack.c.l.b16 %v278
        %v377 = vunpack.c.l.b16 %v279
        %v378 = vunpack.c.l.b16 %v280
        %v379 = vunpack.c.l.b16 %v281
        %v380 = vunpack.c.l.b16 %v282
        %v381 = vunpack.c.l.b16 %v283
        %v382 = vpack.c.b16 %v375, %v374
        %v383 = vpack.c.b16 %v377, %v376
        %v384 = vpack.c.b16 %v379, %v378
        %v385 = vpack.c.b16 %v381, %v380
        %v454 = vunpack.c.l.b16 %v284
        %v455 = vunpack.c.h.b16 %v284
        %v456 = vunpack.c.l.b16 %v285
        %v457 = vunpack.c.h.b16 %v285
        %v458 = vunpack.c.l.b16 %v286
        %v459 = vunpack.c.h.b16 %v286
        %v460 = vunpack.c.l.b16 %v287
        %v461 = vunpack.c.h.b16 %v287
        %v462 = vunpack.c.l.b16 %v288
        %v463 = vunpack.c.h.b16 %v288
        %v464 = vunpack.c.l.b16 %v289
        %v465 = vunpack.c.h.b16 %v289
        %v466 = vunpack.c.l.b16 %v290
        %v467 = vunpack.c.h.b16 %v290
        %v468 = vunpack.c.l.b16 %v291
        %v469 = vunpack.c.h.b16 %v291
        %v470 = vunpack.c.l.b16 %v292
        %v471 = vunpack.c.h.b16 %v292
        %v472 = vunpack.c.l.b16 %v293
        %v473 = vunpack.c.h.b16 %v293
        %v474 = vunpack.c.l.b16 %v294
        %v475 = vunpack.c.h.b16 %v294
        %v476 = vunpack.c.l.b16 %v295
        %v477 = vunpack.c.h.b16 %v295
        %v478 = vunpack.c.l.b16 %v296
        %v479 = vunpack.c.h.b16 %v296
        %v480 = vunpack.c.l.b16 %v297
        %v481 = vunpack.c.h.b16 %v297
        %v482 = vunpack.c.l.b16 %v298
        %v483 = vunpack.c.h.b16 %v298
        %v484 = vunpack.c.l.b16 %v299
        %v485 = vunpack.c.h.b16 %v299
        %v486 = vunpack.c.l.b16 %v300
        %v487 = vunpack.c.h.b16 %v300
        %v488 = vunpack.c.l.b16 %v301
        %v489 = vunpack.c.h.b16 %v301
        %v490 = vunpack.c.l.b16 %v302
        %v491 = vunpack.c.h.b16 %v302
        %v492 = vunpack.c.l.b16 %v303
        %v493 = vunpack.c.h.b16 %v303
        %v494 = vunpack.c.l.b16 %v304
        %v495 = vunpack.c.h.b16 %v304
        %v496 = vunpack.c.l.b16 %v305
        %v497 = vunpack.c.h.b16 %v305
        %v498 = vunpack.c.l.b16 %v306
        %v499 = vunpack.c.h.b16 %v306
        %v500 = vunpack.c.l.b16 %v307
        %v501 = vunpack.c.h.b16 %v307
        %v502 = vunpack.c.l.b16 %v308
        %v503 = vunpack.c.h.b16 %v308
        %v504 = vunpack.c.l.b16 %v309
        %v505 = vunpack.c.h.b16 %v309
        %v506 = vunpack.c.l.b16 %v310
        %v507 = vunpack.c.h.b16 %v310
        %v508 = vunpack.c.l.b16 %v311
        %v509 = vunpack.c.h.b16 %v311
        %v510 = vunpack.c.l.b16 %v312
        %v511 = vunpack.c.h.b16 %v312
        %v512 = vunpack.c.l.b16 %v313
        %v513 = vunpack.c.h.b16 %v313
        %v514 = vunpack.c.l.b16 %v314
        %v515 = vunpack.c.h.b16 %v314
        %v516 = vunpack.c.l.b16 %v315
        %v517 = vunpack.c.h.b16 %v315
        %v518 = vunpack.c.l.b16 %v316
        %v519 = vunpack.c.h.b16 %v316
        %v520 = vunpack.c.l.b16 %v317
        %v521 = vunpack.c.h.b16 %v317
        %v522 = vunpack.c.l.b16 %v318
        %v523 = vunpack.c.h.b16 %v318
        %v524 = vunpack.c.l.b16 %v319
        %v525 = vunpack.c.h.b16 %v319
        %v526 = vunpack.c.l.b16 %v320
        %v527 = vunpack.c.h.b16 %v320
        %v528 = vunpack.c.l.b16 %v321
        %v529 = vunpack.c.h.b16 %v321
        %v530 = vunpack.c.l.b16 %v322
        %v531 = vunpack.c.h.b16 %v322
        %v532 = vunpack.c.l.b16 %v323
        %v533 = vunpack.c.h.b16 %v323
        %v534 = vunpack.c.l.b16 %v324
        %v535 = vunpack.c.h.b16 %v324
        %v536 = vunpack.c.l.b16 %v325
        %v537 = vunpack.c.h.b16 %v325
        %v538 = vunpack.c.l.b16 %v326
        %v539 = vunpack.c.h.b16 %v326
        %v540 = vunpack.c.l.b16 %v327
        %v541 = vunpack.c.h.b16 %v327
        %v542 = vunpack.c.l.b16 %v328
        %v543 = vunpack.c.h.b16 %v328
        %v544 = vunpack.c.l.b16 %v329
        %v545 = vunpack.c.h.b16 %v329
        %v546 = vunpack.c.l.b16 %v330
        %v547 = vunpack.c.h.b16 %v330
        %v548 = vunpack.c.l.b16 %v331
        %v549 = vunpack.c.h.b16 %v331
        %v550 = vunpack.c.l.b16 %v332
        %v551 = vunpack.c.h.b16 %v332
        %v552 = vunpack.c.l.b16 %v333
        %v553 = vunpack.c.h.b16 %v333
        %v554 = vunpack.c.l.b16 %v334
        %v555 = vunpack.c.h.b16 %v334
        %v556 = vunpack.c.l.b16 %v335
        %v557 = vunpack.c.h.b16 %v335
        %v558 = vunpack.c.l.b16 %v336
        %v559 = vunpack.c.h.b16 %v336
        %v560 = vunpack.c.l.b16 %v337
        %v561 = vunpack.c.h.b16 %v337
        %v562 = vunpack.c.l.b16 %v338
        %v563 = vunpack.c.h.b16 %v338
        %v564 = vunpack.c.l.b16 %v339
        %v565 = vunpack.c.h.b16 %v339
        %v566 = vunpack.c.l.b16 %v340
        %v567 = vunpack.c.h.b16 %v340
        %v568 = vunpack.c.l.b16 %v341
        %v569 = vunpack.c.h.b16 %v341
        %v570 = vunpack.c.l.b16 %v342
        %v571 = vunpack.c.h.b16 %v342
        %v572 = vunpack.c.l.b16 %v343
        %v573 = vunpack.c.h.b16 %v343
        %v574 = vunpack.c.l.b16 %v344
        %v575 = vunpack.c.h.b16 %v344
        %v576 = vunpack.c.l.b16 %v345
        %v577 = vunpack.c.h.b16 %v345
        %v578 = vunpack.c.l.b16 %v346
        %v579 = vunpack.c.h.b16 %v346
        %v580 = vunpack.c.l.b16 %v347
        %v581 = vunpack.c.h.b16 %v347
        %v582 = vpack.c.b16 %v462, %v454
        %v583 = vpack.c.b16 %v463, %v455
        %v584 = vpack.c.b16 %v464, %v456
        %v585 = vpack.c.b16 %v465, %v457
        %v586 = vpack.c.b16 %v466, %v458
        %v587 = vpack.c.b16 %v467, %v459
        %v588 = vpack.c.b16 %v468, %v460
        %v589 = vpack.c.b16 %v469, %v461
        %v590 = vpack.c.b16 %v478, %v470
        %v591 = vpack.c.b16 %v479, %v471
        %v592 = vpack.c.b16 %v480, %v472
        %v593 = vpack.c.b16 %v481, %v473
        %v594 = vpack.c.b16 %v482, %v474
        %v595 = vpack.c.b16 %v483, %v475
        %v596 = vpack.c.b16 %v484, %v476
        %v597 = vpack.c.b16 %v485, %v477
        %v598 = vpack.c.b16 %v494, %v486
        %v599 = vpack.c.b16 %v495, %v487
        %v600 = vpack.c.b16 %v496, %v488
        %v601 = vpack.c.b16 %v497, %v489
        %v602 = vpack.c.b16 %v498, %v490
        %v603 = vpack.c.b16 %v499, %v491
        %v604 = vpack.c.b16 %v500, %v492
        %v605 = vpack.c.b16 %v501, %v493
        %v606 = vpack.c.b16 %v510, %v502
        %v607 = vpack.c.b16 %v511, %v503
        %v608 = vpack.c.b16 %v512, %v504
        %v609 = vpack.c.b16 %v513, %v505
        %v610 = vpack.c.b16 %v514, %v506
        %v611 = vpack.c.b16 %v515, %v507
        %v612 = vpack.c.b16 %v516, %v508
        %v613 = vpack.c.b16 %v517, %v509
        %v614 = vpack.c.b16 %v526, %v518
        %v615 = vpack.c.b16 %v527, %v519
        %v616 = vpack.c.b16 %v528, %v520
        %v617 = vpack.c.b16 %v529, %v521
        %v618 = vpack.c.b16 %v530, %v522
        %v619 = vpack.c.b16 %v531, %v523
        %v620 = vpack.c.b16 %v532, %v524
        %v621 = vpack.c.b16 %v533, %v525
        %v622 = vpack.c.b16 %v542, %v534
        %v623 = vpack.c.b16 %v543, %v535
        %v624 = vpack.c.b16 %v544, %v536
        %v625 = vpack.c.b16 %v545, %v537
        %v626 = vpack.c.b16 %v546, %v538
        %v627 = vpack.c.b16 %v547, %v539
        %v628 = vpack.c.b16 %v548, %v540
        %v629 = vpack.c.b16 %v549, %v541
        %v630 = vpack.c.b16 %v558, %v550
        %v631 = vpack.c.b16 %v559, %v551
        %v632 = vpack.c.b16 %v560, %v552
        %v633 = vpack.c.b16 %v561, %v553
        %v634 = vpack.c.b16 %v562, %v554
        %v635 = vpack.c.b16 %v563, %v555
        %v636 = vpack.c.b16 %v564, %v556
        %v637 = vpack.c.b16 %v565, %v557
        %v638 = vpack.c.b16 %v574, %v566
        %v639 = vpack.c.b16 %v575, %v567
        %v640 = vpack.c.b16 %v576, %v568
        %v641 = vpack.c.b16 %v577, %v569
        %v642 = vpack.c.b16 %v578, %v570
        %v643 = vpack.c.b16 %v579, %v571
        %v644 = vpack.c.b16 %v580, %v572
        %v645 = vpack.c.b16 %v581, %v573
        %710 = vmatpush.bf16.msra.mxu0 %v638
        %711 = vmatpush.bf16.msra.mxu0 %v630
        %712 = vmatpush.bf16.msra.mxu0 %v622
        %713 = vmatpush.bf16.msra.mxu0 %v614
        %714 = vmatpush.bf16.msra.mxu0 %v606
        %715 = vmatpush.bf16.msra.mxu0 %v598
        %716 = vmatpush.bf16.msra.mxu0 %v590
        %717 = vmatpush.bf16.msra.mxu0 %v582
        %718 = vmatmul.bf16.gmra.mxu0 %v382
        %v719 = vpop.f32.mrf.mxu0
        %v720 = vadd.f32 %v350, %v719
        %v721 = vpop.f32.mrf.mxu0
        %v722 = vadd.f32 %v350, %v721
        %723 = vmatmul.bf16.gmra.mxu0 %v383
        %v724 = vpop.f32.mrf.mxu0
        %v725 = vadd.f32 %v350, %v724
        %v726 = vpop.f32.mrf.mxu0
        %v727 = vadd.f32 %v350, %v726
        %728 = vmatmul.bf16.gmra.mxu0 %v384
        %v729 = vpop.f32.mrf.mxu0
        %v730 = vadd.f32 %v350, %v729
        %v731 = vpop.f32.mrf.mxu0
        %v732 = vadd.f32 %v350, %v731
        %733 = vmatmul.bf16.gmra.mxu0 %v385
        %v734 = vpop.f32.mrf.mxu0
        %v735 = vadd.f32 %v350, %v734
        %v736 = vpop.f32.mrf.mxu0
        %v737 = vadd.f32 %v350, %v736
        %738 = vdwg.mxu0
        %739 = vmatpush.bf16.msra.mxu0 %v639
        %740 = vmatpush.bf16.msra.mxu0 %v631
        %741 = vmatpush.bf16.msra.mxu0 %v623
        %742 = vmatpush.bf16.msra.mxu0 %v615
        %743 = vmatpush.bf16.msra.mxu0 %v607
        %744 = vmatpush.bf16.msra.mxu0 %v599
        %745 = vmatpush.bf16.msra.mxu0 %v591
        %746 = vmatpush.bf16.msra.mxu0 %v583
        %747 = vmatmul.bf16.gmra.mxu0 %v382
        %v748 = vpop.f32.mrf.mxu0
        %v749 = vadd.f32 %v351, %v748
        %v750 = vpop.f32.mrf.mxu0
        %v751 = vadd.f32 %v351, %v750
        %752 = vmatmul.bf16.gmra.mxu0 %v383
        %v753 = vpop.f32.mrf.mxu0
        %v754 = vadd.f32 %v351, %v753
        %v755 = vpop.f32.mrf.mxu0
        %v756 = vadd.f32 %v351, %v755
        %757 = vmatmul.bf16.gmra.mxu0 %v384
        %v758 = vpop.f32.mrf.mxu0
        %v759 = vadd.f32 %v351, %v758
        %v760 = vpop.f32.mrf.mxu0
        %v761 = vadd.f32 %v351, %v760
        %762 = vmatmul.bf16.gmra.mxu0 %v385
        %v763 = vpop.f32.mrf.mxu0
        %v764 = vadd.f32 %v351, %v763
        %v765 = vpop.f32.mrf.mxu0
        %v766 = vadd.f32 %v351, %v765
        %767 = vdwg.mxu0
        %768 = vmatpush.bf16.msra.mxu0 %v640
        %769 = vmatpush.bf16.msra.mxu0 %v632
        %770 = vmatpush.bf16.msra.mxu0 %v624
        %771 = vmatpush.bf16.msra.mxu0 %v616
        %772 = vmatpush.bf16.msra.mxu0 %v608
        %773 = vmatpush.bf16.msra.mxu0 %v600
        %774 = vmatpush.bf16.msra.mxu0 %v592
        %775 = vmatpush.bf16.msra.mxu0 %v584
        %776 = vmatmul.bf16.gmra.mxu0 %v382
        %v777 = vpop.f32.mrf.mxu0
        %v778 = vadd.f32 %v352, %v777
        %v779 = vpop.f32.mrf.mxu0
        %v780 = vadd.f32 %v352, %v779
        %781 = vmatmul.bf16.gmra.mxu0 %v383
        %v782 = vpop.f32.mrf.mxu0
        %v783 = vadd.f32 %v352, %v782
        %v784 = vpop.f32.mrf.mxu0
        %v785 = vadd.f32 %v352, %v784
        %786 = vmatmul.bf16.gmra.mxu0 %v384
        %v787 = vpop.f32.mrf.mxu0
        %v788 = vadd.f32 %v352, %v787
        %v789 = vpop.f32.mrf.mxu0
        %v790 = vadd.f32 %v352, %v789
        %791 = vmatmul.bf16.gmra.mxu0 %v385
        %v792 = vpop.f32.mrf.mxu0
        %v793 = vadd.f32 %v352, %v792
        %v794 = vpop.f32.mrf.mxu0
        %v795 = vadd.f32 %v352, %v794
        %796 = vdwg.mxu0
        %797 = vmatpush.bf16.msra.mxu0 %v641
        %798 = vmatpush.bf16.msra.mxu0 %v633
        %799 = vmatpush.bf16.msra.mxu0 %v625
        %800 = vmatpush.bf16.msra.mxu0 %v617
        %801 = vmatpush.bf16.msra.mxu0 %v609
        %802 = vmatpush.bf16.msra.mxu0 %v601
        %803 = vmatpush.bf16.msra.mxu0 %v593
        %804 = vmatpush.bf16.msra.mxu0 %v585
        %805 = vmatmul.bf16.gmra.mxu0 %v382
        %v806 = vpop.f32.mrf.mxu0
        %v807 = vadd.f32 %v353, %v806
        %v808 = vpop.f32.mrf.mxu0
        %v809 = vadd.f32 %v353, %v808
        %810 = vmatmul.bf16.gmra.mxu0 %v383
        %v811 = vpop.f32.mrf.mxu0
        %v812 = vadd.f32 %v353, %v811
        %v813 = vpop.f32.mrf.mxu0
        %v814 = vadd.f32 %v353, %v813
        %815 = vmatmul.bf16.gmra.mxu0 %v384
        %v816 = vpop.f32.mrf.mxu0
        %v817 = vadd.f32 %v353, %v816
        %v818 = vpop.f32.mrf.mxu0
        %v819 = vadd.f32 %v353, %v818
        %820 = vmatmul.bf16.gmra.mxu0 %v385
        %v821 = vpop.f32.mrf.mxu0
        %v822 = vadd.f32 %v353, %v821
        %v823 = vpop.f32.mrf.mxu0
        %v824 = vadd.f32 %v353, %v823
        %825 = vdwg.mxu0
        %826 = vmatpush.bf16.msra.mxu0 %v642
        %827 = vmatpush.bf16.msra.mxu0 %v634
        %828 = vmatpush.bf16.msra.mxu0 %v626
        %829 = vmatpush.bf16.msra.mxu0 %v618
        %830 = vmatpush.bf16.msra.mxu0 %v610
        %831 = vmatpush.bf16.msra.mxu0 %v602
        %832 = vmatpush.bf16.msra.mxu0 %v594
        %833 = vmatpush.bf16.msra.mxu0 %v586
        %834 = vmatmul.bf16.gmra.mxu0 %v382
        %v835 = vpop.f32.mrf.mxu0
        %v836 = vadd.f32 %v354, %v835
        %v837 = vpop.f32.mrf.mxu0
        %v838 = vadd.f32 %v354, %v837
        %839 = vmatmul.bf16.gmra.mxu0 %v383
        %v840 = vpop.f32.mrf.mxu0
        %v841 = vadd.f32 %v354, %v840
        %v842 = vpop.f32.mrf.mxu0
        %v843 = vadd.f32 %v354, %v842
        %844 = vmatmul.bf16.gmra.mxu0 %v384
        %v845 = vpop.f32.mrf.mxu0
        %v846 = vadd.f32 %v354, %v845
        %v847 = vpop.f32.mrf.mxu0
        %v848 = vadd.f32 %v354, %v847
        %849 = vmatmul.bf16.gmra.mxu0 %v385
        %v850 = vpop.f32.mrf.mxu0
        %v851 = vadd.f32 %v354, %v850
        %v852 = vpop.f32.mrf.mxu0
        %v853 = vadd.f32 %v354, %v852
        %854 = vdwg.mxu0
        %855 = vmatpush.bf16.msra.mxu0 %v643
        %856 = vmatpush.bf16.msra.mxu0 %v635
        %857 = vmatpush.bf16.msra.mxu0 %v627
        %858 = vmatpush.bf16.msra.mxu0 %v619
        %859 = vmatpush.bf16.msra.mxu0 %v611
        %860 = vmatpush.bf16.msra.mxu0 %v603
        %861 = vmatpush.bf16.msra.mxu0 %v595
        %862 = vmatpush.bf16.msra.mxu0 %v587
        %863 = vmatmul.bf16.gmra.mxu0 %v382
        %v864 = vpop.f32.mrf.mxu0
        %v865 = vadd.f32 %v355, %v864
        %v866 = vpop.f32.mrf.mxu0
        %v867 = vadd.f32 %v355, %v866
        %868 = vmatmul.bf16.gmra.mxu0 %v383
        %v869 = vpop.f32.mrf.mxu0
        %v870 = vadd.f32 %v355, %v869
        %v871 = vpop.f32.mrf.mxu0
        %v872 = vadd.f32 %v355, %v871
        %873 = vmatmul.bf16.gmra.mxu0 %v384
        %v874 = vpop.f32.mrf.mxu0
        %v875 = vadd.f32 %v355, %v874
        %v876 = vpop.f32.mrf.mxu0
        %v877 = vadd.f32 %v355, %v876
        %878 = vmatmul.bf16.gmra.mxu0 %v385
        %v879 = vpop.f32.mrf.mxu0
        %v880 = vadd.f32 %v355, %v879
        %v881 = vpop.f32.mrf.mxu0
        %v882 = vadd.f32 %v355, %v881
        %883 = vdwg.mxu0
        %884 = vmatpush.bf16.msra.mxu0 %v644
        %885 = vmatpush.bf16.msra.mxu0 %v636
        %886 = vmatpush.bf16.msra.mxu0 %v628
        %887 = vmatpush.bf16.msra.mxu0 %v620
        %888 = vmatpush.bf16.msra.mxu0 %v612
        %889 = vmatpush.bf16.msra.mxu0 %v604
        %890 = vmatpush.bf16.msra.mxu0 %v596
        %891 = vmatpush.bf16.msra.mxu0 %v588
        %892 = vmatmul.bf16.gmra.mxu0 %v382
        %v893 = vpop.f32.mrf.mxu0
        %v894 = vadd.f32 %v356, %v893
        %v895 = vpop.f32.mrf.mxu0
        %v896 = vadd.f32 %v356, %v895
        %897 = vmatmul.bf16.gmra.mxu0 %v383
        %v898 = vpop.f32.mrf.mxu0
        %v899 = vadd.f32 %v356, %v898
        %v900 = vpop.f32.mrf.mxu0
        %v901 = vadd.f32 %v356, %v900
        %902 = vmatmul.bf16.gmra.mxu0 %v384
        %v903 = vpop.f32.mrf.mxu0
        %v904 = vadd.f32 %v356, %v903
        %v905 = vpop.f32.mrf.mxu0
        %v906 = vadd.f32 %v356, %v905
        %907 = vmatmul.bf16.gmra.mxu0 %v385
        %v908 = vpop.f32.mrf.mxu0
        %v909 = vadd.f32 %v356, %v908
        %v910 = vpop.f32.mrf.mxu0
        %v911 = vadd.f32 %v356, %v910
        %912 = vdwg.mxu0
        %913 = vmatpush.bf16.msra.mxu0 %v645
        %914 = vmatpush.bf16.msra.mxu0 %v637
        %915 = vmatpush.bf16.msra.mxu0 %v629
        %916 = vmatpush.bf16.msra.mxu0 %v621
        %917 = vmatpush.bf16.msra.mxu0 %v613
        %918 = vmatpush.bf16.msra.mxu0 %v605
        %919 = vmatpush.bf16.msra.mxu0 %v597
        %920 = vmatpush.bf16.msra.mxu0 %v589
        %921 = vmatmul.bf16.gmra.mxu0 %v382
        %v922 = vpop.f32.mrf.mxu0
        %v923 = vadd.f32 %v357, %v922
        %v924 = vpop.f32.mrf.mxu0
        %v925 = vadd.f32 %v357, %v924
        %926 = vmatmul.bf16.gmra.mxu0 %v383
        %v927 = vpop.f32.mrf.mxu0
        %v928 = vadd.f32 %v357, %v927
        %v929 = vpop.f32.mrf.mxu0
        %v930 = vadd.f32 %v357, %v929
        %931 = vmatmul.bf16.gmra.mxu0 %v384
        %v932 = vpop.f32.mrf.mxu0
        %v933 = vadd.f32 %v357, %v932
        %v934 = vpop.f32.mrf.mxu0
        %v935 = vadd.f32 %v357, %v934
        %936 = vmatmul.bf16.gmra.mxu0 %v385
        %v937 = vpop.f32.mrf.mxu0
        %v938 = vadd.f32 %v357, %v937
        %v939 = vpop.f32.mrf.mxu0
        %v940 = vadd.f32 %v357, %v939
        %941 = vdwg.mxu0
        %v942 = vmax.f32 %v720, %v722
        %v943 = vmax.f32 %v942, %v725
        %v944 = vmax.f32 %v943, %v727
        %v945 = vmax.f32 %v944, %v730
        %v946 = vmax.f32 %v945, %v732
        %v947 = vmax.f32 %v946, %v735
        %v948 = vmax.f32 %v947, %v737
        %v949 = vrot.slane %v948, 4
        %v950 = vmax.f32 %v948, %v949
        %v951 = vrot.slane %v950, 2
        %v952 = vmax.f32 %v950, %v951
        %v953 = vrot.slane %v952, 1
        %v954 = vmax.f32 %v952, %v953
        %v955 = vmax.f32 %v749, %v751
        %v956 = vmax.f32 %v955, %v754
        %v957 = vmax.f32 %v956, %v756
        %v958 = vmax.f32 %v957, %v759
        %v959 = vmax.f32 %v958, %v761
        %v960 = vmax.f32 %v959, %v764
        %v961 = vmax.f32 %v960, %v766
        %v962 = vrot.slane %v961, 4
        %v963 = vmax.f32 %v961, %v962
        %v964 = vrot.slane %v963, 2
        %v965 = vmax.f32 %v963, %v964
        %v966 = vrot.slane %v965, 1
        %v967 = vmax.f32 %v965, %v966
        %v968 = vmax.f32 %v778, %v780
        %v969 = vmax.f32 %v968, %v783
        %v970 = vmax.f32 %v969, %v785
        %v971 = vmax.f32 %v970, %v788
        %v972 = vmax.f32 %v971, %v790
        %v973 = vmax.f32 %v972, %v793
        %v974 = vmax.f32 %v973, %v795
        %v975 = vrot.slane %v974, 4
        %v976 = vmax.f32 %v974, %v975
        %v977 = vrot.slane %v976, 2
        %v978 = vmax.f32 %v976, %v977
        %v979 = vrot.slane %v978, 1
        %v980 = vmax.f32 %v978, %v979
        %v981 = vmax.f32 %v807, %v809
        %v982 = vmax.f32 %v981, %v812
        %v983 = vmax.f32 %v982, %v814
        %v984 = vmax.f32 %v983, %v817
        %v985 = vmax.f32 %v984, %v819
        %v986 = vmax.f32 %v985, %v822
        %v987 = vmax.f32 %v986, %v824
        %v988 = vrot.slane %v987, 4
        %v989 = vmax.f32 %v987, %v988
        %v990 = vrot.slane %v989, 2
        %v991 = vmax.f32 %v989, %v990
        %v992 = vrot.slane %v991, 1
        %v993 = vmax.f32 %v991, %v992
        %v994 = vmax.f32 %v836, %v838
        %v995 = vmax.f32 %v994, %v841
        %v996 = vmax.f32 %v995, %v843
        %v997 = vmax.f32 %v996, %v846
        %v998 = vmax.f32 %v997, %v848
        %v999 = vmax.f32 %v998, %v851
        %v1000 = vmax.f32 %v999, %v853
        %v1001 = vrot.slane %v1000, 4
        %v1002 = vmax.f32 %v1000, %v1001
        %v1003 = vrot.slane %v1002, 2
        %v1004 = vmax.f32 %v1002, %v1003
        %v1005 = vrot.slane %v1004, 1
        %v1006 = vmax.f32 %v1004, %v1005
        %v1007 = vmax.f32 %v865, %v867
        %v1008 = vmax.f32 %v1007, %v870
        %v1009 = vmax.f32 %v1008, %v872
        %v1010 = vmax.f32 %v1009, %v875
        %v1011 = vmax.f32 %v1010, %v877
        %v1012 = vmax.f32 %v1011, %v880
        %v1013 = vmax.f32 %v1012, %v882
        %v1014 = vrot.slane %v1013, 4
        %v1015 = vmax.f32 %v1013, %v1014
        %v1016 = vrot.slane %v1015, 2
        %v1017 = vmax.f32 %v1015, %v1016
        %v1018 = vrot.slane %v1017, 1
        %v1019 = vmax.f32 %v1017, %v1018
        %v1020 = vmax.f32 %v894, %v896
        %v1021 = vmax.f32 %v1020, %v899
        %v1022 = vmax.f32 %v1021, %v901
        %v1023 = vmax.f32 %v1022, %v904
        %v1024 = vmax.f32 %v1023, %v906
        %v1025 = vmax.f32 %v1024, %v909
        %v1026 = vmax.f32 %v1025, %v911
        %v1027 = vrot.slane %v1026, 4
        %v1028 = vmax.f32 %v1026, %v1027
        %v1029 = vrot.slane %v1028, 2
        %v1030 = vmax.f32 %v1028, %v1029
        %v1031 = vrot.slane %v1030, 1
        %v1032 = vmax.f32 %v1030, %v1031
        %v1033 = vmax.f32 %v923, %v925
        %v1034 = vmax.f32 %v1033, %v928
        %v1035 = vmax.f32 %v1034, %v930
        %v1036 = vmax.f32 %v1035, %v933
        %v1037 = vmax.f32 %v1036, %v935
        %v1038 = vmax.f32 %v1037, %v938
        %v1039 = vmax.f32 %v1038, %v940
        %v1040 = vrot.slane %v1039, 4
        %v1041 = vmax.f32 %v1039, %v1040
        %v1042 = vrot.slane %v1041, 2
        %v1043 = vmax.f32 %v1041, %v1042
        %v1044 = vrot.slane %v1043, 1
        %v1045 = vmax.f32 %v1043, %v1044
        %v1046 = vld [vmem:[%s3] sm:$0xff]
        %v1047 = vld [vmem:[%s3 + $0x8] sm:$0xff]
        %v1048 = vld [vmem:[%s3 + $0x10] sm:$0xff]
        %v1049 = vld [vmem:[%s3 + $0x18] sm:$0xff]
        %v1050 = vld [vmem:[%s3 + $0x20] sm:$0xff]
        %v1051 = vld [vmem:[%s3 + $0x28] sm:$0xff]
        %v1052 = vld [vmem:[%s3 + $0x30] sm:$0xff]
        %v1053 = vld [vmem:[%s3 + $0x38] sm:$0xff]
        %v1054 = vld [vmem:[%s3 + $0x40] sm:$0xff]
        %v1055 = vld [vmem:[%s3 + $0x48] sm:$0xff]
        %v1056 = vld [vmem:[%s3 + $0x50] sm:$0xff]
        %v1057 = vld [vmem:[%s3 + $0x58] sm:$0xff]
        %v1058 = vld [vmem:[%s3 + $0x60] sm:$0xff]
        %v1059 = vld [vmem:[%s3 + $0x68] sm:$0xff]
        %v1060 = vld [vmem:[%s3 + $0x70] sm:$0xff]
        %v1061 = vld [vmem:[%s3 + $0x78] sm:$0xff]
        %v1062 = vld [vmem:[%s3 + $0x80] sm:$0xff]
        %v1063 = vld [vmem:[%s3 + $0x88] sm:$0xff]
        %v1064 = vld [vmem:[%s3 + $0x90] sm:$0xff]
        %v1065 = vld [vmem:[%s3 + $0x98] sm:$0xff]
        %v1066 = vld [vmem:[%s3 + $0xa0] sm:$0xff]
        %v1067 = vld [vmem:[%s3 + $0xa8] sm:$0xff]
        %v1068 = vld [vmem:[%s3 + $0xb0] sm:$0xff]
        %v1069 = vld [vmem:[%s3 + $0xb8] sm:$0xff]
        %v1070 = vld [vmem:[%s3 + $0xc0] sm:$0xff]
        %v1071 = vld [vmem:[%s3 + $0xc8] sm:$0xff]
        %v1072 = vld [vmem:[%s3 + $0xd0] sm:$0xff]
        %v1073 = vld [vmem:[%s3 + $0xd8] sm:$0xff]
        %v1074 = vld [vmem:[%s3 + $0xe0] sm:$0xff]
        %v1075 = vld [vmem:[%s3 + $0xe8] sm:$0xff]
        %v1076 = vld [vmem:[%s3 + $0xf0] sm:$0xff]
        %v1077 = vld [vmem:[%s3 + $0xf8] sm:$0xff]
        %v1078 = vld [vmem:[%s3 + $0x100] sm:$0xff]
        %v1079 = vld [vmem:[%s3 + $0x108] sm:$0xff]
        %v1080 = vld [vmem:[%s3 + $0x110] sm:$0xff]
        %v1081 = vld [vmem:[%s3 + $0x118] sm:$0xff]
        %v1082 = vld [vmem:[%s3 + $0x120] sm:$0xff]
        %v1083 = vld [vmem:[%s3 + $0x128] sm:$0xff]
        %v1084 = vld [vmem:[%s3 + $0x130] sm:$0xff]
        %v1085 = vld [vmem:[%s3 + $0x138] sm:$0xff]
        %v1086 = vld [vmem:[%s3 + $0x140] sm:$0xff]
        %v1087 = vld [vmem:[%s3 + $0x148] sm:$0xff]
        %v1088 = vld [vmem:[%s3 + $0x150] sm:$0xff]
        %v1089 = vld [vmem:[%s3 + $0x158] sm:$0xff]
        %v1090 = vld [vmem:[%s3 + $0x160] sm:$0xff]
        %v1091 = vld [vmem:[%s3 + $0x168] sm:$0xff]
        %v1092 = vld [vmem:[%s3 + $0x170] sm:$0xff]
        %v1093 = vld [vmem:[%s3 + $0x178] sm:$0xff]
        %v1094 = vld [vmem:[%s3 + $0x180] sm:$0xff]
        %v1095 = vld [vmem:[%s3 + $0x188] sm:$0xff]
        %v1096 = vld [vmem:[%s3 + $0x190] sm:$0xff]
        %v1097 = vld [vmem:[%s3 + $0x198] sm:$0xff]
        %v1098 = vld [vmem:[%s3 + $0x1a0] sm:$0xff]
        %v1099 = vld [vmem:[%s3 + $0x1a8] sm:$0xff]
        %v1100 = vld [vmem:[%s3 + $0x1b0] sm:$0xff]
        %v1101 = vld [vmem:[%s3 + $0x1b8] sm:$0xff]
        %v1102 = vld [vmem:[%s3 + $0x1c0] sm:$0xff]
        %v1103 = vld [vmem:[%s3 + $0x1c8] sm:$0xff]
        %v1104 = vld [vmem:[%s3 + $0x1d0] sm:$0xff]
        %v1105 = vld [vmem:[%s3 + $0x1d8] sm:$0xff]
        %v1106 = vld [vmem:[%s3 + $0x1e0] sm:$0xff]
        %v1107 = vld [vmem:[%s3 + $0x1e8] sm:$0xff]
        %v1108 = vld [vmem:[%s3 + $0x1f0] sm:$0xff]
        %v1109 = vld [vmem:[%s3 + $0x1f8] sm:$0xff]
        %v1110 = vld [vmem:[%s3 + $0x200] sm:$0xff]
        %v1111 = vld [vmem:[%s3 + $0x208] sm:$0xff]
        %v1112 = vld [vmem:[%s3 + $0x210] sm:$0xff]
        %v1113 = vld [vmem:[%s3 + $0x218] sm:$0xff]
        %v1114 = vld [vmem:[%s3 + $0x220] sm:$0xff]
        %v1115 = vld [vmem:[%s3 + $0x228] sm:$0xff]
        %v1116 = vld [vmem:[%s3 + $0x230] sm:$0xff]
        %v1117 = vld [vmem:[%s3 + $0x238] sm:$0xff]
        %v1118 = vld [vmem:[%s3 + $0x240] sm:$0xff]
        %v1119 = vld [vmem:[%s3 + $0x248] sm:$0xff]
        %v1120 = vld [vmem:[%s3 + $0x250] sm:$0xff]
        %v1121 = vld [vmem:[%s3 + $0x258] sm:$0xff]
        %v1122 = vld [vmem:[%s3 + $0x260] sm:$0xff]
        %v1123 = vld [vmem:[%s3 + $0x268] sm:$0xff]
        %v1124 = vld [vmem:[%s3 + $0x270] sm:$0xff]
        %v1125 = vld [vmem:[%s3 + $0x278] sm:$0xff]
        %v1126 = vld [vmem:[%s3 + $0x280] sm:$0xff]
        %v1127 = vld [vmem:[%s3 + $0x288] sm:$0xff]
        %v1128 = vld [vmem:[%s3 + $0x290] sm:$0xff]
        %v1129 = vld [vmem:[%s3 + $0x298] sm:$0xff]
        %v1130 = vld [vmem:[%s3 + $0x2a0] sm:$0xff]
        %v1131 = vld [vmem:[%s3 + $0x2a8] sm:$0xff]
        %v1132 = vld [vmem:[%s3 + $0x2b0] sm:$0xff]
        %v1133 = vld [vmem:[%s3 + $0x2b8] sm:$0xff]
        %v1134 = vld [vmem:[%s3 + $0x2c0] sm:$0xff]
        %v1135 = vld [vmem:[%s3 + $0x2c8] sm:$0xff]
        %v1136 = vld [vmem:[%s3 + $0x2d0] sm:$0xff]
        %v1137 = vld [vmem:[%s3 + $0x2d8] sm:$0xff]
        %v1138 = vld [vmem:[%s3 + $0x2e0] sm:$0xff]
        %v1139 = vld [vmem:[%s3 + $0x2e8] sm:$0xff]
        %v1140 = vld [vmem:[%s3 + $0x2f0] sm:$0xff]
        %v1141 = vld [vmem:[%s3 + $0x2f8] sm:$0xff]
        %v1142 = vld [vmem:[%s3 + $0x300] sm:$0xff]
        %v1143 = vld [vmem:[%s3 + $0x308] sm:$0xff]
        %v1144 = vld [vmem:[%s3 + $0x310] sm:$0xff]
        %v1145 = vld [vmem:[%s3 + $0x318] sm:$0xff]
        %v1146 = vld [vmem:[%s3 + $0x320] sm:$0xff]
        %v1147 = vld [vmem:[%s3 + $0x328] sm:$0xff]
        %v1148 = vld [vmem:[%s3 + $0x330] sm:$0xff]
        %v1149 = vld [vmem:[%s3 + $0x338] sm:$0xff]
        %v1150 = vld [vmem:[%s3 + $0x340] sm:$0xff]
        %v1151 = vld [vmem:[%s3 + $0x348] sm:$0xff]
        %v1152 = vld [vmem:[%s3 + $0x350] sm:$0xff]
        %v1153 = vld [vmem:[%s3 + $0x358] sm:$0xff]
        %v1154 = vld [vmem:[%s3 + $0x360] sm:$0xff]
        %v1155 = vld [vmem:[%s3 + $0x368] sm:$0xff]
        %v1156 = vld [vmem:[%s3 + $0x370] sm:$0xff]
        %v1157 = vld [vmem:[%s3 + $0x378] sm:$0xff]
        %v1158 = vld [vmem:[%s3 + $0x380] sm:$0xff]
        %v1159 = vld [vmem:[%s3 + $0x388] sm:$0xff]
        %v1160 = vld [vmem:[%s3 + $0x390] sm:$0xff]
        %v1161 = vld [vmem:[%s3 + $0x398] sm:$0xff]
        %v1162 = vld [vmem:[%s3 + $0x3a0] sm:$0xff]
        %v1163 = vld [vmem:[%s3 + $0x3a8] sm:$0xff]
        %v1164 = vld [vmem:[%s3 + $0x3b0] sm:$0xff]
        %v1165 = vld [vmem:[%s3 + $0x3b8] sm:$0xff]
        %v1166 = vld [vmem:[%s3 + $0x3c0] sm:$0xff]
        %v1167 = vld [vmem:[%s3 + $0x3c8] sm:$0xff]
        %v1168 = vld [vmem:[%s3 + $0x3d0] sm:$0xff]
        %v1169 = vld [vmem:[%s3 + $0x3d8] sm:$0xff]
        %v1170 = vld [vmem:[%s3 + $0x3e0] sm:$0xff]
        %v1171 = vld [vmem:[%s3 + $0x3e8] sm:$0xff]
        %v1172 = vld [vmem:[%s3 + $0x3f0] sm:$0xff]
        %v1173 = vld [vmem:[%s3 + $0x3f8] sm:$0xff]
        %v1174 = vld [vmem:[%s4] sm:$0x1]
        %1175 = vmatpush.msra.mxu0 %v1061
        %1176 = vmatpush.msra.mxu0 %v1060
        %1177 = vmatpush.msra.mxu0 %v1059
        %1178 = vmatpush.msra.mxu0 %v1058
        %1179 = vmatpush.msra.mxu0 %v1057
        %1180 = vmatpush.msra.mxu0 %v1056
        %1181 = vmatpush.msra.mxu0 %v1055
        %1182 = vmatpush.msra.mxu0 %v1054
        %1183 = vmatpush.msra.mxu0 %v1053
        %1184 = vmatpush.msra.mxu0 %v1052
        %1185 = vmatpush.msra.mxu0 %v1051
        %1186 = vmatpush.msra.mxu0 %v1050
        %1187 = vmatpush.msra.mxu0 %v1049
        %1188 = vmatpush.msra.mxu0 %v1048
        %1189 = vmatpush.msra.mxu0 %v1047
        %1190 = vmatpush.msra.mxu0 %v1046
        %1191 = vmatmul.f32.gmra.mxu0 %v954
        %v1192 = vpop.f32.mrf.mxu0
        %v1193 = vadd.f32 %v1174, %v1192
        %1194 = vdwg.mxu0
        %1195 = vmatpush.msra.mxu0 %v1077
        %1196 = vmatpush.msra.mxu0 %v1076
        %1197 = vmatpush.msra.mxu0 %v1075
        %1198 = vmatpush.msra.mxu0 %v1074
        %1199 = vmatpush.msra.mxu0 %v1073
        %1200 = vmatpush.msra.mxu0 %v1072
        %1201 = vmatpush.msra.mxu0 %v1071
        %1202 = vmatpush.msra.mxu0 %v1070
        %1203 = vmatpush.msra.mxu0 %v1069
        %1204 = vmatpush.msra.mxu0 %v1068
        %1205 = vmatpush.msra.mxu0 %v1067
        %1206 = vmatpush.msra.mxu0 %v1066
        %1207 = vmatpush.msra.mxu0 %v1065
        %1208 = vmatpush.msra.mxu0 %v1064
        %1209 = vmatpush.msra.mxu0 %v1063
        %1210 = vmatpush.msra.mxu0 %v1062
        %1211 = vmatmul.f32.gmra.mxu0 %v967
        %v1212 = vpop.f32.mrf.mxu0
        %v1213 = vadd.f32 %v1193, %v1212
        %1214 = vdwg.mxu0
        %1215 = vmatpush.msra.mxu0 %v1093
        %1216 = vmatpush.msra.mxu0 %v1092
        %1217 = vmatpush.msra.mxu0 %v1091
        %1218 = vmatpush.msra.mxu0 %v1090
        %1219 = vmatpush.msra.mxu0 %v1089
        %1220 = vmatpush.msra.mxu0 %v1088
        %1221 = vmatpush.msra.mxu0 %v1087
        %1222 = vmatpush.msra.mxu0 %v1086
        %1223 = vmatpush.msra.mxu0 %v1085
        %1224 = vmatpush.msra.mxu0 %v1084
        %1225 = vmatpush.msra.mxu0 %v1083
        %1226 = vmatpush.msra.mxu0 %v1082
        %1227 = vmatpush.msra.mxu0 %v1081
        %1228 = vmatpush.msra.mxu0 %v1080
        %1229 = vmatpush.msra.mxu0 %v1079
        %1230 = vmatpush.msra.mxu0 %v1078
        %1231 = vmatmul.f32.gmra.mxu0 %v980
        %v1232 = vpop.f32.mrf.mxu0
        %v1233 = vadd.f32 %v1213, %v1232
        %1234 = vdwg.mxu0
        %1235 = vmatpush.msra.mxu0 %v1109
        %1236 = vmatpush.msra.mxu0 %v1108
        %1237 = vmatpush.msra.mxu0 %v1107
        %1238 = vmatpush.msra.mxu0 %v1106
        %1239 = vmatpush.msra.mxu0 %v1105
        %1240 = vmatpush.msra.mxu0 %v1104
        %1241 = vmatpush.msra.mxu0 %v1103
        %1242 = vmatpush.msra.mxu0 %v1102
        %1243 = vmatpush.msra.mxu0 %v1101
        %1244 = vmatpush.msra.mxu0 %v1100
        %1245 = vmatpush.msra.mxu0 %v1099
        %1246 = vmatpush.msra.mxu0 %v1098
        %1247 = vmatpush.msra.mxu0 %v1097
        %1248 = vmatpush.msra.mxu0 %v1096
        %1249 = vmatpush.msra.mxu0 %v1095
        %1250 = vmatpush.msra.mxu0 %v1094
        %1251 = vmatmul.f32.gmra.mxu0 %v993
        %v1252 = vpop.f32.mrf.mxu0
        %v1253 = vadd.f32 %v1233, %v1252
        %1254 = vdwg.mxu0
        %1255 = vmatpush.msra.mxu0 %v1125
        %1256 = vmatpush.msra.mxu0 %v1124
        %1257 = vmatpush.msra.mxu0 %v1123
        %1258 = vmatpush.msra.mxu0 %v1122
        %1259 = vmatpush.msra.mxu0 %v1121
        %1260 = vmatpush.msra.mxu0 %v1120
        %1261 = vmatpush.msra.mxu0 %v1119
        %1262 = vmatpush.msra.mxu0 %v1118
        %1263 = vmatpush.msra.mxu0 %v1117
        %1264 = vmatpush.msra.mxu0 %v1116
        %1265 = vmatpush.msra.mxu0 %v1115
        %1266 = vmatpush.msra.mxu0 %v1114
        %1267 = vmatpush.msra.mxu0 %v1113
        %1268 = vmatpush.msra.mxu0 %v1112
        %1269 = vmatpush.msra.mxu0 %v1111
        %1270 = vmatpush.msra.mxu0 %v1110
        %1271 = vmatmul.f32.gmra.mxu0 %v1006
        %v1272 = vpop.f32.mrf.mxu0
        %v1273 = vadd.f32 %v1253, %v1272
        %1274 = vdwg.mxu0
        %1275 = vmatpush.msra.mxu0 %v1141
        %1276 = vmatpush.msra.mxu0 %v1140
        %1277 = vmatpush.msra.mxu0 %v1139
        %1278 = vmatpush.msra.mxu0 %v1138
        %1279 = vmatpush.msra.mxu0 %v1137
        %1280 = vmatpush.msra.mxu0 %v1136
        %1281 = vmatpush.msra.mxu0 %v1135
        %1282 = vmatpush.msra.mxu0 %v1134
        %1283 = vmatpush.msra.mxu0 %v1133
        %1284 = vmatpush.msra.mxu0 %v1132
        %1285 = vmatpush.msra.mxu0 %v1131
        %1286 = vmatpush.msra.mxu0 %v1130
        %1287 = vmatpush.msra.mxu0 %v1129
        %1288 = vmatpush.msra.mxu0 %v1128
        %1289 = vmatpush.msra.mxu0 %v1127
        %1290 = vmatpush.msra.mxu0 %v1126
        %1291 = vmatmul.f32.gmra.mxu0 %v1019
        %v1292 = vpop.f32.mrf.mxu0
        %v1293 = vadd.f32 %v1273, %v1292
        %1294 = vdwg.mxu0
        %1295 = vmatpush.msra.mxu0 %v1157
        %1296 = vmatpush.msra.mxu0 %v1156
        %1297 = vmatpush.msra.mxu0 %v1155
        %1298 = vmatpush.msra.mxu0 %v1154
        %1299 = vmatpush.msra.mxu0 %v1153
        %1300 = vmatpush.msra.mxu0 %v1152
        %1301 = vmatpush.msra.mxu0 %v1151
        %1302 = vmatpush.msra.mxu0 %v1150
        %1303 = vmatpush.msra.mxu0 %v1149
        %1304 = vmatpush.msra.mxu0 %v1148
        %1305 = vmatpush.msra.mxu0 %v1147
        %1306 = vmatpush.msra.mxu0 %v1146
        %1307 = vmatpush.msra.mxu0 %v1145
        %1308 = vmatpush.msra.mxu0 %v1144
        %1309 = vmatpush.msra.mxu0 %v1143
        %1310 = vmatpush.msra.mxu0 %v1142
        %1311 = vmatmul.f32.gmra.mxu0 %v1032
        %v1312 = vpop.f32.mrf.mxu0
        %v1313 = vadd.f32 %v1293, %v1312
        %1314 = vdwg.mxu0
        %1315 = vmatpush.msra.mxu0 %v1173
        %1316 = vmatpush.msra.mxu0 %v1172
        %1317 = vmatpush.msra.mxu0 %v1171
        %1318 = vmatpush.msra.mxu0 %v1170
        %1319 = vmatpush.msra.mxu0 %v1169
        %1320 = vmatpush.msra.mxu0 %v1168
        %1321 = vmatpush.msra.mxu0 %v1167
        %1322 = vmatpush.msra.mxu0 %v1166
        %1323 = vmatpush.msra.mxu0 %v1165
        %1324 = vmatpush.msra.mxu0 %v1164
        %1325 = vmatpush.msra.mxu0 %v1163
        %1326 = vmatpush.msra.mxu0 %v1162
        %1327 = vmatpush.msra.mxu0 %v1161
        %1328 = vmatpush.msra.mxu0 %v1160
        %1329 = vmatpush.msra.mxu0 %v1159
        %1330 = vmatpush.msra.mxu0 %v1158
        %1331 = vmatmul.f32.gmra.mxu0 %v1045
        %v1332 = vpop.f32.mrf.mxu0
        %v1333 = vadd.f32 %v1313, %v1332
        %1334 = vdwg.mxu0
        %v1335 = vmax.f32 %v1333, 0.0
        %v1336 = vld [vmem:[%s5] sm:$0xff]
        %v1337 = vld [vmem:[%s5 + $0x8] sm:$0xff]
        %v1338 = vld [vmem:[%s5 + $0x10] sm:$0xff]
        %v1339 = vld [vmem:[%s5 + $0x18] sm:$0xff]
        %v1340 = vld [vmem:[%s6] sm:$0x1]
        %vm1341 = vcmask 261120
        %v1343 = vsel %vm1341, %v1335, 0
        %1345 = vmatpush.msra.mxu0 0.0
        %1346 = vmatpush.msra.mxu0 0.0
        %1347 = vmatpush.msra.mxu0 0.0
        %1348 = vmatpush.msra.mxu0 0.0
        %1349 = vmatpush.msra.mxu0 0.0
        %1350 = vmatpush.msra.mxu0 0.0
        %1351 = vmatpush.msra.mxu0 0.0
        %1352 = vmatpush.msra.mxu0 0.0
        %1353 = vmatpush.msra.mxu0 0.0
        %1354 = vmatpush.msra.mxu0 0.0
        %1355 = vmatpush.msra.mxu0 0.0
        %1356 = vmatpush.msra.mxu0 0.0
        %1357 = vmatpush.msra.mxu0 %v1339
        %1358 = vmatpush.msra.mxu0 %v1338
        %1359 = vmatpush.msra.mxu0 %v1337
        %1360 = vmatpush.msra.mxu0 %v1336
        %1361 = vmatmul.f32.gmra.mxu0 %v1343
        %v1362 = vpop.f32.mrf.mxu0
        %v1363 = vadd.f32 %v1340, %v1362
        %1364 = vdwg.mxu0
        %vm1365 = vcmask 253952
        %1366 = vst.msk [vmem:[%s270] sm:$0x1] %vm1365, %v1363
        %s1367 = sand.u32 %s181, 1
        %s1368 = scalar_lea.sflag [#allocation3], %s1367
        %s1369 = sand.u32 %s181, 1
        %s1370 = scalar_lea.vmem [#allocation2], %s1369
        // Predicated region
        $region49: #{foldnet_encoder.7} parent=47 // pred_check
          %p1371 = pneg %p191
        $region50: #{foldnet_encoder.7} parent=47 // pred_check_branch
          %1373 = sbr.rel (%p1371) target = $region52
        $region51: #{foldnet_encoder.7} parent=47 // pred_region
          %1375 = vsyncadd %s1368, 0
          %s1376 = scalar_lea.hbm %s7, %s21
          %s1378 = sshll.u32 %s1370, 4
          %s1379 = int_to_ptr.vmem [resolvable:$true] %s1378
          %s1380 = sshll.u32 %s1376, 4
          %s1381 = int_to_ptr.hbm [resolvable:$true] %s1380
          %1383 = dma.vmem_to_hbm [thread:$0]  %s1379, 16, %s1381, %s1368
        $region52: #{foldnet_encoder.7} parent=47 // pred_fallthru
          _
      $region48: #{foldnet_encoder.7} parent=5 // pred_fallthru
        _
      %p1384 = scmp.le.s32.totalorder 2, %s16
      // Predicated region
      $region53: #{foldnet_encoder.7} parent=5 // pred_check
        %p1385 = pneg %p1384
      $region54: #{foldnet_encoder.7} parent=5 // pred_check_branch
        %1387 = sbr.rel (%p1385) target = $region56
      $region55: #{foldnet_encoder.7} parent=5 // pred_region
        %s1388 = ssub.s32 %s16, 2
        // Predicated region
        $region57: #{foldnet_encoder.7} parent=55 // pred_check
          %p1389 = pneg %p197
        $region58: #{foldnet_encoder.7} parent=55 // pred_check_branch
          %1391 = sbr.rel (%p1389) target = $region60
        $region59: #{foldnet_encoder.7} parent=55 // pred_region
          %s1392 = sand.u32 %s182, 1
          %s1393 = scalar_lea.sflag [#allocation3], %s1392
          %s1394 = sand.u32 %s182, 1
          %s1395 = scalar_lea.vmem [#allocation2], %s1394
          %1397 = dma.done %s1393, 16
        $region60: #{foldnet_encoder.7} parent=55 // pred_fallthru
          _
      $region56: #{foldnet_encoder.7} parent=5 // pred_fallthru
        _
    $region6: #{foldnet_encoder.7} parent=1 // loop_footer
      %s20 = sadd.s32 1, %s16
    $region7: #{foldnet_encoder.7} parent=1 // loop_footer_branch
      %15 = sbr.rel target = $region3
    $region8: #{foldnet_encoder.7} parent=1 // loop_exit
      _
    %1398 = vsyncpa [#allocation3], 1
    %s1399 = scalar_lea.sflag [#allocation3], 1
    %1400 = vsyncpa %s1399, 1

</llo_original>
